<compile_context>
chip_gen: v7x
topology: tpu7x:2x2x1
jax: 0.10.0
libtpu: 0.0.40
codegen_flags: <defaults>
</compile_context>

<pallas_src>
import functools

import jax
import jax.numpy as jnp
import numpy as np
from jax.experimental import pallas as pl
from jax.experimental.pallas import tpu as pltpu

EPS = 1e-5
_VMEM = pl.BlockSpec(memory_space=pltpu.MemorySpace.VMEM)


# ---------------------------------------------------------------------------
# Fused kernel on the (N*H*W, C) layout: row r = pixel, lane c = channel.
#   pcb rows: 0=b1, 1=g2, 2=be2, 3..11=w3[k], 12=b3, 13=g4, 14=be4   (width Cpad)
#   pco rows: 0=b5, 1=g6, 2=be6                                       (width Cout)
#   masks[:, k] = 1 where 3x3 tap k stays inside the image, else 0.
# ---------------------------------------------------------------------------
def _fused_kernel(x_ref, w1_ref, w5_ref, pcb_ref, pco_ref, masks_ref, o_ref, *, w_sp):
    nhw = x_ref.shape[0]
    inv_cnt = 1.0 / float(nhw)          # 1 / (N*H*W): BN pixel count per channel

    def bn_train(v, gamma, beta, relu):
        """Training-mode BatchNorm; channels are lanes, exact two-pass variance."""
        mu = jnp.sum(v, axis=0, keepdims=True) * inv_cnt            # (1, C)
        d = v - mu
        var = jnp.sum(d * d, axis=0, keepdims=True) * inv_cnt       # (1, C)
        out = d * (jax.lax.rsqrt(var + EPS) * gamma) + beta
        return jnp.maximum(out, 0.0) if relu else out

    x = x_ref[...]                                                   # (NHW, Cin) f32

    # --- 1x1 group conv #1 (shuffle pre-folded into w1 columns) + BN2 + ReLU
    y = jnp.dot(x.astype(jnp.bfloat16), w1_ref[...],
                preferred_element_type=jnp.float32) + pcb_ref[0:1, :]
    y = bn_train(y, pcb_ref[1:2, :], pcb_ref[2:3, :], relu=True)     # (NHW, Cpad)

    # --- 3x3 depthwise conv: sublane rolls + boundary masks + per-channel taps.
    #     Wrapped rows from the roll land only where the mask is 0.
    z = y * pcb_ref[7:8, :]                                          # center tap (k=4)
    for k in range(9):
        if k == 4:
            continue
        dy, dx = k // 3 - 1, k % 3 - 1
        d = dy * w_sp + dx
        y_s = pltpu.roll(y, shift=(-d) % nhw, axis=0)                # XLU sublane roll
        z = z + (y_s * pcb_ref[3 + k:4 + k, :]) * masks_ref[:, k:k + 1]
    z = z + pcb_ref[12:13, :]                                        # b3
    z = bn_train(z, pcb_ref[13:14, :], pcb_ref[14:15, :], relu=False)  # BN4

    # --- 1x1 group conv #5 + BN6
    o = jnp.dot(z.astype(jnp.bfloat16), w5_ref[...],
                preferred_element_type=jnp.float32) + pco_ref[0:1, :]
    o = bn_train(o, pco_ref[1:2, :], pco_ref[2:3, :], relu=False)    # (NHW, Cout)

    # --- residual + ReLU (residual path stays f32)
    o_ref[...] = jnp.maximum(x + o, 0.0)


# ---------------------------------------------------------------------------
# Host-side parameter preparation (done once, outside the hot path)
# ---------------------------------------------------------------------------
def prepare_fused_params(params, n, h, w, groups=3):
    """Build the fused-kernel operands for a fixed (N, H, W):
       - shuffle folded into conv1 columns (exact permutation)
       - bottleneck channels zero-padded to a 128-lane multiple
       - matmul weights cast to bf16; per-channel scalars packed into 2 arrays
       - 9 per-tap 0/1 boundary-mask columns in the (N*H*W,) row order."""
    w1, b1, g2, be2 = params["w1"], params["b1"], params["g2"], params["be2"]
    w3, b3, g4, be4 = params["w3"], params["b3"], params["g4"], params["be4"]
    w5, b5, g6, be6 = params["w5"], params["b5"], params["g6"], params["be6"]

    cb = w1.shape[1]
    cout = w5.shape[1]
    cpg = cb // groups
    # shuffled[..., j] = y[..., perm[j]]
    perm = (np.arange(cb) % groups) * cpg + (np.arange(cb) // groups)

    cpad = ((cb + 127) // 128) * 128        # lane-dense bottleneck stage

    def padc(a, value=0.0):
        a = np.asarray(a, np.float32)
        return np.pad(a, ((0, 0), (0, cpad - a.shape[-1])), constant_values=value)

    w1p = padc(np.asarray(w1, np.float32)[:, perm])                   # (Cin, Cpad)
    w5p = np.pad(np.asarray(w5, np.float32), ((0, cpad - cb), (0, 0)))  # (Cpad, Cout)

    pcb = np.zeros((16, cpad), np.float32)
    pcb[0] = padc(np.asarray(b1, np.float32)[:, perm])[0]
    pcb[1] = padc(np.asarray(g2, np.float32)[:, perm], 1.0)[0]
    pcb[2] = padc(np.asarray(be2, np.float32)[:, perm])[0]
    pcb[3:12] = padc(np.asarray(w3, np.float32))                      # 9 taps
    pcb[12] = padc(np.asarray(b3, np.float32))[0]
    pcb[13] = padc(np.asarray(g4, np.float32), 1.0)[0]
    pcb[14] = padc(np.asarray(be4, np.float32))[0]

    pco = np.zeros((8, cout), np.float32)
    pco[0] = np.asarray(b5, np.float32)[0]
    pco[1] = np.asarray(g6, np.float32)[0]
    pco[2] = np.asarray(be6, np.float32)[0]

    nhw = n * h * w
    r = np.arange(nhw)
    wc = r % w
    hc = (r // w) % h
    masks = np.zeros((nhw, 9), np.float32)
    for k in range(9):
        dy, dx = k // 3 - 1, k % 3 - 1
        masks[:, k] = ((wc + dx >= 0) & (wc + dx < w) &
                       (hc + dy >= 0) & (hc + dy < h)).astype(np.float32)

    return dict(
        w1=jnp.asarray(w1p, jnp.bfloat16),       # (Cin, Cpad)  bf16 MXU operand
        w5=jnp.asarray(w5p, jnp.bfloat16),       # (Cpad, Cout) bf16 MXU operand
        pcb=jnp.asarray(pcb),                    # (16, Cpad)   packed f32 params
        pco=jnp.asarray(pco),                    # (8, Cout)    packed f32 params
        masks=jnp.asarray(masks),                # (NHW, 9)     0/1 tap masks
    )


# ---------------------------------------------------------------------------
# Public forward (NCHW in / NCHW out, matching the PyTorch module)
# ---------------------------------------------------------------------------
def shufflenet_unit_a(x_nchw, fused):
    n, c, h, w = x_nchw.shape
    nhw = n * h * w
    cout = fused["pco"].shape[1]
    cpad = fused["w1"].shape[1]
    x2d = jnp.transpose(x_nchw, (0, 2, 3, 1)).astype(jnp.float32).reshape(nhw, c)

    flops = 2 * nhw * (c * cpad + cpad * cout) + 30 * nhw * cpad + 10 * nhw * cout
    bytes_accessed = ((x2d.size + nhw * cout + fused["pcb"].size +
                       fused["pco"].size + fused["masks"].size) * 4
                      + (fused["w1"].size + fused["w5"].size) * 2)

    out2d = pl.pallas_call(
        functools.partial(_fused_kernel, w_sp=w),
        out_shape=jax.ShapeDtypeStruct((nhw, cout), jnp.float32),
        in_specs=[_VMEM] * 6,
        out_specs=_VMEM,
        compiler_params=pltpu.CompilerParams(vmem_limit_bytes=32 * 1024 * 1024),
        cost_estimate=pl.CostEstimate(flops=int(flops),
                                      transcendentals=int(2 * cpad + cout),
                                      bytes_accessed=int(bytes_accessed)),
    )(x2d, fused["w1"], fused["w5"], fused["pcb"], fused["pco"], fused["masks"])

    out = out2d.reshape(n, h, w, cout)
    return jnp.transpose(out, (0, 3, 1, 2))                           # back to NCHW


# ---------------------------------------------------------------------------
# Natural (PyTorch-like) parameters + pure-JAX f32 reference for verification
# ---------------------------------------------------------------------------
def init_params(key, in_channels, out_channels, groups=3):
    assert in_channels == out_channels
    assert in_channels % groups == 0 and out_channels % 4 == 0
    cb = out_channels // 4
    assert cb % groups == 0
    ing = in_channels // groups
    cbg = cb // groups
    outg = out_channels // groups
    ks = jax.random.split(key, 6)

    s1 = 1.0 / np.sqrt(ing)
    w1_blocks = jax.random.uniform(ks[0], (groups, ing, cbg), jnp.float32, -s1, s1)
    w1 = jax.scipy.linalg.block_diag(*[w1_blocks[g] for g in range(groups)])  # (Cin, Cb)
    b1 = jax.random.uniform(ks[1], (1, cb), jnp.float32, -s1, s1)

    s3 = 1.0 / 3.0
    w3 = jax.random.uniform(ks[2], (9, cb), jnp.float32, -s3, s3)     # (ky*3+kx, Cb)
    b3 = jax.random.uniform(ks[3], (1, cb), jnp.float32, -s3, s3)

    s5 = 1.0 / np.sqrt(cbg)
    w5_blocks = jax.random.uniform(ks[4], (groups, cbg, outg), jnp.float32, -s5, s5)
    w5 = jax.scipy.linalg.block_diag(*[w5_blocks[g] for g in range(groups)])  # (Cb, Cout)
    b5 = jax.random.uniform(ks[5], (1, out_channels), jnp.float32, -s5, s5)

    return dict(
        w1=w1, b1=b1, g2=jnp.ones((1, cb)), be2=jnp.zeros((1, cb)),
        w3=w3, b3=b3, g4=jnp.ones((1, cb)), be4=jnp.zeros((1, cb)),
        w5=w5, b5=b5, g6=jnp.ones((1, out_channels)), be6=jnp.zeros((1, out_channels)),
    )


def shuffle_channels_nhwc(x, groups):
    n, h, w, c = x.shape
    cpg = c // groups
    x = x.reshape(n, h, w, groups, cpg)
    x = jnp.transpose(x, (0, 1, 2, 4, 3))
    return x.reshape(n, h, w, c)


def reference_forward(x_nchw, params, groups=3):
    """Pure-JAX f32 reference of the module's math (explicit shuffle / pad / 2-pass BN)."""
    x = jnp.transpose(x_nchw, (0, 2, 3, 1)).astype(jnp.float32)
    n, h, w, cin = x.shape
    x2d = x.reshape(n * h * w, cin)

    def bn(z, g, b):
        mu = jnp.mean(z, axis=0, keepdims=True)
        v = jnp.mean((z - mu) ** 2, axis=0, keepdims=True)
        return (z - mu) * jax.lax.rsqrt(v + EPS) * g + b

    y = x2d @ params["w1"] + params["b1"]
    y = jnp.maximum(bn(y, params["g2"], params["be2"]), 0.0)
    cb = y.shape[-1]
    y = shuffle_channels_nhwc(y.reshape(n, h, w, cb), groups)
    yp = jnp.pad(y, ((0, 0), (1, 1), (1, 1), (0, 0)))
    acc = jnp.zeros((n, h, w, cb), jnp.float32)
    for dy in range(3):
        for dx in range(3):
            acc = acc + yp[:, dy:dy + h, dx:dx + w, :] * params["w3"][dy * 3 + dx]
    acc = acc + params["b3"][0]
    z = bn(acc.reshape(n * h * w, cb), params["g4"], params["be4"])
    o = z @ params["w5"] + params["b5"]
    o = bn(o, params["g6"], params["be6"])
    o = jnp.maximum(x2d + o, 0.0)
    return jnp.transpose(o.reshape(n, h, w, cin), (0, 3, 1, 2))


if __name__ == "__main__":
    key = jax.random.PRNGKey(0)
    kx, kp = jax.random.split(key)

    N, C, H, W = 2, 24, 16, 16          # in == out, %3 == 0, %4 == 0, (C//4) % 3 == 0
    GROUPS = 3
    x = jax.random.uniform(kx, (N, C, H, W), dtype=jnp.float32)
    params = init_params(kp, C, C, groups=GROUPS)
    fused = prepare_fused_params(params, N, H, W, groups=GROUPS)

    out = jax.block_until_ready(shufflenet_unit_a(x, fused))
    assert out.shape == (N, C, H, W)
    assert bool(jnp.all(jnp.isfinite(out)))

    ref = jax.block_until_ready(reference_forward(x, params, groups=GROUPS))
    # Kernel uses bf16 MXU operands (per v6e/v7x perf guidance) vs. a pure-f32
    # reference; tolerance sized for bf16 rounding through two matmuls + 3 BNs.
    np.testing.assert_allclose(np.asarray(out), np.asarray(ref), rtol=5e-2, atol=5e-2)

    print("KERNEL_OK")
</pallas_src>

<mosaic_0001>
module attributes {stable_mosaic.version = 11 : i64} {
  func.func @_fused_kernel(%arg0: memref<512x24xf32, #tpu.memory_space<vmem>>, %arg1: memref<24x128xbf16, #tpu.memory_space<vmem>>, %arg2: memref<128x24xbf16, #tpu.memory_space<vmem>>, %arg3: memref<16x128xf32, #tpu.memory_space<vmem>>, %arg4: memref<8x24xf32, #tpu.memory_space<vmem>>, %arg5: memref<512x9xf32, #tpu.memory_space<vmem>>, %arg6: memref<512x24xf32, #tpu.memory_space<vmem>>) attributes {dimension_semantics = [], scalar_prefetch = 0 : i64, scratch_operands = 0 : i64, tpu.core_type = #tpu.core_type<tc>} {
    %c0 = arith.constant 0 : index
    %c0_0 = arith.constant 0 : index
    %0 = vector.load %arg0[%c0, %c0_0] : memref<512x24xf32, #tpu.memory_space<vmem>>, vector<512x24xf32>
    %1 = arith.truncf %0 : vector<512x24xf32> to vector<512x24xbf16>
    %c0_1 = arith.constant 0 : index
    %c0_2 = arith.constant 0 : index
    %2 = vector.load %arg1[%c0_1, %c0_2] : memref<24x128xbf16, #tpu.memory_space<vmem>>, vector<24x128xbf16>
    %cst = arith.constant dense<0.000000e+00> : vector<512x128xf32>
    %3 = tpu.matmul %1, %2, %cst {dimension_numbers = #tpu.dot_dimension_numbers<[1], [0], [0], [1], [0, 0, 1, 1], [], []>} : vector<512x24xbf16>, vector<24x128xbf16>, vector<512x128xf32> -> vector<512x128xf32>
    %c0_3 = arith.constant 0 : index
    %c0_4 = arith.constant 0 : index
    %4 = vector.load %arg3[%c0_3, %c0_4] : memref<16x128xf32, #tpu.memory_space<vmem>>, vector<1x128xf32>
    %5 = vector.broadcast %4 : vector<1x128xf32> to vector<512x128xf32>
    %6 = arith.addf %3, %5 : vector<512x128xf32>
    %c1 = arith.constant 1 : index
    %c0_5 = arith.constant 0 : index
    %7 = vector.load %arg3[%c1, %c0_5] : memref<16x128xf32, #tpu.memory_space<vmem>>, vector<1x128xf32>
    %c2 = arith.constant 2 : index
    %c0_6 = arith.constant 0 : index
    %8 = vector.load %arg3[%c2, %c0_6] : memref<16x128xf32, #tpu.memory_space<vmem>>, vector<1x128xf32>
    %cst_7 = arith.constant dense<0.000000e+00> : vector<128xf32>
    %9 = vector.multi_reduction <add>, %6, %cst_7 [0] : vector<512x128xf32> to vector<128xf32>
    %10 = vector.shape_cast %9 : vector<128xf32> to vector<1x128xf32>
    %cst_8 = arith.constant 0.001953125 : f32
    %11 = vector.broadcast %cst_8 : f32 to vector<1x128xf32>
    %12 = arith.mulf %10, %11 : vector<1x128xf32>
    %13 = vector.broadcast %12 : vector<1x128xf32> to vector<512x128xf32>
    %14 = arith.subf %6, %13 : vector<512x128xf32>
    %15 = arith.mulf %14, %14 : vector<512x128xf32>
    %cst_9 = arith.constant dense<0.000000e+00> : vector<128xf32>
    %16 = vector.multi_reduction <add>, %15, %cst_9 [0] : vector<512x128xf32> to vector<128xf32>
    %17 = vector.shape_cast %16 : vector<128xf32> to vector<1x128xf32>
    %cst_10 = arith.constant 0.001953125 : f32
    %18 = vector.broadcast %cst_10 : f32 to vector<1x128xf32>
    %19 = arith.mulf %17, %18 : vector<1x128xf32>
    %cst_11 = arith.constant 9.99999974E-6 : f32
    %20 = vector.broadcast %cst_11 : f32 to vector<1x128xf32>
    %21 = arith.addf %19, %20 : vector<1x128xf32>
    %22 = math.rsqrt %21 : vector<1x128xf32>
    %23 = arith.mulf %22, %7 : vector<1x128xf32>
    %24 = vector.broadcast %23 : vector<1x128xf32> to vector<512x128xf32>
    %25 = arith.mulf %14, %24 : vector<512x128xf32>
    %26 = vector.broadcast %8 : vector<1x128xf32> to vector<512x128xf32>
    %27 = arith.addf %25, %26 : vector<512x128xf32>
    %cst_12 = arith.constant 0.000000e+00 : f32
    %28 = vector.broadcast %cst_12 : f32 to vector<512x128xf32>
    %29 = arith.maximumf %27, %28 : vector<512x128xf32>
    %c7 = arith.constant 7 : index
    %c0_13 = arith.constant 0 : index
    %30 = vector.load %arg3[%c7, %c0_13] : memref<16x128xf32, #tpu.memory_space<vmem>>, vector<1x128xf32>
    %31 = vector.broadcast %30 : vector<1x128xf32> to vector<512x128xf32>
    %32 = arith.mulf %29, %31 : vector<512x128xf32>
    %c17_i32 = arith.constant 17 : i32
    %33 = tpu.dynamic_rotate %29 by %c17_i32 dim 0 : vector<512x128xf32>, i32 -> vector<512x128xf32>
    %c3 = arith.constant 3 : index
    %c0_14 = arith.constant 0 : index
    %34 = vector.load %arg3[%c3, %c0_14] : memref<16x128xf32, #tpu.memory_space<vmem>>, vector<1x128xf32>
    %35 = vector.broadcast %34 : vector<1x128xf32> to vector<512x128xf32>
    %36 = arith.mulf %33, %35 : vector<512x128xf32>
    %c0_15 = arith.constant 0 : index
    %c0_16 = arith.constant 0 : index
    %37 = vector.load %arg5[%c0_15, %c0_16] : memref<512x9xf32, #tpu.memory_space<vmem>>, vector<512x1xf32>
    %38 = vector.broadcast %37 : vector<512x1xf32> to vector<512x128xf32>
    %39 = arith.mulf %36, %38 : vector<512x128xf32>
    %40 = arith.addf %32, %39 : vector<512x128xf32>
    %c16_i32 = arith.constant 16 : i32
    %41 = tpu.dynamic_rotate %29 by %c16_i32 dim 0 : vector<512x128xf32>, i32 -> vector<512x128xf32>
    %c4 = arith.constant 4 : index
    %c0_17 = arith.constant 0 : index
    %42 = vector.load %arg3[%c4, %c0_17] : memref<16x128xf32, #tpu.memory_space<vmem>>, vector<1x128xf32>
    %43 = vector.broadcast %42 : vector<1x128xf32> to vector<512x128xf32>
    %44 = arith.mulf %41, %43 : vector<512x128xf32>
    %c0_18 = arith.constant 0 : index
    %c1_19 = arith.constant 1 : index
    %45 = vector.load %arg5[%c0_18, %c1_19] : memref<512x9xf32, #tpu.memory_space<vmem>>, vector<512x1xf32>
    %46 = vector.broadcast %45 : vector<512x1xf32> to vector<512x128xf32>
    %47 = arith.mulf %44, %46 : vector<512x128xf32>
    %48 = arith.addf %40, %47 : vector<512x128xf32>
    %c15_i32 = arith.constant 15 : i32
    %49 = tpu.dynamic_rotate %29 by %c15_i32 dim 0 : vector<512x128xf32>, i32 -> vector<512x128xf32>
    %c5 = arith.constant 5 : index
    %c0_20 = arith.constant 0 : index
    %50 = vector.load %arg3[%c5, %c0_20] : memref<16x128xf32, #tpu.memory_space<vmem>>, vector<1x128xf32>
    %51 = vector.broadcast %50 : vector<1x128xf32> to vector<512x128xf32>
    %52 = arith.mulf %49, %51 : vector<512x128xf32>
    %c0_21 = arith.constant 0 : index
    %c2_22 = arith.constant 2 : index
    %53 = vector.load %arg5[%c0_21, %c2_22] : memref<512x9xf32, #tpu.memory_space<vmem>>, vector<512x1xf32>
    %54 = vector.broadcast %53 : vector<512x1xf32> to vector<512x128xf32>
    %55 = arith.mulf %52, %54 : vector<512x128xf32>
    %56 = arith.addf %48, %55 : vector<512x128xf32>
    %c1_i32 = arith.constant 1 : i32
    %57 = tpu.dynamic_rotate %29 by %c1_i32 dim 0 : vector<512x128xf32>, i32 -> vector<512x128xf32>
    %c6 = arith.constant 6 : index
    %c0_23 = arith.constant 0 : index
    %58 = vector.load %arg3[%c6, %c0_23] : memref<16x128xf32, #tpu.memory_space<vmem>>, vector<1x128xf32>
    %59 = vector.broadcast %58 : vector<1x128xf32> to vector<512x128xf32>
    %60 = arith.mulf %57, %59 : vector<512x128xf32>
    %c0_24 = arith.constant 0 : index
    %c3_25 = arith.constant 3 : index
    %61 = vector.load %arg5[%c0_24, %c3_25] : memref<512x9xf32, #tpu.memory_space<vmem>>, vector<512x1xf32>
    %62 = vector.broadcast %61 : vector<512x1xf32> to vector<512x128xf32>
    %63 = arith.mulf %60, %62 : vector<512x128xf32>
    %64 = arith.addf %56, %63 : vector<512x128xf32>
    %c511_i32 = arith.constant 511 : i32
    %65 = tpu.dynamic_rotate %29 by %c511_i32 dim 0 : vector<512x128xf32>, i32 -> vector<512x128xf32>
    %c8 = arith.constant 8 : index
    %c0_26 = arith.constant 0 : index
    %66 = vector.load %arg3[%c8, %c0_26] : memref<16x128xf32, #tpu.memory_space<vmem>>, vector<1x128xf32>
    %67 = vector.broadcast %66 : vector<1x128xf32> to vector<512x128xf32>
    %68 = arith.mulf %65, %67 : vector<512x128xf32>
    %c0_27 = arith.constant 0 : index
    %c5_28 = arith.constant 5 : index
    %69 = vector.load %arg5[%c0_27, %c5_28] : memref<512x9xf32, #tpu.memory_space<vmem>>, vector<512x1xf32>
    %70 = vector.broadcast %69 : vector<512x1xf32> to vector<512x128xf32>
    %71 = arith.mulf %68, %70 : vector<512x128xf32>
    %72 = arith.addf %64, %71 : vector<512x128xf32>
    %c497_i32 = arith.constant 497 : i32
    %73 = tpu.dynamic_rotate %29 by %c497_i32 dim 0 : vector<512x128xf32>, i32 -> vector<512x128xf32>
    %c9 = arith.constant 9 : index
    %c0_29 = arith.constant 0 : index
    %74 = vector.load %arg3[%c9, %c0_29] : memref<16x128xf32, #tpu.memory_space<vmem>>, vector<1x128xf32>
    %75 = vector.broadcast %74 : vector<1x128xf32> to vector<512x128xf32>
    %76 = arith.mulf %73, %75 : vector<512x128xf32>
    %c0_30 = arith.constant 0 : index
    %c6_31 = arith.constant 6 : index
    %77 = vector.load %arg5[%c0_30, %c6_31] : memref<512x9xf32, #tpu.memory_space<vmem>>, vector<512x1xf32>
    %78 = vector.broadcast %77 : vector<512x1xf32> to vector<512x128xf32>
    %79 = arith.mulf %76, %78 : vector<512x128xf32>
    %80 = arith.addf %72, %79 : vector<512x128xf32>
    %c496_i32 = arith.constant 496 : i32
    %81 = tpu.dynamic_rotate %29 by %c496_i32 dim 0 : vector<512x128xf32>, i32 -> vector<512x128xf32>
    %c10 = arith.constant 10 : index
    %c0_32 = arith.constant 0 : index
    %82 = vector.load %arg3[%c10, %c0_32] : memref<16x128xf32, #tpu.memory_space<vmem>>, vector<1x128xf32>
    %83 = vector.broadcast %82 : vector<1x128xf32> to vector<512x128xf32>
    %84 = arith.mulf %81, %83 : vector<512x128xf32>
    %c0_33 = arith.constant 0 : index
    %c7_34 = arith.constant 7 : index
    %85 = vector.load %arg5[%c0_33, %c7_34] : memref<512x9xf32, #tpu.memory_space<vmem>>, vector<512x1xf32>
    %86 = vector.broadcast %85 : vector<512x1xf32> to vector<512x128xf32>
    %87 = arith.mulf %84, %86 : vector<512x128xf32>
    %88 = arith.addf %80, %87 : vector<512x128xf32>
    %c495_i32 = arith.constant 495 : i32
    %89 = tpu.dynamic_rotate %29 by %c495_i32 dim 0 : vector<512x128xf32>, i32 -> vector<512x128xf32>
    %c11 = arith.constant 11 : index
    %c0_35 = arith.constant 0 : index
    %90 = vector.load %arg3[%c11, %c0_35] : memref<16x128xf32, #tpu.memory_space<vmem>>, vector<1x128xf32>
    %91 = vector.broadcast %90 : vector<1x128xf32> to vector<512x128xf32>
    %92 = arith.mulf %89, %91 : vector<512x128xf32>
    %c0_36 = arith.constant 0 : index
    %c8_37 = arith.constant 8 : index
    %93 = vector.load %arg5[%c0_36, %c8_37] : memref<512x9xf32, #tpu.memory_space<vmem>>, vector<512x1xf32>
    %94 = vector.broadcast %93 : vector<512x1xf32> to vector<512x128xf32>
    %95 = arith.mulf %92, %94 : vector<512x128xf32>
    %96 = arith.addf %88, %95 : vector<512x128xf32>
    %c12 = arith.constant 12 : index
    %c0_38 = arith.constant 0 : index
    %97 = vector.load %arg3[%c12, %c0_38] : memref<16x128xf32, #tpu.memory_space<vmem>>, vector<1x128xf32>
    %98 = vector.broadcast %97 : vector<1x128xf32> to vector<512x128xf32>
    %99 = arith.addf %96, %98 : vector<512x128xf32>
    %c13 = arith.constant 13 : index
    %c0_39 = arith.constant 0 : index
    %100 = vector.load %arg3[%c13, %c0_39] : memref<16x128xf32, #tpu.memory_space<vmem>>, vector<1x128xf32>
    %c14 = arith.constant 14 : index
    %c0_40 = arith.constant 0 : index
    %101 = vector.load %arg3[%c14, %c0_40] : memref<16x128xf32, #tpu.memory_space<vmem>>, vector<1x128xf32>
    %cst_41 = arith.constant dense<0.000000e+00> : vector<128xf32>
    %102 = vector.multi_reduction <add>, %99, %cst_41 [0] : vector<512x128xf32> to vector<128xf32>
    %103 = vector.shape_cast %102 : vector<128xf32> to vector<1x128xf32>
    %cst_42 = arith.constant 0.001953125 : f32
    %104 = vector.broadcast %cst_42 : f32 to vector<1x128xf32>
    %105 = arith.mulf %103, %104 : vector<1x128xf32>
    %106 = vector.broadcast %105 : vector<1x128xf32> to vector<512x128xf32>
    %107 = arith.subf %99, %106 : vector<512x128xf32>
    %108 = arith.mulf %107, %107 : vector<512x128xf32>
    %cst_43 = arith.constant dense<0.000000e+00> : vector<128xf32>
    %109 = vector.multi_reduction <add>, %108, %cst_43 [0] : vector<512x128xf32> to vector<128xf32>
    %110 = vector.shape_cast %109 : vector<128xf32> to vector<1x128xf32>
    %cst_44 = arith.constant 0.001953125 : f32
    %111 = vector.broadcast %cst_44 : f32 to vector<1x128xf32>
    %112 = arith.mulf %110, %111 : vector<1x128xf32>
    %cst_45 = arith.constant 9.99999974E-6 : f32
    %113 = vector.broadcast %cst_45 : f32 to vector<1x128xf32>
    %114 = arith.addf %112, %113 : vector<1x128xf32>
    %115 = math.rsqrt %114 : vector<1x128xf32>
    %116 = arith.mulf %115, %100 : vector<1x128xf32>
    %117 = vector.broadcast %116 : vector<1x128xf32> to vector<512x128xf32>
    %118 = arith.mulf %107, %117 : vector<512x128xf32>
    %119 = vector.broadcast %101 : vector<1x128xf32> to vector<512x128xf32>
    %120 = arith.addf %118, %119 : vector<512x128xf32>
    %121 = arith.truncf %120 : vector<512x128xf32> to vector<512x128xbf16>
    %c0_46 = arith.constant 0 : index
    %c0_47 = arith.constant 0 : index
    %122 = vector.load %arg2[%c0_46, %c0_47] : memref<128x24xbf16, #tpu.memory_space<vmem>>, vector<128x24xbf16>
    %cst_48 = arith.constant dense<0.000000e+00> : vector<512x24xf32>
    %123 = tpu.matmul %121, %122, %cst_48 {dimension_numbers = #tpu.dot_dimension_numbers<[1], [0], [0], [1], [0, 0, 1, 1], [], []>} : vector<512x128xbf16>, vector<128x24xbf16>, vector<512x24xf32> -> vector<512x24xf32>
    %c0_49 = arith.constant 0 : index
    %c0_50 = arith.constant 0 : index
    %124 = vector.load %arg4[%c0_49, %c0_50] : memref<8x24xf32, #tpu.memory_space<vmem>>, vector<1x24xf32>
    %125 = vector.broadcast %124 : vector<1x24xf32> to vector<512x24xf32>
    %126 = arith.addf %123, %125 : vector<512x24xf32>
    %c1_51 = arith.constant 1 : index
    %c0_52 = arith.constant 0 : index
    %127 = vector.load %arg4[%c1_51, %c0_52] : memref<8x24xf32, #tpu.memory_space<vmem>>, vector<1x24xf32>
    %c2_53 = arith.constant 2 : index
    %c0_54 = arith.constant 0 : index
    %128 = vector.load %arg4[%c2_53, %c0_54] : memref<8x24xf32, #tpu.memory_space<vmem>>, vector<1x24xf32>
    %cst_55 = arith.constant dense<0.000000e+00> : vector<24xf32>
    %129 = vector.multi_reduction <add>, %126, %cst_55 [0] : vector<512x24xf32> to vector<24xf32>
    %130 = vector.shape_cast %129 : vector<24xf32> to vector<1x24xf32>
    %cst_56 = arith.constant 0.001953125 : f32
    %131 = vector.broadcast %cst_56 : f32 to vector<1x24xf32>
    %132 = arith.mulf %130, %131 : vector<1x24xf32>
    %133 = vector.broadcast %132 : vector<1x24xf32> to vector<512x24xf32>
    %134 = arith.subf %126, %133 : vector<512x24xf32>
    %135 = arith.mulf %134, %134 : vector<512x24xf32>
    %cst_57 = arith.constant dense<0.000000e+00> : vector<24xf32>
    %136 = vector.multi_reduction <add>, %135, %cst_57 [0] : vector<512x24xf32> to vector<24xf32>
    %137 = vector.shape_cast %136 : vector<24xf32> to vector<1x24xf32>
    %cst_58 = arith.constant 0.001953125 : f32
    %138 = vector.broadcast %cst_58 : f32 to vector<1x24xf32>
    %139 = arith.mulf %137, %138 : vector<1x24xf32>
    %cst_59 = arith.constant 9.99999974E-6 : f32
    %140 = vector.broadcast %cst_59 : f32 to vector<1x24xf32>
    %141 = arith.addf %139, %140 : vector<1x24xf32>
    %142 = math.rsqrt %141 : vector<1x24xf32>
    %143 = arith.mulf %142, %127 : vector<1x24xf32>
    %144 = vector.broadcast %143 : vector<1x24xf32> to vector<512x24xf32>
    %145 = arith.mulf %134, %144 : vector<512x24xf32>
    %146 = vector.broadcast %128 : vector<1x24xf32> to vector<512x24xf32>
    %147 = arith.addf %145, %146 : vector<512x24xf32>
    %148 = arith.addf %0, %147 : vector<512x24xf32>
    %cst_60 = arith.constant 0.000000e+00 : f32
    %149 = vector.broadcast %cst_60 : f32 to vector<512x24xf32>
    %150 = arith.maximumf %148, %149 : vector<512x24xf32>
    %c0_61 = arith.constant 0 : index
    %c0_62 = arith.constant 0 : index
    %151 = vector.load %arg6[%c0_61, %c0_62] : memref<512x24xf32, #tpu.memory_space<vmem>>, vector<512x24xf32>
    tpu.vector_store %arg6[%c0_61, %c0_62], %150 {strides = array<i32>} : memref<512x24xf32, #tpu.memory_space<vmem>>, vector<512x24xf32>,
    return
  }
}

</mosaic_0001>

<llo_original>
// kernel: tpu_custom_call.1
$region0: #{tpu_custom_call.1}
  #allocation0 [shape = 'u32[]', space=smem, size = 0x4, offset = 0x4, fixed_abs, tag = 'smem constant byte address 0x4 - core index']
  #allocation1 [shape = 'u32[144,128]{1,0:T(1,128)}', space=vmem, size = 0x12000, scoped, tag = 'internal scratch']
  %s0 = inlined_call_operand.vmem [shape: f32[512,24], index: 0, kind: input, shape index: {}]
  %s1 = inlined_call_operand.vmem [shape: bf16[24,128], index: 1, kind: input, shape index: {}]
  %s2 = inlined_call_operand.vmem [shape: bf16[128,24], index: 2, kind: input, shape index: {}]
  %s3 = inlined_call_operand.vmem [shape: f32[16,128], index: 3, kind: input, shape index: {}]
  %s4 = inlined_call_operand.vmem [shape: f32[8,24], index: 4, kind: input, shape index: {}]
  %s5 = inlined_call_operand.vmem [shape: f32[512,9], index: 5, kind: input, shape index: {}]
  %s6 = inlined_call_operand.vmem [shape: f32[512,24], index: 6, kind: output, shape index: {}]
  %s7 = sld [smem:[#allocation0]]
  $region34: #{tpu_custom_call.1} parent=0
    _
  %s9 = ssub.s32 1, %s7
  %s10 = scalar_select 0, %s9, %s7
  // Predicated region
  $region2: #{tpu_custom_call.1} parent=0 // pred_check
    _
  $region3: #{tpu_custom_call.1} parent=0 // pred_check_branch
    %12 = sbr.rel (0) target = $region5
  $region4: #{tpu_custom_call.1} parent=0 // pred_region
    _
  $region5: #{tpu_custom_call.1} parent=0 // pred_fallthru
    _
  // Predicated region
  $region6: #{tpu_custom_call.1} parent=0 // pred_check
    _
  $region7: #{tpu_custom_call.1} parent=0 // pred_check_branch
    %14 = sbr.rel (0) target = $region9
  $region8: #{tpu_custom_call.1} parent=0 // pred_region
    _
  $region9: #{tpu_custom_call.1} parent=0 // pred_fallthru
    _
  // Predicated region
  $region10: #{tpu_custom_call.1} parent=0 // pred_check
    _
  $region11: #{tpu_custom_call.1} parent=0 // pred_check_branch
    %16 = sbr.rel (0) target = $region13
  $region12: #{tpu_custom_call.1} parent=0 // pred_region
    _
  $region13: #{tpu_custom_call.1} parent=0 // pred_fallthru
    _
  // Predicated region
  $region14: #{tpu_custom_call.1} parent=0 // pred_check
    _
  $region15: #{tpu_custom_call.1} parent=0 // pred_check_branch
    %18 = sbr.rel (0) target = $region17
  $region16: #{tpu_custom_call.1} parent=0 // pred_region
    _
  $region17: #{tpu_custom_call.1} parent=0 // pred_fallthru
    _
  // Predicated region
  $region18: #{tpu_custom_call.1} parent=0 // pred_check
    _
  $region19: #{tpu_custom_call.1} parent=0 // pred_check_branch
    %20 = sbr.rel (0) target = $region21
  $region20: #{tpu_custom_call.1} parent=0 // pred_region
    _
  $region21: #{tpu_custom_call.1} parent=0 // pred_fallthru
    _
  // Predicated region
  $region22: #{tpu_custom_call.1} parent=0 // pred_check
    _
  $region23: #{tpu_custom_call.1} parent=0 // pred_check_branch
    %22 = sbr.rel (0) target = $region25
  $region24: #{tpu_custom_call.1} parent=0 // pred_region
    _
  $region25: #{tpu_custom_call.1} parent=0 // pred_fallthru
    _
  %v24 = vld [vmem:[%s0] sm:$0xff]
  %v25 = vld [vmem:[%s0 + $0x8] sm:$0xff]
  %v26 = vld [vmem:[%s0 + $0x10] sm:$0xff]
  %v27 = vld [vmem:[%s0 + $0x18] sm:$0xff]
  %v28 = vld [vmem:[%s0 + $0x20] sm:$0xff]
  %v29 = vld [vmem:[%s0 + $0x28] sm:$0xff]
  %v30 = vld [vmem:[%s0 + $0x30] sm:$0xff]
  %v31 = vld [vmem:[%s0 + $0x38] sm:$0xff]
  %v32 = vld [vmem:[%s0 + $0x40] sm:$0xff]
  %v33 = vld [vmem:[%s0 + $0x48] sm:$0xff]
  %v34 = vld [vmem:[%s0 + $0x50] sm:$0xff]
  %v35 = vld [vmem:[%s0 + $0x58] sm:$0xff]
  %v36 = vld [vmem:[%s0 + $0x60] sm:$0xff]
  %v37 = vld [vmem:[%s0 + $0x68] sm:$0xff]
  %v38 = vld [vmem:[%s0 + $0x70] sm:$0xff]
  %v39 = vld [vmem:[%s0 + $0x78] sm:$0xff]
  %v40 = vld [vmem:[%s0 + $0x80] sm:$0xff]
  %v41 = vld [vmem:[%s0 + $0x88] sm:$0xff]
  %v42 = vld [vmem:[%s0 + $0x90] sm:$0xff]
  %v43 = vld [vmem:[%s0 + $0x98] sm:$0xff]
  %v44 = vld [vmem:[%s0 + $0xa0] sm:$0xff]
  %v45 = vld [vmem:[%s0 + $0xa8] sm:$0xff]
  %v46 = vld [vmem:[%s0 + $0xb0] sm:$0xff]
  %v47 = vld [vmem:[%s0 + $0xb8] sm:$0xff]
  %v48 = vld [vmem:[%s0 + $0xc0] sm:$0xff]
  %v49 = vld [vmem:[%s0 + $0xc8] sm:$0xff]
  %v50 = vld [vmem:[%s0 + $0xd0] sm:$0xff]
  %v51 = vld [vmem:[%s0 + $0xd8] sm:$0xff]
  %v52 = vld [vmem:[%s0 + $0xe0] sm:$0xff]
  %v53 = vld [vmem:[%s0 + $0xe8] sm:$0xff]
  %v54 = vld [vmem:[%s0 + $0xf0] sm:$0xff]
  %v55 = vld [vmem:[%s0 + $0xf8] sm:$0xff]
  %v56 = vld [vmem:[%s0 + $0x100] sm:$0xff]
  %v57 = vld [vmem:[%s0 + $0x108] sm:$0xff]
  %v58 = vld [vmem:[%s0 + $0x110] sm:$0xff]
  %v59 = vld [vmem:[%s0 + $0x118] sm:$0xff]
  %v60 = vld [vmem:[%s0 + $0x120] sm:$0xff]
  %v61 = vld [vmem:[%s0 + $0x128] sm:$0xff]
  %v62 = vld [vmem:[%s0 + $0x130] sm:$0xff]
  %v63 = vld [vmem:[%s0 + $0x138] sm:$0xff]
  %v64 = vld [vmem:[%s0 + $0x140] sm:$0xff]
  %v65 = vld [vmem:[%s0 + $0x148] sm:$0xff]
  %v66 = vld [vmem:[%s0 + $0x150] sm:$0xff]
  %v67 = vld [vmem:[%s0 + $0x158] sm:$0xff]
  %v68 = vld [vmem:[%s0 + $0x160] sm:$0xff]
  %v69 = vld [vmem:[%s0 + $0x168] sm:$0xff]
  %v70 = vld [vmem:[%s0 + $0x170] sm:$0xff]
  %v71 = vld [vmem:[%s0 + $0x178] sm:$0xff]
  %v72 = vld [vmem:[%s0 + $0x180] sm:$0xff]
  %v73 = vld [vmem:[%s0 + $0x188] sm:$0xff]
  %v74 = vld [vmem:[%s0 + $0x190] sm:$0xff]
  %v75 = vld [vmem:[%s0 + $0x198] sm:$0xff]
  %v76 = vld [vmem:[%s0 + $0x1a0] sm:$0xff]
  %v77 = vld [vmem:[%s0 + $0x1a8] sm:$0xff]
  %v78 = vld [vmem:[%s0 + $0x1b0] sm:$0xff]
  %v79 = vld [vmem:[%s0 + $0x1b8] sm:$0xff]
  %v80 = vld [vmem:[%s0 + $0x1c0] sm:$0xff]
  %v81 = vld [vmem:[%s0 + $0x1c8] sm:$0xff]
  %v82 = vld [vmem:[%s0 + $0x1d0] sm:$0xff]
  %v83 = vld [vmem:[%s0 + $0x1d8] sm:$0xff]
  %v84 = vld [vmem:[%s0 + $0x1e0] sm:$0xff]
  %v85 = vld [vmem:[%s0 + $0x1e8] sm:$0xff]
  %v86 = vld [vmem:[%s0 + $0x1f0] sm:$0xff]
  %v87 = vld [vmem:[%s0 + $0x1f8] sm:$0xff]
  %v88 = vpack.c.bf16 %v25, %v24
  %v89 = vpack.c.bf16 %v27, %v26
  %v90 = vpack.c.bf16 %v29, %v28
  %v91 = vpack.c.bf16 %v31, %v30
  %v92 = vpack.c.bf16 %v33, %v32
  %v93 = vpack.c.bf16 %v35, %v34
  %v94 = vpack.c.bf16 %v37, %v36
  %v95 = vpack.c.bf16 %v39, %v38
  %v96 = vpack.c.bf16 %v41, %v40
  %v97 = vpack.c.bf16 %v43, %v42
  %v98 = vpack.c.bf16 %v45, %v44
  %v99 = vpack.c.bf16 %v47, %v46
  %v100 = vpack.c.bf16 %v49, %v48
  %v101 = vpack.c.bf16 %v51, %v50
  %v102 = vpack.c.bf16 %v53, %v52
  %v103 = vpack.c.bf16 %v55, %v54
  %v104 = vpack.c.bf16 %v57, %v56
  %v105 = vpack.c.bf16 %v59, %v58
  %v106 = vpack.c.bf16 %v61, %v60
  %v107 = vpack.c.bf16 %v63, %v62
  %v108 = vpack.c.bf16 %v65, %v64
  %v109 = vpack.c.bf16 %v67, %v66
  %v110 = vpack.c.bf16 %v69, %v68
  %v111 = vpack.c.bf16 %v71, %v70
  %v112 = vpack.c.bf16 %v73, %v72
  %v113 = vpack.c.bf16 %v75, %v74
  %v114 = vpack.c.bf16 %v77, %v76
  %v115 = vpack.c.bf16 %v79, %v78
  %v116 = vpack.c.bf16 %v81, %v80
  %v117 = vpack.c.bf16 %v83, %v82
  %v118 = vpack.c.bf16 %v85, %v84
  %v119 = vpack.c.bf16 %v87, %v86
  %v120 = vld [vmem:[%s1] sm:$0xf]
  %v121 = vld [vmem:[%s1 + $0x4] sm:$0xf]
  %v122 = vld [vmem:[%s1 + $0x8] sm:$0xf]
  %v123 = vld [vmem:[%s3] sm:$0x1]
  %v124 = vlaneseq
  %v125 = vshrl.u32 %v124, 7
  %v126 = vsub.s32 0, %v125
  %v127 = vrot.slane %v123, %v126
  %v131 = vunpack.c.l.b16 %v120
  %v132 = vunpack.c.l.b16 %v121
  %v133 = vunpack.c.l.b16 %v122
  %v134 = vpack.c.b16 %v132, %v131
  %v135 = vpack.c.b16 %v133, %v133
  %vm137 = vcmask 195584
  %v139 = vsel %vm137, %v88, 0
  %v142 = vsel %vm137, %v89, 0
  %v145 = vsel %vm137, %v90, 0
  %v148 = vsel %vm137, %v91, 0
  %v151 = vsel %vm137, %v92, 0
  %v154 = vsel %vm137, %v93, 0
  %v157 = vsel %vm137, %v94, 0
  %v160 = vsel %vm137, %v95, 0
  %v163 = vsel %vm137, %v96, 0
  %v166 = vsel %vm137, %v97, 0
  %v169 = vsel %vm137, %v98, 0
  %v172 = vsel %vm137, %v99, 0
  %v175 = vsel %vm137, %v100, 0
  %v178 = vsel %vm137, %v101, 0
  %v181 = vsel %vm137, %v102, 0
  %v184 = vsel %vm137, %v103, 0
  %v187 = vsel %vm137, %v104, 0
  %v190 = vsel %vm137, %v105, 0
  %v193 = vsel %vm137, %v106, 0
  %v196 = vsel %vm137, %v107, 0
  %v199 = vsel %vm137, %v108, 0
  %v202 = vsel %vm137, %v109, 0
  %v205 = vsel %vm137, %v110, 0
  %v208 = vsel %vm137, %v111, 0
  %v211 = vsel %vm137, %v112, 0
  %v214 = vsel %vm137, %v113, 0
  %v217 = vsel %vm137, %v114, 0
  %v220 = vsel %vm137, %v115, 0
  %v223 = vsel %vm137, %v116, 0
  %v226 = vsel %vm137, %v117, 0
  %v229 = vsel %vm137, %v118, 0
  %v232 = vsel %vm137, %v119, 0
  %vm234 = vcmask 1043456
  %v236 = vsel %vm234, %v135, 0
  %238 = vmatprep.subr.bf16.mxu0 0
  %239 = vmatpush1.bf16.msra.mxu0 %v134
  %240 = vmatprep.subr.bf16.mxu0 0
  %241 = vmatpush1.bf16.msra.mxu0 %v236
  %242 = vmatprep.subr.bf16.mxu0 0
  %243 = vmatpush1.bf16.msra.mxu0 0
  %244 = vmatprep.subr.bf16.mxu0 0
  %245 = vmatpush1.bf16.msra.mxu0 0
  %246 = vmatprep.subr.bf16.mxu0 0
  %247 = vmatpush1.bf16.msra.mxu0 0
  %248 = vmatprep.subr.bf16.mxu0 0
  %249 = vmatpush1.bf16.msra.mxu0 0
  %250 = vmatprep.subr.bf16.mxu0 0
  %251 = vmatpush1.bf16.msra.mxu0 0
  %252 = vmatprep.subr.bf16.mxu0 0
  %253 = vmatpush1.bf16.msra.mxu0 0
  %254 = vmatprep.subr.bf16.mxu0 0
  %255 = vmatpush1.bf16.msra.mxu0 0
  %256 = vmatprep.subr.bf16.mxu0 0
  %257 = vmatpush1.bf16.msra.mxu0 0
  %258 = vmatprep.subr.bf16.mxu0 0
  %259 = vmatpush1.bf16.msra.mxu0 0
  %260 = vmatprep.subr.bf16.mxu0 0
  %261 = vmatpush1.bf16.msra.mxu0 0
  %262 = vmatprep.subr.bf16.mxu0 0
  %263 = vmatpush1.bf16.msra.mxu0 0
  %264 = vmatprep.subr.bf16.mxu0 0
  %265 = vmatpush1.bf16.msra.mxu0 0
  %266 = vmatprep.subr.bf16.mxu0 0
  %267 = vmatpush1.bf16.msra.mxu0 0
  %268 = vmatprep.subr.bf16.mxu0 0
  %269 = vmatpush1.bf16.msra.mxu0 0
  %270 = vmatprep.mubr.bf16.mxu0 0
  %271 = vmatmul.mubr.bf16.gmra.mrb[0].mxu0 %v139
  %v272 = vpop.f32.mrb[0].mxu0
  %v273 = vadd.f32 %v127, %v272
  %v274 = vpop.f32.mrb[0].mxu0
  %v275 = vpop.f32.mrb[0].mxu0
  %v276 = vadd.f32 %v127, %v275
  %v277 = vpop.f32.mrb[0].mxu0
  %278 = vmatprep.mubr.bf16.mxu0 0
  %279 = vmatmul.mubr.bf16.gmra.mrb[0].mxu0 %v142
  %v280 = vpop.f32.mrb[0].mxu0
  %v281 = vadd.f32 %v127, %v280
  %v282 = vpop.f32.mrb[0].mxu0
  %v283 = vpop.f32.mrb[0].mxu0
  %v284 = vadd.f32 %v127, %v283
  %v285 = vpop.f32.mrb[0].mxu0
  %286 = vmatprep.mubr.bf16.mxu0 0
  %287 = vmatmul.mubr.bf16.gmra.mrb[0].mxu0 %v145
  %v288 = vpop.f32.mrb[0].mxu0
  %v289 = vadd.f32 %v127, %v288
  %v290 = vpop.f32.mrb[0].mxu0
  %v291 = vpop.f32.mrb[0].mxu0
  %v292 = vadd.f32 %v127, %v291
  %v293 = vpop.f32.mrb[0].mxu0
  %294 = vmatprep.mubr.bf16.mxu0 0
  %295 = vmatmul.mubr.bf16.gmra.mrb[0].mxu0 %v148
  %v296 = vpop.f32.mrb[0].mxu0
  %v297 = vadd.f32 %v127, %v296
  %v298 = vpop.f32.mrb[0].mxu0
  %v299 = vpop.f32.mrb[0].mxu0
  %v300 = vadd.f32 %v127, %v299
  %v301 = vpop.f32.mrb[0].mxu0
  %302 = vmatprep.mubr.bf16.mxu0 0
  %303 = vmatmul.mubr.bf16.gmra.mrb[0].mxu0 %v151
  %v304 = vpop.f32.mrb[0].mxu0
  %v305 = vadd.f32 %v127, %v304
  %v306 = vpop.f32.mrb[0].mxu0
  %v307 = vpop.f32.mrb[0].mxu0
  %v308 = vadd.f32 %v127, %v307
  %v309 = vpop.f32.mrb[0].mxu0
  %310 = vmatprep.mubr.bf16.mxu0 0
  %311 = vmatmul.mubr.bf16.gmra.mrb[0].mxu0 %v154
  %v312 = vpop.f32.mrb[0].mxu0
  %v313 = vadd.f32 %v127, %v312
  %v314 = vpop.f32.mrb[0].mxu0
  %v315 = vpop.f32.mrb[0].mxu0
  %v316 = vadd.f32 %v127, %v315
  %v317 = vpop.f32.mrb[0].mxu0
  %318 = vmatprep.mubr.bf16.mxu0 0
  %319 = vmatmul.mubr.bf16.gmra.mrb[0].mxu0 %v157
  %v320 = vpop.f32.mrb[0].mxu0
  %v321 = vadd.f32 %v127, %v320
  %v322 = vpop.f32.mrb[0].mxu0
  %v323 = vpop.f32.mrb[0].mxu0
  %v324 = vadd.f32 %v127, %v323
  %v325 = vpop.f32.mrb[0].mxu0
  %326 = vmatprep.mubr.bf16.mxu0 0
  %327 = vmatmul.mubr.bf16.gmra.mrb[0].mxu0 %v160
  %v328 = vpop.f32.mrb[0].mxu0
  %v329 = vadd.f32 %v127, %v328
  %v330 = vpop.f32.mrb[0].mxu0
  %v331 = vpop.f32.mrb[0].mxu0
  %v332 = vadd.f32 %v127, %v331
  %v333 = vpop.f32.mrb[0].mxu0
  %334 = vmatprep.mubr.bf16.mxu0 0
  %335 = vmatmul.mubr.bf16.gmra.mrb[0].mxu0 %v163
  %v336 = vpop.f32.mrb[0].mxu0
  %v337 = vadd.f32 %v127, %v336
  %v338 = vpop.f32.mrb[0].mxu0
  %v339 = vpop.f32.mrb[0].mxu0
  %v340 = vadd.f32 %v127, %v339
  %v341 = vpop.f32.mrb[0].mxu0
  %342 = vmatprep.mubr.bf16.mxu0 0
  %343 = vmatmul.mubr.bf16.gmra.mrb[0].mxu0 %v166
  %v344 = vpop.f32.mrb[0].mxu0
  %v345 = vadd.f32 %v127, %v344
  %v346 = vpop.f32.mrb[0].mxu0
  %v347 = vpop.f32.mrb[0].mxu0
  %v348 = vadd.f32 %v127, %v347
  %v349 = vpop.f32.mrb[0].mxu0
  %350 = vmatprep.mubr.bf16.mxu0 0
  %351 = vmatmul.mubr.bf16.gmra.mrb[0].mxu0 %v169
  %v352 = vpop.f32.mrb[0].mxu0
  %v353 = vadd.f32 %v127, %v352
  %v354 = vpop.f32.mrb[0].mxu0
  %v355 = vpop.f32.mrb[0].mxu0
  %v356 = vadd.f32 %v127, %v355
  %v357 = vpop.f32.mrb[0].mxu0
  %358 = vmatprep.mubr.bf16.mxu0 0
  %359 = vmatmul.mubr.bf16.gmra.mrb[0].mxu0 %v172
  %v360 = vpop.f32.mrb[0].mxu0
  %v361 = vadd.f32 %v127, %v360
  %v362 = vpop.f32.mrb[0].mxu0
  %v363 = vpop.f32.mrb[0].mxu0
  %v364 = vadd.f32 %v127, %v363
  %v365 = vpop.f32.mrb[0].mxu0
  %366 = vmatprep.mubr.bf16.mxu0 0
  %367 = vmatmul.mubr.bf16.gmra.mrb[0].mxu0 %v175
  %v368 = vpop.f32.mrb[0].mxu0
  %v369 = vadd.f32 %v127, %v368
  %v370 = vpop.f32.mrb[0].mxu0
  %v371 = vpop.f32.mrb[0].mxu0
  %v372 = vadd.f32 %v127, %v371
  %v373 = vpop.f32.mrb[0].mxu0
  %374 = vmatprep.mubr.bf16.mxu0 0
  %375 = vmatmul.mubr.bf16.gmra.mrb[0].mxu0 %v178
  %v376 = vpop.f32.mrb[0].mxu0
  %v377 = vadd.f32 %v127, %v376
  %v378 = vpop.f32.mrb[0].mxu0
  %v379 = vpop.f32.mrb[0].mxu0
  %v380 = vadd.f32 %v127, %v379
  %v381 = vpop.f32.mrb[0].mxu0
  %382 = vmatprep.mubr.bf16.mxu0 0
  %383 = vmatmul.mubr.bf16.gmra.mrb[0].mxu0 %v181
  %v384 = vpop.f32.mrb[0].mxu0
  %v385 = vadd.f32 %v127, %v384
  %v386 = vpop.f32.mrb[0].mxu0
  %v387 = vpop.f32.mrb[0].mxu0
  %v388 = vadd.f32 %v127, %v387
  %v389 = vpop.f32.mrb[0].mxu0
  %390 = vmatprep.mubr.bf16.mxu0 0
  %391 = vmatmul.mubr.bf16.gmra.mrb[0].mxu0 %v184
  %v392 = vpop.f32.mrb[0].mxu0
  %v393 = vadd.f32 %v127, %v392
  %v394 = vpop.f32.mrb[0].mxu0
  %v395 = vpop.f32.mrb[0].mxu0
  %v396 = vadd.f32 %v127, %v395
  %v397 = vpop.f32.mrb[0].mxu0
  %398 = vmatprep.mubr.bf16.mxu0 0
  %399 = vmatmul.mubr.bf16.gmra.mrb[0].mxu0 %v187
  %v400 = vpop.f32.mrb[0].mxu0
  %v401 = vadd.f32 %v127, %v400
  %v402 = vpop.f32.mrb[0].mxu0
  %v403 = vpop.f32.mrb[0].mxu0
  %v404 = vadd.f32 %v127, %v403
  %v405 = vpop.f32.mrb[0].mxu0
  %406 = vmatprep.mubr.bf16.mxu0 0
  %407 = vmatmul.mubr.bf16.gmra.mrb[0].mxu0 %v190
  %v408 = vpop.f32.mrb[0].mxu0
  %v409 = vadd.f32 %v127, %v408
  %v410 = vpop.f32.mrb[0].mxu0
  %v411 = vpop.f32.mrb[0].mxu0
  %v412 = vadd.f32 %v127, %v411
  %v413 = vpop.f32.mrb[0].mxu0
  %414 = vmatprep.mubr.bf16.mxu0 0
  %415 = vmatmul.mubr.bf16.gmra.mrb[0].mxu0 %v193
  %v416 = vpop.f32.mrb[0].mxu0
  %v417 = vadd.f32 %v127, %v416
  %v418 = vpop.f32.mrb[0].mxu0
  %v419 = vpop.f32.mrb[0].mxu0
  %v420 = vadd.f32 %v127, %v419
  %v421 = vpop.f32.mrb[0].mxu0
  %422 = vmatprep.mubr.bf16.mxu0 0
  %423 = vmatmul.mubr.bf16.gmra.mrb[0].mxu0 %v196
  %v424 = vpop.f32.mrb[0].mxu0
  %v425 = vadd.f32 %v127, %v424
  %v426 = vpop.f32.mrb[0].mxu0
  %v427 = vpop.f32.mrb[0].mxu0
  %v428 = vadd.f32 %v127, %v427
  %v429 = vpop.f32.mrb[0].mxu0
  %430 = vmatprep.mubr.bf16.mxu0 0
  %431 = vmatmul.mubr.bf16.gmra.mrb[0].mxu0 %v199
  %v432 = vpop.f32.mrb[0].mxu0
  %v433 = vadd.f32 %v127, %v432
  %v434 = vpop.f32.mrb[0].mxu0
  %v435 = vpop.f32.mrb[0].mxu0
  %v436 = vadd.f32 %v127, %v435
  %v437 = vpop.f32.mrb[0].mxu0
  %438 = vmatprep.mubr.bf16.mxu0 0
  %439 = vmatmul.mubr.bf16.gmra.mrb[0].mxu0 %v202
  %v440 = vpop.f32.mrb[0].mxu0
  %v441 = vadd.f32 %v127, %v440
  %v442 = vpop.f32.mrb[0].mxu0
  %v443 = vpop.f32.mrb[0].mxu0
  %v444 = vadd.f32 %v127, %v443
  %v445 = vpop.f32.mrb[0].mxu0
  %446 = vmatprep.mubr.bf16.mxu0 0
  %447 = vmatmul.mubr.bf16.gmra.mrb[0].mxu0 %v205
  %v448 = vpop.f32.mrb[0].mxu0
  %v449 = vadd.f32 %v127, %v448
  %v450 = vpop.f32.mrb[0].mxu0
  %v451 = vpop.f32.mrb[0].mxu0
  %v452 = vadd.f32 %v127, %v451
  %v453 = vpop.f32.mrb[0].mxu0
  %454 = vmatprep.mubr.bf16.mxu0 0
  %455 = vmatmul.mubr.bf16.gmra.mrb[0].mxu0 %v208
  %v456 = vpop.f32.mrb[0].mxu0
  %v457 = vadd.f32 %v127, %v456
  %v458 = vpop.f32.mrb[0].mxu0
  %v459 = vpop.f32.mrb[0].mxu0
  %v460 = vadd.f32 %v127, %v459
  %v461 = vpop.f32.mrb[0].mxu0
  %462 = vmatprep.mubr.bf16.mxu0 0
  %463 = vmatmul.mubr.bf16.gmra.mrb[0].mxu0 %v211
  %v464 = vpop.f32.mrb[0].mxu0
  %v465 = vadd.f32 %v127, %v464
  %v466 = vpop.f32.mrb[0].mxu0
  %v467 = vpop.f32.mrb[0].mxu0
  %v468 = vadd.f32 %v127, %v467
  %v469 = vpop.f32.mrb[0].mxu0
  %470 = vmatprep.mubr.bf16.mxu0 0
  %471 = vmatmul.mubr.bf16.gmra.mrb[0].mxu0 %v214
  %v472 = vpop.f32.mrb[0].mxu0
  %v473 = vadd.f32 %v127, %v472
  %v474 = vpop.f32.mrb[0].mxu0
  %v475 = vpop.f32.mrb[0].mxu0
  %v476 = vadd.f32 %v127, %v475
  %v477 = vpop.f32.mrb[0].mxu0
  %478 = vmatprep.mubr.bf16.mxu0 0
  %479 = vmatmul.mubr.bf16.gmra.mrb[0].mxu0 %v217
  %v480 = vpop.f32.mrb[0].mxu0
  %v481 = vadd.f32 %v127, %v480
  %v482 = vpop.f32.mrb[0].mxu0
  %v483 = vpop.f32.mrb[0].mxu0
  %v484 = vadd.f32 %v127, %v483
  %v485 = vpop.f32.mrb[0].mxu0
  %486 = vmatprep.mubr.bf16.mxu0 0
  %487 = vmatmul.mubr.bf16.gmra.mrb[0].mxu0 %v220
  %v488 = vpop.f32.mrb[0].mxu0
  %v489 = vadd.f32 %v127, %v488
  %v490 = vpop.f32.mrb[0].mxu0
  %v491 = vpop.f32.mrb[0].mxu0
  %v492 = vadd.f32 %v127, %v491
  %v493 = vpop.f32.mrb[0].mxu0
  %494 = vmatprep.mubr.bf16.mxu0 0
  %495 = vmatmul.mubr.bf16.gmra.mrb[0].mxu0 %v223
  %v496 = vpop.f32.mrb[0].mxu0
  %v497 = vadd.f32 %v127, %v496
  %v498 = vpop.f32.mrb[0].mxu0
  %v499 = vpop.f32.mrb[0].mxu0
  %v500 = vadd.f32 %v127, %v499
  %v501 = vpop.f32.mrb[0].mxu0
  %502 = vmatprep.mubr.bf16.mxu0 0
  %503 = vmatmul.mubr.bf16.gmra.mrb[0].mxu0 %v226
  %v504 = vpop.f32.mrb[0].mxu0
  %v505 = vadd.f32 %v127, %v504
  %v506 = vpop.f32.mrb[0].mxu0
  %v507 = vpop.f32.mrb[0].mxu0
  %v508 = vadd.f32 %v127, %v507
  %v509 = vpop.f32.mrb[0].mxu0
  %510 = vmatprep.mubr.bf16.mxu0 0
  %511 = vmatmul.mubr.bf16.gmra.mrb[0].mxu0 %v229
  %v512 = vpop.f32.mrb[0].mxu0
  %v513 = vadd.f32 %v127, %v512
  %v514 = vpop.f32.mrb[0].mxu0
  %v515 = vpop.f32.mrb[0].mxu0
  %v516 = vadd.f32 %v127, %v515
  %v517 = vpop.f32.mrb[0].mxu0
  %518 = vmatprep.mubr.bf16.mxu0 0
  %519 = vmatmul.mubr.bf16.gmra.mrb[0].mxu0 %v232
  %v520 = vpop.f32.mrb[0].mxu0
  %v521 = vadd.f32 %v127, %v520
  %v522 = vpop.f32.mrb[0].mxu0
  %v523 = vpop.f32.mrb[0].mxu0
  %v524 = vadd.f32 %v127, %v523
  %v525 = vpop.f32.mrb[0].mxu0
  %526 = vdwg.mxu0
  %v527 = vld [vmem:[%s3 + $0x1] sm:$0x1]
  %v528 = vld [vmem:[%s3 + $0x2] sm:$0x1]
  %v529 = vadd.f32 %v273, %v276
  %v530 = vadd.f32 %v529, %v281
  %v531 = vadd.f32 %v530, %v284
  %v532 = vadd.f32 %v531, %v289
  %v533 = vadd.f32 %v532, %v292
  %v534 = vadd.f32 %v533, %v297
  %v535 = vadd.f32 %v534, %v300
  %v536 = vadd.f32 %v535, %v305
  %v537 = vadd.f32 %v536, %v308
  %v538 = vadd.f32 %v537, %v313
  %v539 = vadd.f32 %v538, %v316
  %v540 = vadd.f32 %v539, %v321
  %v541 = vadd.f32 %v540, %v324
  %v542 = vadd.f32 %v541, %v329
  %v543 = vadd.f32 %v542, %v332
  %v544 = vadd.f32 %v543, %v337
  %v545 = vadd.f32 %v544, %v340
  %v546 = vadd.f32 %v545, %v345
  %v547 = vadd.f32 %v546, %v348
  %v548 = vadd.f32 %v547, %v353
  %v549 = vadd.f32 %v548, %v356
  %v550 = vadd.f32 %v549, %v361
  %v551 = vadd.f32 %v550, %v364
  %v552 = vadd.f32 %v551, %v369
  %v553 = vadd.f32 %v552, %v372
  %v554 = vadd.f32 %v553, %v377
  %v555 = vadd.f32 %v554, %v380
  %v556 = vadd.f32 %v555, %v385
  %v557 = vadd.f32 %v556, %v388
  %v558 = vadd.f32 %v557, %v393
  %v559 = vadd.f32 %v558, %v396
  %v560 = vadd.f32 %v559, %v401
  %v561 = vadd.f32 %v560, %v404
  %v562 = vadd.f32 %v561, %v409
  %v563 = vadd.f32 %v562, %v412
  %v564 = vadd.f32 %v563, %v417
  %v565 = vadd.f32 %v564, %v420
  %v566 = vadd.f32 %v565, %v425
  %v567 = vadd.f32 %v566, %v428
  %v568 = vadd.f32 %v567, %v433
  %v569 = vadd.f32 %v568, %v436
  %v570 = vadd.f32 %v569, %v441
  %v571 = vadd.f32 %v570, %v444
  %v572 = vadd.f32 %v571, %v449
  %v573 = vadd.f32 %v572, %v452
  %v574 = vadd.f32 %v573, %v457
  %v575 = vadd.f32 %v574, %v460
  %v576 = vadd.f32 %v575, %v465
  %v577 = vadd.f32 %v576, %v468
  %v578 = vadd.f32 %v577, %v473
  %v579 = vadd.f32 %v578, %v476
  %v580 = vadd.f32 %v579, %v481
  %v581 = vadd.f32 %v580, %v484
  %v582 = vadd.f32 %v581, %v489
  %v583 = vadd.f32 %v582, %v492
  %v584 = vadd.f32 %v583, %v497
  %v585 = vadd.f32 %v584, %v500
  %v586 = vadd.f32 %v585, %v505
  %v587 = vadd.f32 %v586, %v508
  %v588 = vadd.f32 %v587, %v513
  %v589 = vadd.f32 %v588, %v516
  %v590 = vadd.f32 %v589, %v521
  %v591 = vadd.f32 %v590, %v524
  %v592 = vrot.slane %v591, 4
  %v593 = vadd.f32 %v591, %v592
  %v594 = vrot.slane %v593, 2
  %v595 = vadd.f32 %v593, %v594
  %v596 = vrot.slane %v595, 1
  %v597 = vadd.f32 %v595, %v596
  %v598 = vmul.f32 %v597, 0.001953125
  %v599 = vsub.f32 %v273, %v598
  %v600 = vsub.f32 %v276, %v598
  %v601 = vsub.f32 %v281, %v598
  %v602 = vsub.f32 %v284, %v598
  %v603 = vsub.f32 %v289, %v598
  %v604 = vsub.f32 %v292, %v598
  %v605 = vsub.f32 %v297, %v598
  %v606 = vsub.f32 %v300, %v598
  %v607 = vsub.f32 %v305, %v598
  %v608 = vsub.f32 %v308, %v598
  %v609 = vsub.f32 %v313, %v598
  %v610 = vsub.f32 %v316, %v598
  %v611 = vsub.f32 %v321, %v598
  %v612 = vsub.f32 %v324, %v598
  %v613 = vsub.f32 %v329, %v598
  %v614 = vsub.f32 %v332, %v598
  %v615 = vsub.f32 %v337, %v598
  %v616 = vsub.f32 %v340, %v598
  %v617 = vsub.f32 %v345, %v598
  %v618 = vsub.f32 %v348, %v598
  %v619 = vsub.f32 %v353, %v598
  %v620 = vsub.f32 %v356, %v598
  %v621 = vsub.f32 %v361, %v598
  %v622 = vsub.f32 %v364, %v598
  %v623 = vsub.f32 %v369, %v598
  %v624 = vsub.f32 %v372, %v598
  %v625 = vsub.f32 %v377, %v598
  %v626 = vsub.f32 %v380, %v598
  %v627 = vsub.f32 %v385, %v598
  %v628 = vsub.f32 %v388, %v598
  %v629 = vsub.f32 %v393, %v598
  %v630 = vsub.f32 %v396, %v598
  %v631 = vsub.f32 %v401, %v598
  %v632 = vsub.f32 %v404, %v598
  %v633 = vsub.f32 %v409, %v598
  %v634 = vsub.f32 %v412, %v598
  %v635 = vsub.f32 %v417, %v598
  %v636 = vsub.f32 %v420, %v598
  %v637 = vsub.f32 %v425, %v598
  %v638 = vsub.f32 %v428, %v598
  %v639 = vsub.f32 %v433, %v598
  %v640 = vsub.f32 %v436, %v598
  %v641 = vsub.f32 %v441, %v598
  %v642 = vsub.f32 %v444, %v598
  %v643 = vsub.f32 %v449, %v598
  %v644 = vsub.f32 %v452, %v598
  %v645 = vsub.f32 %v457, %v598
  %v646 = vsub.f32 %v460, %v598
  %v647 = vsub.f32 %v465, %v598
  %v648 = vsub.f32 %v468, %v598
  %v649 = vsub.f32 %v473, %v598
  %v650 = vsub.f32 %v476, %v598
  %v651 = vsub.f32 %v481, %v598
  %v652 = vsub.f32 %v484, %v598
  %v653 = vsub.f32 %v489, %v598
  %v654 = vsub.f32 %v492, %v598
  %v655 = vsub.f32 %v497, %v598
  %v656 = vsub.f32 %v500, %v598
  %v657 = vsub.f32 %v505, %v598
  %v658 = vsub.f32 %v508, %v598
  %v659 = vsub.f32 %v513, %v598
  %v660 = vsub.f32 %v516, %v598
  %v661 = vsub.f32 %v521, %v598
  %v662 = vsub.f32 %v524, %v598
  %v663 = vmul.f32 %v599, %v599
  %v664 = vmul.f32 %v600, %v600
  %v665 = vmul.f32 %v601, %v601
  %v666 = vmul.f32 %v602, %v602
  %v667 = vmul.f32 %v603, %v603
  %v668 = vmul.f32 %v604, %v604
  %v669 = vmul.f32 %v605, %v605
  %v670 = vmul.f32 %v606, %v606
  %v671 = vmul.f32 %v607, %v607
  %v672 = vmul.f32 %v608, %v608
  %v673 = vmul.f32 %v609, %v609
  %v674 = vmul.f32 %v610, %v610
  %v675 = vmul.f32 %v611, %v611
  %v676 = vmul.f32 %v612, %v612
  %v677 = vmul.f32 %v613, %v613
  %v678 = vmul.f32 %v614, %v614
  %v679 = vmul.f32 %v615, %v615
  %v680 = vmul.f32 %v616, %v616
  %v681 = vmul.f32 %v617, %v617
  %v682 = vmul.f32 %v618, %v618
  %v683 = vmul.f32 %v619, %v619
  %v684 = vmul.f32 %v620, %v620
  %v685 = vmul.f32 %v621, %v621
  %v686 = vmul.f32 %v622, %v622
  %v687 = vmul.f32 %v623, %v623
  %v688 = vmul.f32 %v624, %v624
  %v689 = vmul.f32 %v625, %v625
  %v690 = vmul.f32 %v626, %v626
  %v691 = vmul.f32 %v627, %v627
  %v692 = vmul.f32 %v628, %v628
  %v693 = vmul.f32 %v629, %v629
  %v694 = vmul.f32 %v630, %v630
  %v695 = vmul.f32 %v631, %v631
  %v696 = vmul.f32 %v632, %v632
  %v697 = vmul.f32 %v633, %v633
  %v698 = vmul.f32 %v634, %v634
  %v699 = vmul.f32 %v635, %v635
  %v700 = vmul.f32 %v636, %v636
  %v701 = vmul.f32 %v637, %v637
  %v702 = vmul.f32 %v638, %v638
  %v703 = vmul.f32 %v639, %v639
  %v704 = vmul.f32 %v640, %v640
  %v705 = vmul.f32 %v641, %v641
  %v706 = vmul.f32 %v642, %v642
  %v707 = vmul.f32 %v643, %v643
  %v708 = vmul.f32 %v644, %v644
  %v709 = vmul.f32 %v645, %v645
  %v710 = vmul.f32 %v646, %v646
  %v711 = vmul.f32 %v647, %v647
  %v712 = vmul.f32 %v648, %v648
  %v713 = vmul.f32 %v649, %v649
  %v714 = vmul.f32 %v650, %v650
  %v715 = vmul.f32 %v651, %v651
  %v716 = vmul.f32 %v652, %v652
  %v717 = vmul.f32 %v653, %v653
  %v718 = vmul.f32 %v654, %v654
  %v719 = vmul.f32 %v655, %v655
  %v720 = vmul.f32 %v656, %v656
  %v721 = vmul.f32 %v657, %v657
  %v722 = vmul.f32 %v658, %v658
  %v723 = vmul.f32 %v659, %v659
  %v724 = vmul.f32 %v660, %v660
  %v725 = vmul.f32 %v661, %v661
  %v726 = vmul.f32 %v662, %v662
  %v727 = vadd.f32 %v663, %v664
  %v728 = vadd.f32 %v727, %v665
  %v729 = vadd.f32 %v728, %v666
  %v730 = vadd.f32 %v729, %v667
  %v731 = vadd.f32 %v730, %v668
  %v732 = vadd.f32 %v731, %v669
  %v733 = vadd.f32 %v732, %v670
  %v734 = vadd.f32 %v733, %v671
  %v735 = vadd.f32 %v734, %v672
  %v736 = vadd.f32 %v735, %v673
  %v737 = vadd.f32 %v736, %v674
  %v738 = vadd.f32 %v737, %v675
  %v739 = vadd.f32 %v738, %v676
  %v740 = vadd.f32 %v739, %v677
  %v741 = vadd.f32 %v740, %v678
  %v742 = vadd.f32 %v741, %v679
  %v743 = vadd.f32 %v742, %v680
  %v744 = vadd.f32 %v743, %v681
  %v745 = vadd.f32 %v744, %v682
  %v746 = vadd.f32 %v745, %v683
  %v747 = vadd.f32 %v746, %v684
  %v748 = vadd.f32 %v747, %v685
  %v749 = vadd.f32 %v748, %v686
  %v750 = vadd.f32 %v749, %v687
  %v751 = vadd.f32 %v750, %v688
  %v752 = vadd.f32 %v751, %v689
  %v753 = vadd.f32 %v752, %v690
  %v754 = vadd.f32 %v753, %v691
  %v755 = vadd.f32 %v754, %v692
  %v756 = vadd.f32 %v755, %v693
  %v757 = vadd.f32 %v756, %v694
  %v758 = vadd.f32 %v757, %v695
  %v759 = vadd.f32 %v758, %v696
  %v760 = vadd.f32 %v759, %v697
  %v761 = vadd.f32 %v760, %v698
  %v762 = vadd.f32 %v761, %v699
  %v763 = vadd.f32 %v762, %v700
  %v764 = vadd.f32 %v763, %v701
  %v765 = vadd.f32 %v764, %v702
  %v766 = vadd.f32 %v765, %v703
  %v767 = vadd.f32 %v766, %v704
  %v768 = vadd.f32 %v767, %v705
  %v769 = vadd.f32 %v768, %v706
  %v770 = vadd.f32 %v769, %v707
  %v771 = vadd.f32 %v770, %v708
  %v772 = vadd.f32 %v771, %v709
  %v773 = vadd.f32 %v772, %v710
  %v774 = vadd.f32 %v773, %v711
  %v775 = vadd.f32 %v774, %v712
  %v776 = vadd.f32 %v775, %v713
  %v777 = vadd.f32 %v776, %v714
  %v778 = vadd.f32 %v777, %v715
  %v779 = vadd.f32 %v778, %v716
  %v780 = vadd.f32 %v779, %v717
  %v781 = vadd.f32 %v780, %v718
  %v782 = vadd.f32 %v781, %v719
  %v783 = vadd.f32 %v782, %v720
  %v784 = vadd.f32 %v783, %v721
  %v785 = vadd.f32 %v784, %v722
  %v786 = vadd.f32 %v785, %v723
  %v787 = vadd.f32 %v786, %v724
  %v788 = vadd.f32 %v787, %v725
  %v789 = vadd.f32 %v788, %v726
  %v790 = vrot.slane %v789, 4
  %v791 = vadd.f32 %v789, %v790
  %v792 = vrot.slane %v791, 2
  %v793 = vadd.f32 %v791, %v792
  %v794 = vrot.slane %v793, 1
  %v795 = vadd.f32 %v793, %v794
  %v796 = vmul.f32 %v795, 0.001953125
  %v797 = vadd.f32 %v796, 1e-05
  %v798 = vrsqrt.pop %v797
  %v799 = vmul.f32 %v798, %v527
  %v800 = vlaneseq
  %v801 = vshrl.u32 %v800, 7
  %v802 = vsub.s32 0, %v801
  %v803 = vrot.slane %v799, %v802
  %v804 = vmul.f32 %v599, %v803
  %v805 = vmul.f32 %v600, %v803
  %v806 = vmul.f32 %v601, %v803
  %v807 = vmul.f32 %v602, %v803
  %v808 = vmul.f32 %v603, %v803
  %v809 = vmul.f32 %v604, %v803
  %v810 = vmul.f32 %v605, %v803
  %v811 = vmul.f32 %v606, %v803
  %v812 = vmul.f32 %v607, %v803
  %v813 = vmul.f32 %v608, %v803
  %v814 = vmul.f32 %v609, %v803
  %v815 = vmul.f32 %v610, %v803
  %v816 = vmul.f32 %v611, %v803
  %v817 = vmul.f32 %v612, %v803
  %v818 = vmul.f32 %v613, %v803
  %v819 = vmul.f32 %v614, %v803
  %v820 = vmul.f32 %v615, %v803
  %v821 = vmul.f32 %v616, %v803
  %v822 = vmul.f32 %v617, %v803
  %v823 = vmul.f32 %v618, %v803
  %v824 = vmul.f32 %v619, %v803
  %v825 = vmul.f32 %v620, %v803
  %v826 = vmul.f32 %v621, %v803
  %v827 = vmul.f32 %v622, %v803
  %v828 = vmul.f32 %v623, %v803
  %v829 = vmul.f32 %v624, %v803
  %v830 = vmul.f32 %v625, %v803
  %v831 = vmul.f32 %v626, %v803
  %v832 = vmul.f32 %v627, %v803
  %v833 = vmul.f32 %v628, %v803
  %v834 = vmul.f32 %v629, %v803
  %v835 = vmul.f32 %v630, %v803
  %v836 = vmul.f32 %v631, %v803
  %v837 = vmul.f32 %v632, %v803
  %v838 = vmul.f32 %v633, %v803
  %v839 = vmul.f32 %v634, %v803
  %v840 = vmul.f32 %v635, %v803
  %v841 = vmul.f32 %v636, %v803
  %v842 = vmul.f32 %v637, %v803
  %v843 = vmul.f32 %v638, %v803
  %v844 = vmul.f32 %v639, %v803
  %v845 = vmul.f32 %v640, %v803
  %v846 = vmul.f32 %v641, %v803
  %v847 = vmul.f32 %v642, %v803
  %v848 = vmul.f32 %v643, %v803
  %v849 = vmul.f32 %v644, %v803
  %v850 = vmul.f32 %v645, %v803
  %v851 = vmul.f32 %v646, %v803
  %v852 = vmul.f32 %v647, %v803
  %v853 = vmul.f32 %v648, %v803
  %v854 = vmul.f32 %v649, %v803
  %v855 = vmul.f32 %v650, %v803
  %v856 = vmul.f32 %v651, %v803
  %v857 = vmul.f32 %v652, %v803
  %v858 = vmul.f32 %v653, %v803
  %v859 = vmul.f32 %v654, %v803
  %v860 = vmul.f32 %v655, %v803
  %v861 = vmul.f32 %v656, %v803
  %v862 = vmul.f32 %v657, %v803
  %v863 = vmul.f32 %v658, %v803
  %v864 = vmul.f32 %v659, %v803
  %v865 = vmul.f32 %v660, %v803
  %v866 = vmul.f32 %v661, %v803
  %v867 = vmul.f32 %v662, %v803
  %v868 = vlaneseq
  %v869 = vshrl.u32 %v868, 7
  %v870 = vsub.s32 0, %v869
  %v871 = vrot.slane %v528, %v870
  %v872 = vadd.f32 %v804, %v871
  %v873 = vadd.f32 %v805, %v871
  %v874 = vadd.f32 %v806, %v871
  %v875 = vadd.f32 %v807, %v871
  %v876 = vadd.f32 %v808, %v871
  %v877 = vadd.f32 %v809, %v871
  %v878 = vadd.f32 %v810, %v871
  %v879 = vadd.f32 %v811, %v871
  %v880 = vadd.f32 %v812, %v871
  %v881 = vadd.f32 %v813, %v871
  %v882 = vadd.f32 %v814, %v871
  %v883 = vadd.f32 %v815, %v871
  %v884 = vadd.f32 %v816, %v871
  %v885 = vadd.f32 %v817, %v871
  %v886 = vadd.f32 %v818, %v871
  %v887 = vadd.f32 %v819, %v871
  %v888 = vadd.f32 %v820, %v871
  %v889 = vadd.f32 %v821, %v871
  %v890 = vadd.f32 %v822, %v871
  %v891 = vadd.f32 %v823, %v871
  %v892 = vadd.f32 %v824, %v871
  %v893 = vadd.f32 %v825, %v871
  %v894 = vadd.f32 %v826, %v871
  %v895 = vadd.f32 %v827, %v871
  %v896 = vadd.f32 %v828, %v871
  %v897 = vadd.f32 %v829, %v871
  %v898 = vadd.f32 %v830, %v871
  %v899 = vadd.f32 %v831, %v871
  %v900 = vadd.f32 %v832, %v871
  %v901 = vadd.f32 %v833, %v871
  %v902 = vadd.f32 %v834, %v871
  %v903 = vadd.f32 %v835, %v871
  %v904 = vadd.f32 %v836, %v871
  %v905 = vadd.f32 %v837, %v871
  %v906 = vadd.f32 %v838, %v871
  %v907 = vadd.f32 %v839, %v871
  %v908 = vadd.f32 %v840, %v871
  %v909 = vadd.f32 %v841, %v871
  %v910 = vadd.f32 %v842, %v871
  %v911 = vadd.f32 %v843, %v871
  %v912 = vadd.f32 %v844, %v871
  %v913 = vadd.f32 %v845, %v871
  %v914 = vadd.f32 %v846, %v871
  %v915 = vadd.f32 %v847, %v871
  %v916 = vadd.f32 %v848, %v871
  %v917 = vadd.f32 %v849, %v871
  %v918 = vadd.f32 %v850, %v871
  %v919 = vadd.f32 %v851, %v871
  %v920 = vadd.f32 %v852, %v871
  %v921 = vadd.f32 %v853, %v871
  %v922 = vadd.f32 %v854, %v871
  %v923 = vadd.f32 %v855, %v871
  %v924 = vadd.f32 %v856, %v871
  %v925 = vadd.f32 %v857, %v871
  %v926 = vadd.f32 %v858, %v871
  %v927 = vadd.f32 %v859, %v871
  %v928 = vadd.f32 %v860, %v871
  %v929 = vadd.f32 %v861, %v871
  %v930 = vadd.f32 %v862, %v871
  %v931 = vadd.f32 %v863, %v871
  %v932 = vadd.f32 %v864, %v871
  %v933 = vadd.f32 %v865, %v871
  %v934 = vadd.f32 %v866, %v871
  %v935 = vadd.f32 %v867, %v871
  %v936 = vmax.f32 %v872, 0.0
  %v937 = vmax.f32 %v873, 0.0
  %v938 = vmax.f32 %v874, 0.0
  %v939 = vmax.f32 %v875, 0.0
  %v940 = vmax.f32 %v876, 0.0
  %v941 = vmax.f32 %v877, 0.0
  %v942 = vmax.f32 %v878, 0.0
  %v943 = vmax.f32 %v879, 0.0
  %v944 = vmax.f32 %v880, 0.0
  %v945 = vmax.f32 %v881, 0.0
  %v946 = vmax.f32 %v882, 0.0
  %v947 = vmax.f32 %v883, 0.0
  %v948 = vmax.f32 %v884, 0.0
  %v949 = vmax.f32 %v885, 0.0
  %v950 = vmax.f32 %v886, 0.0
  %v951 = vmax.f32 %v887, 0.0
  %v952 = vmax.f32 %v888, 0.0
  %v953 = vmax.f32 %v889, 0.0
  %v954 = vmax.f32 %v890, 0.0
  %v955 = vmax.f32 %v891, 0.0
  %v956 = vmax.f32 %v892, 0.0
  %v957 = vmax.f32 %v893, 0.0
  %v958 = vmax.f32 %v894, 0.0
  %v959 = vmax.f32 %v895, 0.0
  %v960 = vmax.f32 %v896, 0.0
  %v961 = vmax.f32 %v897, 0.0
  %v962 = vmax.f32 %v898, 0.0
  %v963 = vmax.f32 %v899, 0.0
  %v964 = vmax.f32 %v900, 0.0
  %v965 = vmax.f32 %v901, 0.0
  %v966 = vmax.f32 %v902, 0.0
  %v967 = vmax.f32 %v903, 0.0
  %v968 = vmax.f32 %v904, 0.0
  %v969 = vmax.f32 %v905, 0.0
  %v970 = vmax.f32 %v906, 0.0
  %v971 = vmax.f32 %v907, 0.0
  %v972 = vmax.f32 %v908, 0.0
  %v973 = vmax.f32 %v909, 0.0
  %v974 = vmax.f32 %v910, 0.0
  %v975 = vmax.f32 %v911, 0.0
  %v976 = vmax.f32 %v912, 0.0
  %v977 = vmax.f32 %v913, 0.0
  %v978 = vmax.f32 %v914, 0.0
  %v979 = vmax.f32 %v915, 0.0
  %v980 = vmax.f32 %v916, 0.0
  %v981 = vmax.f32 %v917, 0.0
  %v982 = vmax.f32 %v918, 0.0
  %v983 = vmax.f32 %v919, 0.0
  %v984 = vmax.f32 %v920, 0.0
  %v985 = vmax.f32 %v921, 0.0
  %v986 = vmax.f32 %v922, 0.0
  %v987 = vmax.f32 %v923, 0.0
  %v988 = vmax.f32 %v924, 0.0
  %v989 = vmax.f32 %v925, 0.0
  %v990 = vmax.f32 %v926, 0.0
  %v991 = vmax.f32 %v927, 0.0
  %v992 = vmax.f32 %v928, 0.0
  %v993 = vmax.f32 %v929, 0.0
  %v994 = vmax.f32 %v930, 0.0
  %v995 = vmax.f32 %v931, 0.0
  %v996 = vmax.f32 %v932, 0.0
  %v997 = vmax.f32 %v933, 0.0
  %v998 = vmax.f32 %v934, 0.0
  %v999 = vmax.f32 %v935, 0.0
  %v1000 = vld [vmem:[%s3 + $0x7] sm:$0x1]
  %v1001 = vlaneseq
  %v1002 = vshrl.u32 %v1001, 7
  %v1003 = vsub.s32 0, %v1002
  %v1004 = vrot.slane %v1000, %v1003
  %v1005 = vmul.f32 %v936, %v1004
  %v1006 = vmul.f32 %v937, %v1004
  %v1007 = vmul.f32 %v938, %v1004
  %v1008 = vmul.f32 %v939, %v1004
  %v1009 = vmul.f32 %v940, %v1004
  %v1010 = vmul.f32 %v941, %v1004
  %v1011 = vmul.f32 %v942, %v1004
  %v1012 = vmul.f32 %v943, %v1004
  %v1013 = vmul.f32 %v944, %v1004
  %v1014 = vmul.f32 %v945, %v1004
  %v1015 = vmul.f32 %v946, %v1004
  %v1016 = vmul.f32 %v947, %v1004
  %v1017 = vmul.f32 %v948, %v1004
  %v1018 = vmul.f32 %v949, %v1004
  %v1019 = vmul.f32 %v950, %v1004
  %v1020 = vmul.f32 %v951, %v1004
  %v1021 = vmul.f32 %v952, %v1004
  %v1022 = vmul.f32 %v953, %v1004
  %v1023 = vmul.f32 %v954, %v1004
  %v1024 = vmul.f32 %v955, %v1004
  %v1025 = vmul.f32 %v956, %v1004
  %v1026 = vmul.f32 %v957, %v1004
  %v1027 = vmul.f32 %v958, %v1004
  %v1028 = vmul.f32 %v959, %v1004
  %v1029 = vmul.f32 %v960, %v1004
  %v1030 = vmul.f32 %v961, %v1004
  %v1031 = vmul.f32 %v962, %v1004
  %v1032 = vmul.f32 %v963, %v1004
  %v1033 = vmul.f32 %v964, %v1004
  %v1034 = vmul.f32 %v965, %v1004
  %v1035 = vmul.f32 %v966, %v1004
  %v1036 = vmul.f32 %v967, %v1004
  %v1037 = vmul.f32 %v968, %v1004
  %v1038 = vmul.f32 %v969, %v1004
  %v1039 = vmul.f32 %v970, %v1004
  %v1040 = vmul.f32 %v971, %v1004
  %v1041 = vmul.f32 %v972, %v1004
  %v1042 = vmul.f32 %v973, %v1004
  %v1043 = vmul.f32 %v974, %v1004
  %v1044 = vmul.f32 %v975, %v1004
  %v1045 = vmul.f32 %v976, %v1004
  %v1046 = vmul.f32 %v977, %v1004
  %v1047 = vmul.f32 %v978, %v1004
  %v1048 = vmul.f32 %v979, %v1004
  %v1049 = vmul.f32 %v980, %v1004
  %v1050 = vmul.f32 %v981, %v1004
  %v1051 = vmul.f32 %v982, %v1004
  %v1052 = vmul.f32 %v983, %v1004
  %v1053 = vmul.f32 %v984, %v1004
  %v1054 = vmul.f32 %v985, %v1004
  %v1055 = vmul.f32 %v986, %v1004
  %v1056 = vmul.f32 %v987, %v1004
  %v1057 = vmul.f32 %v988, %v1004
  %v1058 = vmul.f32 %v989, %v1004
  %v1059 = vmul.f32 %v990, %v1004
  %v1060 = vmul.f32 %v991, %v1004
  %v1061 = vmul.f32 %v992, %v1004
  %v1062 = vmul.f32 %v993, %v1004
  %v1063 = vmul.f32 %v994, %v1004
  %v1064 = vmul.f32 %v995, %v1004
  %v1065 = vmul.f32 %v996, %v1004
  %v1066 = vmul.f32 %v997, %v1004
  %v1067 = vmul.f32 %v998, %v1004
  %v1068 = vmul.f32 %v999, %v1004
  %v1069 = vrot.slane %v936, 7
  %v1070 = vrot.slane %v937, 7
  %v1071 = vrot.slane %v938, 7
  %v1072 = vrot.slane %v939, 7
  %v1073 = vrot.slane %v940, 7
  %v1074 = vrot.slane %v941, 7
  %v1075 = vrot.slane %v942, 7
  %v1076 = vrot.slane %v943, 7
  %v1077 = vrot.slane %v944, 7
  %v1078 = vrot.slane %v945, 7
  %v1079 = vrot.slane %v946, 7
  %v1080 = vrot.slane %v947, 7
  %v1081 = vrot.slane %v948, 7
  %v1082 = vrot.slane %v949, 7
  %v1083 = vrot.slane %v950, 7
  %v1084 = vrot.slane %v951, 7
  %v1085 = vrot.slane %v952, 7
  %v1086 = vrot.slane %v953, 7
  %v1087 = vrot.slane %v954, 7
  %v1088 = vrot.slane %v955, 7
  %v1089 = vrot.slane %v956, 7
  %v1090 = vrot.slane %v957, 7
  %v1091 = vrot.slane %v958, 7
  %v1092 = vrot.slane %v959, 7
  %v1093 = vrot.slane %v960, 7
  %v1094 = vrot.slane %v961, 7
  %v1095 = vrot.slane %v962, 7
  %v1096 = vrot.slane %v963, 7
  %v1097 = vrot.slane %v964, 7
  %v1098 = vrot.slane %v965, 7
  %v1099 = vrot.slane %v966, 7
  %v1100 = vrot.slane %v967, 7
  %v1101 = vrot.slane %v968, 7
  %v1102 = vrot.slane %v969, 7
  %v1103 = vrot.slane %v970, 7
  %v1104 = vrot.slane %v971, 7
  %v1105 = vrot.slane %v972, 7
  %v1106 = vrot.slane %v973, 7
  %v1107 = vrot.slane %v974, 7
  %v1108 = vrot.slane %v975, 7
  %v1109 = vrot.slane %v976, 7
  %v1110 = vrot.slane %v977, 7
  %v1111 = vrot.slane %v978, 7
  %v1112 = vrot.slane %v979, 7
  %v1113 = vrot.slane %v980, 7
  %v1114 = vrot.slane %v981, 7
  %v1115 = vrot.slane %v982, 7
  %v1116 = vrot.slane %v983, 7
  %v1117 = vrot.slane %v984, 7
  %v1118 = vrot.slane %v985, 7
  %v1119 = vrot.slane %v986, 7
  %v1120 = vrot.slane %v987, 7
  %v1121 = vrot.slane %v988, 7
  %v1122 = vrot.slane %v989, 7
  %v1123 = vrot.slane %v990, 7
  %v1124 = vrot.slane %v991, 7
  %v1125 = vrot.slane %v992, 7
  %v1126 = vrot.slane %v993, 7
  %v1127 = vrot.slane %v994, 7
  %v1128 = vrot.slane %v995, 7
  %v1129 = vrot.slane %v996, 7
  %v1130 = vrot.slane %v997, 7
  %v1131 = vrot.slane %v998, 7
  %v1132 = vrot.slane %v999, 7
  %v1133 = vlaneseq
  %v1134 = vshrl.u32 %v1133, 7
  %vm1135 = vcmp.lt.s32.totalorder %v1134, 1
  %v1136 = vsel %vm1135, %v1131, %v1132
  %v1137 = vsel %vm1135, %v1130, %v1131
  %v1138 = vsel %vm1135, %v1129, %v1130
  %v1139 = vsel %vm1135, %v1128, %v1129
  %v1140 = vsel %vm1135, %v1127, %v1128
  %v1141 = vsel %vm1135, %v1126, %v1127
  %v1142 = vsel %vm1135, %v1125, %v1126
  %v1143 = vsel %vm1135, %v1124, %v1125
  %v1144 = vsel %vm1135, %v1123, %v1124
  %v1145 = vsel %vm1135, %v1122, %v1123
  %v1146 = vsel %vm1135, %v1121, %v1122
  %v1147 = vsel %vm1135, %v1120, %v1121
  %v1148 = vsel %vm1135, %v1119, %v1120
  %v1149 = vsel %vm1135, %v1118, %v1119
  %v1150 = vsel %vm1135, %v1117, %v1118
  %v1151 = vsel %vm1135, %v1116, %v1117
  %v1152 = vsel %vm1135, %v1115, %v1116
  %v1153 = vsel %vm1135, %v1114, %v1115
  %v1154 = vsel %vm1135, %v1113, %v1114
  %v1155 = vsel %vm1135, %v1112, %v1113
  %v1156 = vsel %vm1135, %v1111, %v1112
  %v1157 = vsel %vm1135, %v1110, %v1111
  %v1158 = vsel %vm1135, %v1109, %v1110
  %v1159 = vsel %vm1135, %v1108, %v1109
  %v1160 = vsel %vm1135, %v1107, %v1108
  %v1161 = vsel %vm1135, %v1106, %v1107
  %v1162 = vsel %vm1135, %v1105, %v1106
  %v1163 = vsel %vm1135, %v1104, %v1105
  %v1164 = vsel %vm1135, %v1103, %v1104
  %v1165 = vsel %vm1135, %v1102, %v1103
  %v1166 = vsel %vm1135, %v1101, %v1102
  %v1167 = vsel %vm1135, %v1100, %v1101
  %v1168 = vsel %vm1135, %v1099, %v1100
  %v1169 = vsel %vm1135, %v1098, %v1099
  %v1170 = vsel %vm1135, %v1097, %v1098
  %v1171 = vsel %vm1135, %v1096, %v1097
  %v1172 = vsel %vm1135, %v1095, %v1096
  %v1173 = vsel %vm1135, %v1094, %v1095
  %v1174 = vsel %vm1135, %v1093, %v1094
  %v1175 = vsel %vm1135, %v1092, %v1093
  %v1176 = vsel %vm1135, %v1091, %v1092
  %v1177 = vsel %vm1135, %v1090, %v1091
  %v1178 = vsel %vm1135, %v1089, %v1090
  %v1179 = vsel %vm1135, %v1088, %v1089
  %v1180 = vsel %vm1135, %v1087, %v1088
  %v1181 = vsel %vm1135, %v1086, %v1087
  %v1182 = vsel %vm1135, %v1085, %v1086
  %v1183 = vsel %vm1135, %v1084, %v1085
  %v1184 = vsel %vm1135, %v1083, %v1084
  %v1185 = vsel %vm1135, %v1082, %v1083
  %v1186 = vsel %vm1135, %v1081, %v1082
  %v1187 = vsel %vm1135, %v1080, %v1081
  %v1188 = vsel %vm1135, %v1079, %v1080
  %v1189 = vsel %vm1135, %v1078, %v1079
  %v1190 = vsel %vm1135, %v1077, %v1078
  %v1191 = vsel %vm1135, %v1076, %v1077
  %v1192 = vsel %vm1135, %v1075, %v1076
  %v1193 = vsel %vm1135, %v1074, %v1075
  %v1194 = vsel %vm1135, %v1073, %v1074
  %v1195 = vsel %vm1135, %v1072, %v1073
  %v1196 = vsel %vm1135, %v1071, %v1072
  %v1197 = vsel %vm1135, %v1070, %v1071
  %v1198 = vsel %vm1135, %v1069, %v1070
  %v1199 = vsel %vm1135, %v1132, %v1069
  %v1200 = vld [vmem:[%s3 + $0x3] sm:$0x1]
  %v1201 = vlaneseq
  %v1202 = vshrl.u32 %v1201, 7
  %v1203 = vsub.s32 0, %v1202
  %v1204 = vrot.slane %v1200, %v1203
  %v1205 = vmul.f32 %v1137, %v1204
  %v1206 = vmul.f32 %v1136, %v1204
  %v1207 = vmul.f32 %v1199, %v1204
  %v1208 = vmul.f32 %v1198, %v1204
  %v1209 = vmul.f32 %v1197, %v1204
  %v1210 = vmul.f32 %v1196, %v1204
  %v1211 = vmul.f32 %v1195, %v1204
  %v1212 = vmul.f32 %v1194, %v1204
  %v1213 = vmul.f32 %v1193, %v1204
  %v1214 = vmul.f32 %v1192, %v1204
  %v1215 = vmul.f32 %v1191, %v1204
  %v1216 = vmul.f32 %v1190, %v1204
  %v1217 = vmul.f32 %v1189, %v1204
  %v1218 = vmul.f32 %v1188, %v1204
  %v1219 = vmul.f32 %v1187, %v1204
  %v1220 = vmul.f32 %v1186, %v1204
  %v1221 = vmul.f32 %v1185, %v1204
  %v1222 = vmul.f32 %v1184, %v1204
  %v1223 = vmul.f32 %v1183, %v1204
  %v1224 = vmul.f32 %v1182, %v1204
  %v1225 = vmul.f32 %v1181, %v1204
  %v1226 = vmul.f32 %v1180, %v1204
  %v1227 = vmul.f32 %v1179, %v1204
  %v1228 = vmul.f32 %v1178, %v1204
  %v1229 = vmul.f32 %v1177, %v1204
  %v1230 = vmul.f32 %v1176, %v1204
  %v1231 = vmul.f32 %v1175, %v1204
  %v1232 = vmul.f32 %v1174, %v1204
  %v1233 = vmul.f32 %v1173, %v1204
  %v1234 = vmul.f32 %v1172, %v1204
  %v1235 = vmul.f32 %v1171, %v1204
  %v1236 = vmul.f32 %v1170, %v1204
  %v1237 = vmul.f32 %v1169, %v1204
  %v1238 = vmul.f32 %v1168, %v1204
  %v1239 = vmul.f32 %v1167, %v1204
  %v1240 = vmul.f32 %v1166, %v1204
  %v1241 = vmul.f32 %v1165, %v1204
  %v1242 = vmul.f32 %v1164, %v1204
  %v1243 = vmul.f32 %v1163, %v1204
  %v1244 = vmul.f32 %v1162, %v1204
  %v1245 = vmul.f32 %v1161, %v1204
  %v1246 = vmul.f32 %v1160, %v1204
  %v1247 = vmul.f32 %v1159, %v1204
  %v1248 = vmul.f32 %v1158, %v1204
  %v1249 = vmul.f32 %v1157, %v1204
  %v1250 = vmul.f32 %v1156, %v1204
  %v1251 = vmul.f32 %v1155, %v1204
  %v1252 = vmul.f32 %v1154, %v1204
  %v1253 = vmul.f32 %v1153, %v1204
  %v1254 = vmul.f32 %v1152, %v1204
  %v1255 = vmul.f32 %v1151, %v1204
  %v1256 = vmul.f32 %v1150, %v1204
  %v1257 = vmul.f32 %v1149, %v1204
  %v1258 = vmul.f32 %v1148, %v1204
  %v1259 = vmul.f32 %v1147, %v1204
  %v1260 = vmul.f32 %v1146, %v1204
  %v1261 = vmul.f32 %v1145, %v1204
  %v1262 = vmul.f32 %v1144, %v1204
  %v1263 = vmul.f32 %v1143, %v1204
  %v1264 = vmul.f32 %v1142, %v1204
  %v1265 = vmul.f32 %v1141, %v1204
  %v1266 = vmul.f32 %v1140, %v1204
  %v1267 = vmul.f32 %v1139, %v1204
  %v1268 = vmul.f32 %v1138, %v1204
  %v1269 = vld [vmem:[%s5] sm:$0xff]
  %v1270 = vld [vmem:[%s5 + $0x8] sm:$0xff]
  %v1271 = vld [vmem:[%s5 + $0x10] sm:$0xff]
  %v1272 = vld [vmem:[%s5 + $0x18] sm:$0xff]
  %v1273 = vld [vmem:[%s5 + $0x20] sm:$0xff]
  %v1274 = vld [vmem:[%s5 + $0x28] sm:$0xff]
  %v1275 = vld [vmem:[%s5 + $0x30] sm:$0xff]
  %v1276 = vld [vmem:[%s5 + $0x38] sm:$0xff]
  %v1277 = vld [vmem:[%s5 + $0x40] sm:$0xff]
  %v1278 = vld [vmem:[%s5 + $0x48] sm:$0xff]
  %v1279 = vld [vmem:[%s5 + $0x50] sm:$0xff]
  %v1280 = vld [vmem:[%s5 + $0x58] sm:$0xff]
  %v1281 = vld [vmem:[%s5 + $0x60] sm:$0xff]
  %v1282 = vld [vmem:[%s5 + $0x68] sm:$0xff]
  %v1283 = vld [vmem:[%s5 + $0x70] sm:$0xff]
  %v1284 = vld [vmem:[%s5 + $0x78] sm:$0xff]
  %v1285 = vld [vmem:[%s5 + $0x80] sm:$0xff]
  %v1286 = vld [vmem:[%s5 + $0x88] sm:$0xff]
  %v1287 = vld [vmem:[%s5 + $0x90] sm:$0xff]
  %v1288 = vld [vmem:[%s5 + $0x98] sm:$0xff]
  %v1289 = vld [vmem:[%s5 + $0xa0] sm:$0xff]
  %v1290 = vld [vmem:[%s5 + $0xa8] sm:$0xff]
  %v1291 = vld [vmem:[%s5 + $0xb0] sm:$0xff]
  %v1292 = vld [vmem:[%s5 + $0xb8] sm:$0xff]
  %v1293 = vld [vmem:[%s5 + $0xc0] sm:$0xff]
  %v1294 = vld [vmem:[%s5 + $0xc8] sm:$0xff]
  %v1295 = vld [vmem:[%s5 + $0xd0] sm:$0xff]
  %v1296 = vld [vmem:[%s5 + $0xd8] sm:$0xff]
  %v1297 = vld [vmem:[%s5 + $0xe0] sm:$0xff]
  %v1298 = vld [vmem:[%s5 + $0xe8] sm:$0xff]
  %v1299 = vld [vmem:[%s5 + $0xf0] sm:$0xff]
  %v1300 = vld [vmem:[%s5 + $0xf8] sm:$0xff]
  %v1301 = vld [vmem:[%s5 + $0x100] sm:$0xff]
  %v1302 = vld [vmem:[%s5 + $0x108] sm:$0xff]
  %v1303 = vld [vmem:[%s5 + $0x110] sm:$0xff]
  %v1304 = vld [vmem:[%s5 + $0x118] sm:$0xff]
  %v1305 = vld [vmem:[%s5 + $0x120] sm:$0xff]
  %v1306 = vld [vmem:[%s5 + $0x128] sm:$0xff]
  %v1307 = vld [vmem:[%s5 + $0x130] sm:$0xff]
  %v1308 = vld [vmem:[%s5 + $0x138] sm:$0xff]
  %v1309 = vld [vmem:[%s5 + $0x140] sm:$0xff]
  %v1310 = vld [vmem:[%s5 + $0x148] sm:$0xff]
  %v1311 = vld [vmem:[%s5 + $0x150] sm:$0xff]
  %v1312 = vld [vmem:[%s5 + $0x158] sm:$0xff]
  %v1313 = vld [vmem:[%s5 + $0x160] sm:$0xff]
  %v1314 = vld [vmem:[%s5 + $0x168] sm:$0xff]
  %v1315 = vld [vmem:[%s5 + $0x170] sm:$0xff]
  %v1316 = vld [vmem:[%s5 + $0x178] sm:$0xff]
  %v1317 = vld [vmem:[%s5 + $0x180] sm:$0xff]
  %v1318 = vld [vmem:[%s5 + $0x188] sm:$0xff]
  %v1319 = vld [vmem:[%s5 + $0x190] sm:$0xff]
  %v1320 = vld [vmem:[%s5 + $0x198] sm:$0xff]
  %v1321 = vld [vmem:[%s5 + $0x1a0] sm:$0xff]
  %v1322 = vld [vmem:[%s5 + $0x1a8] sm:$0xff]
  %v1323 = vld [vmem:[%s5 + $0x1b0] sm:$0xff]
  %v1324 = vld [vmem:[%s5 + $0x1b8] sm:$0xff]
  %v1325 = vld [vmem:[%s5 + $0x1c0] sm:$0xff]
  %v1326 = vld [vmem:[%s5 + $0x1c8] sm:$0xff]
  %v1327 = vld [vmem:[%s5 + $0x1d0] sm:$0xff]
  %v1328 = vld [vmem:[%s5 + $0x1d8] sm:$0xff]
  %v1329 = vld [vmem:[%s5 + $0x1e0] sm:$0xff]
  %v1330 = vld [vmem:[%s5 + $0x1e8] sm:$0xff]
  %v1331 = vld [vmem:[%s5 + $0x1f0] sm:$0xff]
  %v1332 = vld [vmem:[%s5 + $0x1f8] sm:$0xff]
  %1334 = vset.pattern.permute.xlu0 0
  %1335 = vperm.xlu0 %1334, %v1269
  %v1336 = vpop.permute.xlu0 %1335
  %1339 = vset.pattern.permute.xlu0 0
  %1340 = vperm.xlu0 %1339, %v1270
  %v1341 = vpop.permute.xlu0 %1340
  %1344 = vset.pattern.permute.xlu0 0
  %1345 = vperm.xlu0 %1344, %v1271
  %v1346 = vpop.permute.xlu0 %1345
  %1349 = vset.pattern.permute.xlu0 0
  %1350 = vperm.xlu0 %1349, %v1272
  %v1351 = vpop.permute.xlu0 %1350
  %1354 = vset.pattern.permute.xlu0 0
  %1355 = vperm.xlu0 %1354, %v1273
  %v1356 = vpop.permute.xlu0 %1355
  %1359 = vset.pattern.permute.xlu0 0
  %1360 = vperm.xlu0 %1359, %v1274
  %v1361 = vpop.permute.xlu0 %1360
  %1364 = vset.pattern.permute.xlu0 0
  %1365 = vperm.xlu0 %1364, %v1275
  %v1366 = vpop.permute.xlu0 %1365
  %1369 = vset.pattern.permute.xlu0 0
  %1370 = vperm.xlu0 %1369, %v1276
  %v1371 = vpop.permute.xlu0 %1370
  %1374 = vset.pattern.permute.xlu0 0
  %1375 = vperm.xlu0 %1374, %v1277
  %v1376 = vpop.permute.xlu0 %1375
  %1379 = vset.pattern.permute.xlu0 0
  %1380 = vperm.xlu0 %1379, %v1278
  %v1381 = vpop.permute.xlu0 %1380
  %1384 = vset.pattern.permute.xlu0 0
  %1385 = vperm.xlu0 %1384, %v1279
  %v1386 = vpop.permute.xlu0 %1385
  %1389 = vset.pattern.permute.xlu0 0
  %1390 = vperm.xlu0 %1389, %v1280
  %v1391 = vpop.permute.xlu0 %1390
  %1394 = vset.pattern.permute.xlu0 0
  %1395 = vperm.xlu0 %1394, %v1281
  %v1396 = vpop.permute.xlu0 %1395
  %1399 = vset.pattern.permute.xlu0 0
  %1400 = vperm.xlu0 %1399, %v1282
  %v1401 = vpop.permute.xlu0 %1400
  %1404 = vset.pattern.permute.xlu0 0
  %1405 = vperm.xlu0 %1404, %v1283
  %v1406 = vpop.permute.xlu0 %1405
  %1409 = vset.pattern.permute.xlu0 0
  %1410 = vperm.xlu0 %1409, %v1284
  %v1411 = vpop.permute.xlu0 %1410
  %1414 = vset.pattern.permute.xlu0 0
  %1415 = vperm.xlu0 %1414, %v1285
  %v1416 = vpop.permute.xlu0 %1415
  %1419 = vset.pattern.permute.xlu0 0
  %1420 = vperm.xlu0 %1419, %v1286
  %v1421 = vpop.permute.xlu0 %1420
  %1424 = vset.pattern.permute.xlu0 0
  %1425 = vperm.xlu0 %1424, %v1287
  %v1426 = vpop.permute.xlu0 %1425
  %1429 = vset.pattern.permute.xlu0 0
  %1430 = vperm.xlu0 %1429, %v1288
  %v1431 = vpop.permute.xlu0 %1430
  %1434 = vset.pattern.permute.xlu0 0
  %1435 = vperm.xlu0 %1434, %v1289
  %v1436 = vpop.permute.xlu0 %1435
  %1439 = vset.pattern.permute.xlu0 0
  %1440 = vperm.xlu0 %1439, %v1290
  %v1441 = vpop.permute.xlu0 %1440
  %1444 = vset.pattern.permute.xlu0 0
  %1445 = vperm.xlu0 %1444, %v1291
  %v1446 = vpop.permute.xlu0 %1445
  %1449 = vset.pattern.permute.xlu0 0
  %1450 = vperm.xlu0 %1449, %v1292
  %v1451 = vpop.permute.xlu0 %1450
  %1454 = vset.pattern.permute.xlu0 0
  %1455 = vperm.xlu0 %1454, %v1293
  %v1456 = vpop.permute.xlu0 %1455
  %1459 = vset.pattern.permute.xlu0 0
  %1460 = vperm.xlu0 %1459, %v1294
  %v1461 = vpop.permute.xlu0 %1460
  %1464 = vset.pattern.permute.xlu0 0
  %1465 = vperm.xlu0 %1464, %v1295
  %v1466 = vpop.permute.xlu0 %1465
  %1469 = vset.pattern.permute.xlu0 0
  %1470 = vperm.xlu0 %1469, %v1296
  %v1471 = vpop.permute.xlu0 %1470
  %1474 = vset.pattern.permute.xlu0 0
  %1475 = vperm.xlu0 %1474, %v1297
  %v1476 = vpop.permute.xlu0 %1475
  %1479 = vset.pattern.permute.xlu0 0
  %1480 = vperm.xlu0 %1479, %v1298
  %v1481 = vpop.permute.xlu0 %1480
  %1484 = vset.pattern.permute.xlu0 0
  %1485 = vperm.xlu0 %1484, %v1299
  %v1486 = vpop.permute.xlu0 %1485
  %1489 = vset.pattern.permute.xlu0 0
  %1490 = vperm.xlu0 %1489, %v1300
  %v1491 = vpop.permute.xlu0 %1490
  %1494 = vset.pattern.permute.xlu0 0
  %1495 = vperm.xlu0 %1494, %v1301
  %v1496 = vpop.permute.xlu0 %1495
  %1499 = vset.pattern.permute.xlu0 0
  %1500 = vperm.xlu0 %1499, %v1302
  %v1501 = vpop.permute.xlu0 %1500
  %1504 = vset.pattern.permute.xlu0 0
  %1505 = vperm.xlu0 %1504, %v1303
  %v1506 = vpop.permute.xlu0 %1505
  %1509 = vset.pattern.permute.xlu0 0
  %1510 = vperm.xlu0 %1509, %v1304
  %v1511 = vpop.permute.xlu0 %1510
  %1514 = vset.pattern.permute.xlu0 0
  %1515 = vperm.xlu0 %1514, %v1305
  %v1516 = vpop.permute.xlu0 %1515
  %1519 = vset.pattern.permute.xlu0 0
  %1520 = vperm.xlu0 %1519, %v1306
  %v1521 = vpop.permute.xlu0 %1520
  %1524 = vset.pattern.permute.xlu0 0
  %1525 = vperm.xlu0 %1524, %v1307
  %v1526 = vpop.permute.xlu0 %1525
  %1529 = vset.pattern.permute.xlu0 0
  %1530 = vperm.xlu0 %1529, %v1308
  %v1531 = vpop.permute.xlu0 %1530
  %1534 = vset.pattern.permute.xlu0 0
  %1535 = vperm.xlu0 %1534, %v1309
  %v1536 = vpop.permute.xlu0 %1535
  %1539 = vset.pattern.permute.xlu0 0
  %1540 = vperm.xlu0 %1539, %v1310
  %v1541 = vpop.permute.xlu0 %1540
  %1544 = vset.pattern.permute.xlu0 0
  %1545 = vperm.xlu0 %1544, %v1311
  %v1546 = vpop.permute.xlu0 %1545
  %1549 = vset.pattern.permute.xlu0 0
  %1550 = vperm.xlu0 %1549, %v1312
  %v1551 = vpop.permute.xlu0 %1550
  %1554 = vset.pattern.permute.xlu0 0
  %1555 = vperm.xlu0 %1554, %v1313
  %v1556 = vpop.permute.xlu0 %1555
  %1559 = vset.pattern.permute.xlu0 0
  %1560 = vperm.xlu0 %1559, %v1314
  %v1561 = vpop.permute.xlu0 %1560
  %1564 = vset.pattern.permute.xlu0 0
  %1565 = vperm.xlu0 %1564, %v1315
  %v1566 = vpop.permute.xlu0 %1565
  %1569 = vset.pattern.permute.xlu0 0
  %1570 = vperm.xlu0 %1569, %v1316
  %v1571 = vpop.permute.xlu0 %1570
  %1574 = vset.pattern.permute.xlu0 0
  %1575 = vperm.xlu0 %1574, %v1317
  %v1576 = vpop.permute.xlu0 %1575
  %1579 = vset.pattern.permute.xlu0 0
  %1580 = vperm.xlu0 %1579, %v1318
  %v1581 = vpop.permute.xlu0 %1580
  %1584 = vset.pattern.permute.xlu0 0
  %1585 = vperm.xlu0 %1584, %v1319
  %v1586 = vpop.permute.xlu0 %1585
  %1589 = vset.pattern.permute.xlu0 0
  %1590 = vperm.xlu0 %1589, %v1320
  %v1591 = vpop.permute.xlu0 %1590
  %1594 = vset.pattern.permute.xlu0 0
  %1595 = vperm.xlu0 %1594, %v1321
  %v1596 = vpop.permute.xlu0 %1595
  %1599 = vset.pattern.permute.xlu0 0
  %1600 = vperm.xlu0 %1599, %v1322
  %v1601 = vpop.permute.xlu0 %1600
  %1604 = vset.pattern.permute.xlu0 0
  %1605 = vperm.xlu0 %1604, %v1323
  %v1606 = vpop.permute.xlu0 %1605
  %1609 = vset.pattern.permute.xlu0 0
  %1610 = vperm.xlu0 %1609, %v1324
  %v1611 = vpop.permute.xlu0 %1610
  %1614 = vset.pattern.permute.xlu0 0
  %1615 = vperm.xlu0 %1614, %v1325
  %v1616 = vpop.permute.xlu0 %1615
  %1619 = vset.pattern.permute.xlu0 0
  %1620 = vperm.xlu0 %1619, %v1326
  %v1621 = vpop.permute.xlu0 %1620
  %1624 = vset.pattern.permute.xlu0 0
  %1625 = vperm.xlu0 %1624, %v1327
  %v1626 = vpop.permute.xlu0 %1625
  %1629 = vset.pattern.permute.xlu0 0
  %1630 = vperm.xlu0 %1629, %v1328
  %v1631 = vpop.permute.xlu0 %1630
  %1634 = vset.pattern.permute.xlu0 0
  %1635 = vperm.xlu0 %1634, %v1329
  %v1636 = vpop.permute.xlu0 %1635
  %1639 = vset.pattern.permute.xlu0 0
  %1640 = vperm.xlu0 %1639, %v1330
  %v1641 = vpop.permute.xlu0 %1640
  %1644 = vset.pattern.permute.xlu0 0
  %1645 = vperm.xlu0 %1644, %v1331
  %v1646 = vpop.permute.xlu0 %1645
  %1649 = vset.pattern.permute.xlu0 0
  %1650 = vperm.xlu0 %1649, %v1332
  %v1651 = vpop.permute.xlu0 %1650
  %v1653 = vmul.f32 %v1205, %v1336
  %v1654 = vmul.f32 %v1206, %v1341
  %v1655 = vmul.f32 %v1207, %v1346
  %v1656 = vmul.f32 %v1208, %v1351
  %v1657 = vmul.f32 %v1209, %v1356
  %v1658 = vmul.f32 %v1210, %v1361
  %v1659 = vmul.f32 %v1211, %v1366
  %v1660 = vmul.f32 %v1212, %v1371
  %v1661 = vmul.f32 %v1213, %v1376
  %v1662 = vmul.f32 %v1214, %v1381
  %v1663 = vmul.f32 %v1215, %v1386
  %v1664 = vmul.f32 %v1216, %v1391
  %v1665 = vmul.f32 %v1217, %v1396
  %v1666 = vmul.f32 %v1218, %v1401
  %v1667 = vmul.f32 %v1219, %v1406
  %v1668 = vmul.f32 %v1220, %v1411
  %v1669 = vmul.f32 %v1221, %v1416
  %v1670 = vmul.f32 %v1222, %v1421
  %v1671 = vmul.f32 %v1223, %v1426
  %v1672 = vmul.f32 %v1224, %v1431
  %v1673 = vmul.f32 %v1225, %v1436
  %v1674 = vmul.f32 %v1226, %v1441
  %v1675 = vmul.f32 %v1227, %v1446
  %v1676 = vmul.f32 %v1228, %v1451
  %v1677 = vmul.f32 %v1229, %v1456
  %v1678 = vmul.f32 %v1230, %v1461
  %v1679 = vmul.f32 %v1231, %v1466
  %v1680 = vmul.f32 %v1232, %v1471
  %v1681 = vmul.f32 %v1233, %v1476
  %v1682 = vmul.f32 %v1234, %v1481
  %v1683 = vmul.f32 %v1235, %v1486
  %v1684 = vmul.f32 %v1236, %v1491
  %v1685 = vmul.f32 %v1237, %v1496
  %v1686 = vmul.f32 %v1238, %v1501
  %v1687 = vmul.f32 %v1239, %v1506
  %v1688 = vmul.f32 %v1240, %v1511
  %v1689 = vmul.f32 %v1241, %v1516
  %v1690 = vmul.f32 %v1242, %v1521
  %v1691 = vmul.f32 %v1243, %v1526
  %v1692 = vmul.f32 %v1244, %v1531
  %v1693 = vmul.f32 %v1245, %v1536
  %v1694 = vmul.f32 %v1246, %v1541
  %v1695 = vmul.f32 %v1247, %v1546
  %v1696 = vmul.f32 %v1248, %v1551
  %v1697 = vmul.f32 %v1249, %v1556
  %v1698 = vmul.f32 %v1250, %v1561
  %v1699 = vmul.f32 %v1251, %v1566
  %v1700 = vmul.f32 %v1252, %v1571
  %v1701 = vmul.f32 %v1253, %v1576
  %v1702 = vmul.f32 %v1254, %v1581
  %v1703 = vmul.f32 %v1255, %v1586
  %v1704 = vmul.f32 %v1256, %v1591
  %v1705 = vmul.f32 %v1257, %v1596
  %v1706 = vmul.f32 %v1258, %v1601
  %v1707 = vmul.f32 %v1259, %v1606
  %v1708 = vmul.f32 %v1260, %v1611
  %v1709 = vmul.f32 %v1261, %v1616
  %v1710 = vmul.f32 %v1262, %v1621
  %v1711 = vmul.f32 %v1263, %v1626
  %v1712 = vmul.f32 %v1264, %v1631
  %v1713 = vmul.f32 %v1265, %v1636
  %v1714 = vmul.f32 %v1266, %v1641
  %v1715 = vmul.f32 %v1267, %v1646
  %v1716 = vmul.f32 %v1268, %v1651
  %v1717 = vadd.f32 %v1005, %v1653
  %v1718 = vadd.f32 %v1006, %v1654
  %v1719 = vadd.f32 %v1007, %v1655
  %v1720 = vadd.f32 %v1008, %v1656
  %v1721 = vadd.f32 %v1009, %v1657
  %v1722 = vadd.f32 %v1010, %v1658
  %v1723 = vadd.f32 %v1011, %v1659
  %v1724 = vadd.f32 %v1012, %v1660
  %v1725 = vadd.f32 %v1013, %v1661
  %v1726 = vadd.f32 %v1014, %v1662
  %v1727 = vadd.f32 %v1015, %v1663
  %v1728 = vadd.f32 %v1016, %v1664
  %v1729 = vadd.f32 %v1017, %v1665
  %v1730 = vadd.f32 %v1018, %v1666
  %v1731 = vadd.f32 %v1019, %v1667
  %v1732 = vadd.f32 %v1020, %v1668
  %v1733 = vadd.f32 %v1021, %v1669
  %v1734 = vadd.f32 %v1022, %v1670
  %v1735 = vadd.f32 %v1023, %v1671
  %v1736 = vadd.f32 %v1024, %v1672
  %v1737 = vadd.f32 %v1025, %v1673
  %v1738 = vadd.f32 %v1026, %v1674
  %v1739 = vadd.f32 %v1027, %v1675
  %v1740 = vadd.f32 %v1028, %v1676
  %v1741 = vadd.f32 %v1029, %v1677
  %v1742 = vadd.f32 %v1030, %v1678
  %v1743 = vadd.f32 %v1031, %v1679
  %v1744 = vadd.f32 %v1032, %v1680
  %v1745 = vadd.f32 %v1033, %v1681
  %v1746 = vadd.f32 %v1034, %v1682
  %v1747 = vadd.f32 %v1035, %v1683
  %v1748 = vadd.f32 %v1036, %v1684
  %v1749 = vadd.f32 %v1037, %v1685
  %v1750 = vadd.f32 %v1038, %v1686
  %v1751 = vadd.f32 %v1039, %v1687
  %v1752 = vadd.f32 %v1040, %v1688
  %v1753 = vadd.f32 %v1041, %v1689
  %v1754 = vadd.f32 %v1042, %v1690
  %v1755 = vadd.f32 %v1043, %v1691
  %v1756 = vadd.f32 %v1044, %v1692
  %v1757 = vadd.f32 %v1045, %v1693
  %v1758 = vadd.f32 %v1046, %v1694
  %v1759 = vadd.f32 %v1047, %v1695
  %v1760 = vadd.f32 %v1048, %v1696
  %v1761 = vadd.f32 %v1049, %v1697
  %v1762 = vadd.f32 %v1050, %v1698
  %v1763 = vadd.f32 %v1051, %v1699
  %v1764 = vadd.f32 %v1052, %v1700
  %v1765 = vadd.f32 %v1053, %v1701
  %v1766 = vadd.f32 %v1054, %v1702
  %v1767 = vadd.f32 %v1055, %v1703
  %v1768 = vadd.f32 %v1056, %v1704
  %v1769 = vadd.f32 %v1057, %v1705
  %v1770 = vadd.f32 %v1058, %v1706
  %v1771 = vadd.f32 %v1059, %v1707
  %v1772 = vadd.f32 %v1060, %v1708
  %v1773 = vadd.f32 %v1061, %v1709
  %v1774 = vadd.f32 %v1062, %v1710
  %v1775 = vadd.f32 %v1063, %v1711
  %v1776 = vadd.f32 %v1064, %v1712
  %v1777 = vadd.f32 %v1065, %v1713
  %v1778 = vadd.f32 %v1066, %v1714
  %v1779 = vadd.f32 %v1067, %v1715
  %v1780 = vadd.f32 %v1068, %v1716
  %v1781 = vld [vmem:[%s3 + $0x4] sm:$0x1]
  %v1782 = vlaneseq
  %v1783 = vshrl.u32 %v1782, 7
  %v1784 = vsub.s32 0, %v1783
  %v1785 = vrot.slane %v1781, %v1784
  %v1786 = vmul.f32 %v998, %v1785
  %v1787 = vmul.f32 %v999, %v1785
  %v1788 = vmul.f32 %v936, %v1785
  %v1789 = vmul.f32 %v937, %v1785
  %v1790 = vmul.f32 %v938, %v1785
  %v1791 = vmul.f32 %v939, %v1785
  %v1792 = vmul.f32 %v940, %v1785
  %v1793 = vmul.f32 %v941, %v1785
  %v1794 = vmul.f32 %v942, %v1785
  %v1795 = vmul.f32 %v943, %v1785
  %v1796 = vmul.f32 %v944, %v1785
  %v1797 = vmul.f32 %v945, %v1785
  %v1798 = vmul.f32 %v946, %v1785
  %v1799 = vmul.f32 %v947, %v1785
  %v1800 = vmul.f32 %v948, %v1785
  %v1801 = vmul.f32 %v949, %v1785
  %v1802 = vmul.f32 %v950, %v1785
  %v1803 = vmul.f32 %v951, %v1785
  %v1804 = vmul.f32 %v952, %v1785
  %v1805 = vmul.f32 %v953, %v1785
  %v1806 = vmul.f32 %v954, %v1785
  %v1807 = vmul.f32 %v955, %v1785
  %v1808 = vmul.f32 %v956, %v1785
  %v1809 = vmul.f32 %v957, %v1785
  %v1810 = vmul.f32 %v958, %v1785
  %v1811 = vmul.f32 %v959, %v1785
  %v1812 = vmul.f32 %v960, %v1785
  %v1813 = vmul.f32 %v961, %v1785
  %v1814 = vmul.f32 %v962, %v1785
  %v1815 = vmul.f32 %v963, %v1785
  %v1816 = vmul.f32 %v964, %v1785
  %v1817 = vmul.f32 %v965, %v1785
  %v1818 = vmul.f32 %v966, %v1785
  %v1819 = vmul.f32 %v967, %v1785
  %v1820 = vmul.f32 %v968, %v1785
  %v1821 = vmul.f32 %v969, %v1785
  %v1822 = vmul.f32 %v970, %v1785
  %v1823 = vmul.f32 %v971, %v1785
  %v1824 = vmul.f32 %v972, %v1785
  %v1825 = vmul.f32 %v973, %v1785
  %v1826 = vmul.f32 %v974, %v1785
  %v1827 = vmul.f32 %v975, %v1785
  %v1828 = vmul.f32 %v976, %v1785
  %v1829 = vmul.f32 %v977, %v1785
  %v1830 = vmul.f32 %v978, %v1785
  %v1831 = vmul.f32 %v979, %v1785
  %v1832 = vmul.f32 %v980, %v1785
  %v1833 = vmul.f32 %v981, %v1785
  %v1834 = vmul.f32 %v982, %v1785
  %v1835 = vmul.f32 %v983, %v1785
  %v1836 = vmul.f32 %v984, %v1785
  %v1837 = vmul.f32 %v985, %v1785
  %v1838 = vmul.f32 %v986, %v1785
  %v1839 = vmul.f32 %v987, %v1785
  %v1840 = vmul.f32 %v988, %v1785
  %v1841 = vmul.f32 %v989, %v1785
  %v1842 = vmul.f32 %v990, %v1785
  %v1843 = vmul.f32 %v991, %v1785
  %v1844 = vmul.f32 %v992, %v1785
  %v1845 = vmul.f32 %v993, %v1785
  %v1846 = vmul.f32 %v994, %v1785
  %v1847 = vmul.f32 %v995, %v1785
  %v1848 = vmul.f32 %v996, %v1785
  %v1849 = vmul.f32 %v997, %v1785
  %1850 = vset.pattern.permute.xlu0 1
  %1851 = vperm.xlu0 %1850, %v1269
  %v1852 = vpop.permute.xlu0 %1851
  %1854 = vset.pattern.permute.xlu0 1
  %1855 = vperm.xlu0 %1854, %v1270
  %v1856 = vpop.permute.xlu0 %1855
  %1858 = vset.pattern.permute.xlu0 1
  %1859 = vperm.xlu0 %1858, %v1271
  %v1860 = vpop.permute.xlu0 %1859
  %1862 = vset.pattern.permute.xlu0 1
  %1863 = vperm.xlu0 %1862, %v1272
  %v1864 = vpop.permute.xlu0 %1863
  %1866 = vset.pattern.permute.xlu0 1
  %1867 = vperm.xlu0 %1866, %v1273
  %v1868 = vpop.permute.xlu0 %1867
  %1870 = vset.pattern.permute.xlu0 1
  %1871 = vperm.xlu0 %1870, %v1274
  %v1872 = vpop.permute.xlu0 %1871
  %1874 = vset.pattern.permute.xlu0 1
  %1875 = vperm.xlu0 %1874, %v1275
  %v1876 = vpop.permute.xlu0 %1875
  %1878 = vset.pattern.permute.xlu0 1
  %1879 = vperm.xlu0 %1878, %v1276
  %v1880 = vpop.permute.xlu0 %1879
  %1882 = vset.pattern.permute.xlu0 1
  %1883 = vperm.xlu0 %1882, %v1277
  %v1884 = vpop.permute.xlu0 %1883
  %1886 = vset.pattern.permute.xlu0 1
  %1887 = vperm.xlu0 %1886, %v1278
  %v1888 = vpop.permute.xlu0 %1887
  %1890 = vset.pattern.permute.xlu0 1
  %1891 = vperm.xlu0 %1890, %v1279
  %v1892 = vpop.permute.xlu0 %1891
  %1894 = vset.pattern.permute.xlu0 1
  %1895 = vperm.xlu0 %1894, %v1280
  %v1896 = vpop.permute.xlu0 %1895
  %1898 = vset.pattern.permute.xlu0 1
  %1899 = vperm.xlu0 %1898, %v1281
  %v1900 = vpop.permute.xlu0 %1899
  %1902 = vset.pattern.permute.xlu0 1
  %1903 = vperm.xlu0 %1902, %v1282
  %v1904 = vpop.permute.xlu0 %1903
  %1906 = vset.pattern.permute.xlu0 1
  %1907 = vperm.xlu0 %1906, %v1283
  %v1908 = vpop.permute.xlu0 %1907
  %1910 = vset.pattern.permute.xlu0 1
  %1911 = vperm.xlu0 %1910, %v1284
  %v1912 = vpop.permute.xlu0 %1911
  %1914 = vset.pattern.permute.xlu0 1
  %1915 = vperm.xlu0 %1914, %v1285
  %v1916 = vpop.permute.xlu0 %1915
  %1918 = vset.pattern.permute.xlu0 1
  %1919 = vperm.xlu0 %1918, %v1286
  %v1920 = vpop.permute.xlu0 %1919
  %1922 = vset.pattern.permute.xlu0 1
  %1923 = vperm.xlu0 %1922, %v1287
  %v1924 = vpop.permute.xlu0 %1923
  %1926 = vset.pattern.permute.xlu0 1
  %1927 = vperm.xlu0 %1926, %v1288
  %v1928 = vpop.permute.xlu0 %1927
  %1930 = vset.pattern.permute.xlu0 1
  %1931 = vperm.xlu0 %1930, %v1289
  %v1932 = vpop.permute.xlu0 %1931
  %1934 = vset.pattern.permute.xlu0 1
  %1935 = vperm.xlu0 %1934, %v1290
  %v1936 = vpop.permute.xlu0 %1935
  %1938 = vset.pattern.permute.xlu0 1
  %1939 = vperm.xlu0 %1938, %v1291
  %v1940 = vpop.permute.xlu0 %1939
  %1942 = vset.pattern.permute.xlu0 1
  %1943 = vperm.xlu0 %1942, %v1292
  %v1944 = vpop.permute.xlu0 %1943
  %1946 = vset.pattern.permute.xlu0 1
  %1947 = vperm.xlu0 %1946, %v1293
  %v1948 = vpop.permute.xlu0 %1947
  %1950 = vset.pattern.permute.xlu0 1
  %1951 = vperm.xlu0 %1950, %v1294
  %v1952 = vpop.permute.xlu0 %1951
  %1954 = vset.pattern.permute.xlu0 1
  %1955 = vperm.xlu0 %1954, %v1295
  %v1956 = vpop.permute.xlu0 %1955
  %1958 = vset.pattern.permute.xlu0 1
  %1959 = vperm.xlu0 %1958, %v1296
  %v1960 = vpop.permute.xlu0 %1959
  %1962 = vset.pattern.permute.xlu0 1
  %1963 = vperm.xlu0 %1962, %v1297
  %v1964 = vpop.permute.xlu0 %1963
  %1966 = vset.pattern.permute.xlu0 1
  %1967 = vperm.xlu0 %1966, %v1298
  %v1968 = vpop.permute.xlu0 %1967
  %1970 = vset.pattern.permute.xlu0 1
  %1971 = vperm.xlu0 %1970, %v1299
  %v1972 = vpop.permute.xlu0 %1971
  %1974 = vset.pattern.permute.xlu0 1
  %1975 = vperm.xlu0 %1974, %v1300
  %v1976 = vpop.permute.xlu0 %1975
  %1978 = vset.pattern.permute.xlu0 1
  %1979 = vperm.xlu0 %1978, %v1301
  %v1980 = vpop.permute.xlu0 %1979
  %1982 = vset.pattern.permute.xlu0 1
  %1983 = vperm.xlu0 %1982, %v1302
  %v1984 = vpop.permute.xlu0 %1983
  %1986 = vset.pattern.permute.xlu0 1
  %1987 = vperm.xlu0 %1986, %v1303
  %v1988 = vpop.permute.xlu0 %1987
  %1990 = vset.pattern.permute.xlu0 1
  %1991 = vperm.xlu0 %1990, %v1304
  %v1992 = vpop.permute.xlu0 %1991
  %1994 = vset.pattern.permute.xlu0 1
  %1995 = vperm.xlu0 %1994, %v1305
  %v1996 = vpop.permute.xlu0 %1995
  %1998 = vset.pattern.permute.xlu0 1
  %1999 = vperm.xlu0 %1998, %v1306
  %v2000 = vpop.permute.xlu0 %1999
  %2002 = vset.pattern.permute.xlu0 1
  %2003 = vperm.xlu0 %2002, %v1307
  %v2004 = vpop.permute.xlu0 %2003
  %2006 = vset.pattern.permute.xlu0 1
  %2007 = vperm.xlu0 %2006, %v1308
  %v2008 = vpop.permute.xlu0 %2007
  %2010 = vset.pattern.permute.xlu0 1
  %2011 = vperm.xlu0 %2010, %v1309
  %v2012 = vpop.permute.xlu0 %2011
  %2014 = vset.pattern.permute.xlu0 1
  %2015 = vperm.xlu0 %2014, %v1310
  %v2016 = vpop.permute.xlu0 %2015
  %2018 = vset.pattern.permute.xlu0 1
  %2019 = vperm.xlu0 %2018, %v1311
  %v2020 = vpop.permute.xlu0 %2019
  %2022 = vset.pattern.permute.xlu0 1
  %2023 = vperm.xlu0 %2022, %v1312
  %v2024 = vpop.permute.xlu0 %2023
  %2026 = vset.pattern.permute.xlu0 1
  %2027 = vperm.xlu0 %2026, %v1313
  %v2028 = vpop.permute.xlu0 %2027
  %2030 = vset.pattern.permute.xlu0 1
  %2031 = vperm.xlu0 %2030, %v1314
  %v2032 = vpop.permute.xlu0 %2031
  %2034 = vset.pattern.permute.xlu0 1
  %2035 = vperm.xlu0 %2034, %v1315
  %v2036 = vpop.permute.xlu0 %2035
  %2038 = vset.pattern.permute.xlu0 1
  %2039 = vperm.xlu0 %2038, %v1316
  %v2040 = vpop.permute.xlu0 %2039
  %2042 = vset.pattern.permute.xlu0 1
  %2043 = vperm.xlu0 %2042, %v1317
  %v2044 = vpop.permute.xlu0 %2043
  %2046 = vset.pattern.permute.xlu0 1
  %2047 = vperm.xlu0 %2046, %v1318
  %v2048 = vpop.permute.xlu0 %2047
  %2050 = vset.pattern.permute.xlu0 1
  %2051 = vperm.xlu0 %2050, %v1319
  %v2052 = vpop.permute.xlu0 %2051
  %2054 = vset.pattern.permute.xlu0 1
  %2055 = vperm.xlu0 %2054, %v1320
  %v2056 = vpop.permute.xlu0 %2055
  %2058 = vset.pattern.permute.xlu0 1
  %2059 = vperm.xlu0 %2058, %v1321
  %v2060 = vpop.permute.xlu0 %2059
  %2062 = vset.pattern.permute.xlu0 1
  %2063 = vperm.xlu0 %2062, %v1322
  %v2064 = vpop.permute.xlu0 %2063
  %2066 = vset.pattern.permute.xlu0 1
  %2067 = vperm.xlu0 %2066, %v1323
  %v2068 = vpop.permute.xlu0 %2067
  %2070 = vset.pattern.permute.xlu0 1
  %2071 = vperm.xlu0 %2070, %v1324
  %v2072 = vpop.permute.xlu0 %2071
  %2074 = vset.pattern.permute.xlu0 1
  %2075 = vperm.xlu0 %2074, %v1325
  %v2076 = vpop.permute.xlu0 %2075
  %2078 = vset.pattern.permute.xlu0 1
  %2079 = vperm.xlu0 %2078, %v1326
  %v2080 = vpop.permute.xlu0 %2079
  %2082 = vset.pattern.permute.xlu0 1
  %2083 = vperm.xlu0 %2082, %v1327
  %v2084 = vpop.permute.xlu0 %2083
  %2086 = vset.pattern.permute.xlu0 1
  %2087 = vperm.xlu0 %2086, %v1328
  %v2088 = vpop.permute.xlu0 %2087
  %2090 = vset.pattern.permute.xlu0 1
  %2091 = vperm.xlu0 %2090, %v1329
  %v2092 = vpop.permute.xlu0 %2091
  %2094 = vset.pattern.permute.xlu0 1
  %2095 = vperm.xlu0 %2094, %v1330
  %v2096 = vpop.permute.xlu0 %2095
  %2098 = vset.pattern.permute.xlu0 1
  %2099 = vperm.xlu0 %2098, %v1331
  %v2100 = vpop.permute.xlu0 %2099
  %2102 = vset.pattern.permute.xlu0 1
  %2103 = vperm.xlu0 %2102, %v1332
  %v2104 = vpop.permute.xlu0 %2103
  %v2106 = vmul.f32 %v1786, %v1852
  %v2107 = vmul.f32 %v1787, %v1856
  %v2108 = vmul.f32 %v1788, %v1860
  %v2109 = vmul.f32 %v1789, %v1864
  %v2110 = vmul.f32 %v1790, %v1868
  %v2111 = vmul.f32 %v1791, %v1872
  %v2112 = vmul.f32 %v1792, %v1876
  %v2113 = vmul.f32 %v1793, %v1880
  %v2114 = vmul.f32 %v1794, %v1884
  %v2115 = vmul.f32 %v1795, %v1888
  %v2116 = vmul.f32 %v1796, %v1892
  %v2117 = vmul.f32 %v1797, %v1896
  %v2118 = vmul.f32 %v1798, %v1900
  %v2119 = vmul.f32 %v1799, %v1904
  %v2120 = vmul.f32 %v1800, %v1908
  %v2121 = vmul.f32 %v1801, %v1912
  %v2122 = vmul.f32 %v1802, %v1916
  %v2123 = vmul.f32 %v1803, %v1920
  %v2124 = vmul.f32 %v1804, %v1924
  %v2125 = vmul.f32 %v1805, %v1928
  %v2126 = vmul.f32 %v1806, %v1932
  %v2127 = vmul.f32 %v1807, %v1936
  %v2128 = vmul.f32 %v1808, %v1940
  %v2129 = vmul.f32 %v1809, %v1944
  %v2130 = vmul.f32 %v1810, %v1948
  %v2131 = vmul.f32 %v1811, %v1952
  %v2132 = vmul.f32 %v1812, %v1956
  %v2133 = vmul.f32 %v1813, %v1960
  %v2134 = vmul.f32 %v1814, %v1964
  %v2135 = vmul.f32 %v1815, %v1968
  %v2136 = vmul.f32 %v1816, %v1972
  %v2137 = vmul.f32 %v1817, %v1976
  %v2138 = vmul.f32 %v1818, %v1980
  %v2139 = vmul.f32 %v1819, %v1984
  %v2140 = vmul.f32 %v1820, %v1988
  %v2141 = vmul.f32 %v1821, %v1992
  %v2142 = vmul.f32 %v1822, %v1996
  %v2143 = vmul.f32 %v1823, %v2000
  %v2144 = vmul.f32 %v1824, %v2004
  %v2145 = vmul.f32 %v1825, %v2008
  %v2146 = vmul.f32 %v1826, %v2012
  %v2147 = vmul.f32 %v1827, %v2016
  %v2148 = vmul.f32 %v1828, %v2020
  %v2149 = vmul.f32 %v1829, %v2024
  %v2150 = vmul.f32 %v1830, %v2028
  %v2151 = vmul.f32 %v1831, %v2032
  %v2152 = vmul.f32 %v1832, %v2036
  %v2153 = vmul.f32 %v1833, %v2040
  %v2154 = vmul.f32 %v1834, %v2044
  %v2155 = vmul.f32 %v1835, %v2048
  %v2156 = vmul.f32 %v1836, %v2052
  %v2157 = vmul.f32 %v1837, %v2056
  %v2158 = vmul.f32 %v1838, %v2060
  %v2159 = vmul.f32 %v1839, %v2064
  %v2160 = vmul.f32 %v1840, %v2068
  %v2161 = vmul.f32 %v1841, %v2072
  %v2162 = vmul.f32 %v1842, %v2076
  %v2163 = vmul.f32 %v1843, %v2080
  %v2164 = vmul.f32 %v1844, %v2084
  %v2165 = vmul.f32 %v1845, %v2088
  %v2166 = vmul.f32 %v1846, %v2092
  %v2167 = vmul.f32 %v1847, %v2096
  %v2168 = vmul.f32 %v1848, %v2100
  %v2169 = vmul.f32 %v1849, %v2104
  %v2170 = vadd.f32 %v1717, %v2106
  %v2171 = vadd.f32 %v1718, %v2107
  %v2172 = vadd.f32 %v1719, %v2108
  %v2173 = vadd.f32 %v1720, %v2109
  %v2174 = vadd.f32 %v1721, %v2110
  %v2175 = vadd.f32 %v1722, %v2111
  %v2176 = vadd.f32 %v1723, %v2112
  %v2177 = vadd.f32 %v1724, %v2113
  %v2178 = vadd.f32 %v1725, %v2114
  %v2179 = vadd.f32 %v1726, %v2115
  %v2180 = vadd.f32 %v1727, %v2116
  %v2181 = vadd.f32 %v1728, %v2117
  %v2182 = vadd.f32 %v1729, %v2118
  %v2183 = vadd.f32 %v1730, %v2119
  %v2184 = vadd.f32 %v1731, %v2120
  %v2185 = vadd.f32 %v1732, %v2121
  %v2186 = vadd.f32 %v1733, %v2122
  %v2187 = vadd.f32 %v1734, %v2123
  %v2188 = vadd.f32 %v1735, %v2124
  %v2189 = vadd.f32 %v1736, %v2125
  %v2190 = vadd.f32 %v1737, %v2126
  %v2191 = vadd.f32 %v1738, %v2127
  %v2192 = vadd.f32 %v1739, %v2128
  %v2193 = vadd.f32 %v1740, %v2129
  %v2194 = vadd.f32 %v1741, %v2130
  %v2195 = vadd.f32 %v1742, %v2131
  %v2196 = vadd.f32 %v1743, %v2132
  %v2197 = vadd.f32 %v1744, %v2133
  %v2198 = vadd.f32 %v1745, %v2134
  %v2199 = vadd.f32 %v1746, %v2135
  %v2200 = vadd.f32 %v1747, %v2136
  %v2201 = vadd.f32 %v1748, %v2137
  %v2202 = vadd.f32 %v1749, %v2138
  %v2203 = vadd.f32 %v1750, %v2139
  %v2204 = vadd.f32 %v1751, %v2140
  %v2205 = vadd.f32 %v1752, %v2141
  %v2206 = vadd.f32 %v1753, %v2142
  %v2207 = vadd.f32 %v1754, %v2143
  %v2208 = vadd.f32 %v1755, %v2144
  %v2209 = vadd.f32 %v1756, %v2145
  %v2210 = vadd.f32 %v1757, %v2146
  %v2211 = vadd.f32 %v1758, %v2147
  %v2212 = vadd.f32 %v1759, %v2148
  %v2213 = vadd.f32 %v1760, %v2149
  %v2214 = vadd.f32 %v1761, %v2150
  %v2215 = vadd.f32 %v1762, %v2151
  %v2216 = vadd.f32 %v1763, %v2152
  %v2217 = vadd.f32 %v1764, %v2153
  %v2218 = vadd.f32 %v1765, %v2154
  %v2219 = vadd.f32 %v1766, %v2155
  %v2220 = vadd.f32 %v1767, %v2156
  %v2221 = vadd.f32 %v1768, %v2157
  %v2222 = vadd.f32 %v1769, %v2158
  %v2223 = vadd.f32 %v1770, %v2159
  %v2224 = vadd.f32 %v1771, %v2160
  %v2225 = vadd.f32 %v1772, %v2161
  %v2226 = vadd.f32 %v1773, %v2162
  %v2227 = vadd.f32 %v1774, %v2163
  %v2228 = vadd.f32 %v1775, %v2164
  %v2229 = vadd.f32 %v1776, %v2165
  %v2230 = vadd.f32 %v1777, %v2166
  %v2231 = vadd.f32 %v1778, %v2167
  %v2232 = vadd.f32 %v1779, %v2168
  %v2233 = vadd.f32 %v1780, %v2169
  %v2234 = vrot.slane %v936, 1
  %v2235 = vrot.slane %v937, 1
  %v2236 = vrot.slane %v938, 1
  %v2237 = vrot.slane %v939, 1
  %v2238 = vrot.slane %v940, 1
  %v2239 = vrot.slane %v941, 1
  %v2240 = vrot.slane %v942, 1
  %v2241 = vrot.slane %v943, 1
  %v2242 = vrot.slane %v944, 1
  %v2243 = vrot.slane %v945, 1
  %v2244 = vrot.slane %v946, 1
  %v2245 = vrot.slane %v947, 1
  %v2246 = vrot.slane %v948, 1
  %v2247 = vrot.slane %v949, 1
  %v2248 = vrot.slane %v950, 1
  %v2249 = vrot.slane %v951, 1
  %v2250 = vrot.slane %v952, 1
  %v2251 = vrot.slane %v953, 1
  %v2252 = vrot.slane %v954, 1
  %v2253 = vrot.slane %v955, 1
  %v2254 = vrot.slane %v956, 1
  %v2255 = vrot.slane %v957, 1
  %v2256 = vrot.slane %v958, 1
  %v2257 = vrot.slane %v959, 1
  %v2258 = vrot.slane %v960, 1
  %v2259 = vrot.slane %v961, 1
  %v2260 = vrot.slane %v962, 1
  %v2261 = vrot.slane %v963, 1
  %v2262 = vrot.slane %v964, 1
  %v2263 = vrot.slane %v965, 1
  %v2264 = vrot.slane %v966, 1
  %v2265 = vrot.slane %v967, 1
  %v2266 = vrot.slane %v968, 1
  %v2267 = vrot.slane %v969, 1
  %v2268 = vrot.slane %v970, 1
  %v2269 = vrot.slane %v971, 1
  %v2270 = vrot.slane %v972, 1
  %v2271 = vrot.slane %v973, 1
  %v2272 = vrot.slane %v974, 1
  %v2273 = vrot.slane %v975, 1
  %v2274 = vrot.slane %v976, 1
  %v2275 = vrot.slane %v977, 1
  %v2276 = vrot.slane %v978, 1
  %v2277 = vrot.slane %v979, 1
  %v2278 = vrot.slane %v980, 1
  %v2279 = vrot.slane %v981, 1
  %v2280 = vrot.slane %v982, 1
  %v2281 = vrot.slane %v983, 1
  %v2282 = vrot.slane %v984, 1
  %v2283 = vrot.slane %v985, 1
  %v2284 = vrot.slane %v986, 1
  %v2285 = vrot.slane %v987, 1
  %v2286 = vrot.slane %v988, 1
  %v2287 = vrot.slane %v989, 1
  %v2288 = vrot.slane %v990, 1
  %v2289 = vrot.slane %v991, 1
  %v2290 = vrot.slane %v992, 1
  %v2291 = vrot.slane %v993, 1
  %v2292 = vrot.slane %v994, 1
  %v2293 = vrot.slane %v995, 1
  %v2294 = vrot.slane %v996, 1
  %v2295 = vrot.slane %v997, 1
  %v2296 = vrot.slane %v998, 1
  %v2297 = vrot.slane %v999, 1
  %vm2298 = vcmp.lt.s32.totalorder %v1134, 7
  %v2299 = vsel %vm2298, %v2296, %v2297
  %v2300 = vsel %vm2298, %v2295, %v2296
  %v2301 = vsel %vm2298, %v2294, %v2295
  %v2302 = vsel %vm2298, %v2293, %v2294
  %v2303 = vsel %vm2298, %v2292, %v2293
  %v2304 = vsel %vm2298, %v2291, %v2292
  %v2305 = vsel %vm2298, %v2290, %v2291
  %v2306 = vsel %vm2298, %v2289, %v2290
  %v2307 = vsel %vm2298, %v2288, %v2289
  %v2308 = vsel %vm2298, %v2287, %v2288
  %v2309 = vsel %vm2298, %v2286, %v2287
  %v2310 = vsel %vm2298, %v2285, %v2286
  %v2311 = vsel %vm2298, %v2284, %v2285
  %v2312 = vsel %vm2298, %v2283, %v2284
  %v2313 = vsel %vm2298, %v2282, %v2283
  %v2314 = vsel %vm2298, %v2281, %v2282
  %v2315 = vsel %vm2298, %v2280, %v2281
  %v2316 = vsel %vm2298, %v2279, %v2280
  %v2317 = vsel %vm2298, %v2278, %v2279
  %v2318 = vsel %vm2298, %v2277, %v2278
  %v2319 = vsel %vm2298, %v2276, %v2277
  %v2320 = vsel %vm2298, %v2275, %v2276
  %v2321 = vsel %vm2298, %v2274, %v2275
  %v2322 = vsel %vm2298, %v2273, %v2274
  %v2323 = vsel %vm2298, %v2272, %v2273
  %v2324 = vsel %vm2298, %v2271, %v2272
  %v2325 = vsel %vm2298, %v2270, %v2271
  %v2326 = vsel %vm2298, %v2269, %v2270
  %v2327 = vsel %vm2298, %v2268, %v2269
  %v2328 = vsel %vm2298, %v2267, %v2268
  %v2329 = vsel %vm2298, %v2266, %v2267
  %v2330 = vsel %vm2298, %v2265, %v2266
  %v2331 = vsel %vm2298, %v2264, %v2265
  %v2332 = vsel %vm2298, %v2263, %v2264
  %v2333 = vsel %vm2298, %v2262, %v2263
  %v2334 = vsel %vm2298, %v2261, %v2262
  %v2335 = vsel %vm2298, %v2260, %v2261
  %v2336 = vsel %vm2298, %v2259, %v2260
  %v2337 = vsel %vm2298, %v2258, %v2259
  %v2338 = vsel %vm2298, %v2257, %v2258
  %v2339 = vsel %vm2298, %v2256, %v2257
  %v2340 = vsel %vm2298, %v2255, %v2256
  %v2341 = vsel %vm2298, %v2254, %v2255
  %v2342 = vsel %vm2298, %v2253, %v2254
  %v2343 = vsel %vm2298, %v2252, %v2253
  %v2344 = vsel %vm2298, %v2251, %v2252
  %v2345 = vsel %vm2298, %v2250, %v2251
  %v2346 = vsel %vm2298, %v2249, %v2250
  %v2347 = vsel %vm2298, %v2248, %v2249
  %v2348 = vsel %vm2298, %v2247, %v2248
  %v2349 = vsel %vm2298, %v2246, %v2247
  %v2350 = vsel %vm2298, %v2245, %v2246
  %v2351 = vsel %vm2298, %v2244, %v2245
  %v2352 = vsel %vm2298, %v2243, %v2244
  %v2353 = vsel %vm2298, %v2242, %v2243
  %v2354 = vsel %vm2298, %v2241, %v2242
  %v2355 = vsel %vm2298, %v2240, %v2241
  %v2356 = vsel %vm2298, %v2239, %v2240
  %v2357 = vsel %vm2298, %v2238, %v2239
  %v2358 = vsel %vm2298, %v2237, %v2238
  %v2359 = vsel %vm2298, %v2236, %v2237
  %v2360 = vsel %vm2298, %v2235, %v2236
  %v2361 = vsel %vm2298, %v2234, %v2235
  %v2362 = vsel %vm2298, %v2297, %v2234
  %v2363 = vld [vmem:[%s3 + $0x5] sm:$0x1]
  %v2364 = vlaneseq
  %v2365 = vshrl.u32 %v2364, 7
  %v2366 = vsub.s32 0, %v2365
  %v2367 = vrot.slane %v2363, %v2366
  %v2368 = vmul.f32 %v2299, %v2367
  %v2369 = vmul.f32 %v2362, %v2367
  %v2370 = vmul.f32 %v2361, %v2367
  %v2371 = vmul.f32 %v2360, %v2367
  %v2372 = vmul.f32 %v2359, %v2367
  %v2373 = vmul.f32 %v2358, %v2367
  %v2374 = vmul.f32 %v2357, %v2367
  %v2375 = vmul.f32 %v2356, %v2367
  %v2376 = vmul.f32 %v2355, %v2367
  %v2377 = vmul.f32 %v2354, %v2367
  %v2378 = vmul.f32 %v2353, %v2367
  %v2379 = vmul.f32 %v2352, %v2367
  %v2380 = vmul.f32 %v2351, %v2367
  %v2381 = vmul.f32 %v2350, %v2367
  %v2382 = vmul.f32 %v2349, %v2367
  %v2383 = vmul.f32 %v2348, %v2367
  %v2384 = vmul.f32 %v2347, %v2367
  %v2385 = vmul.f32 %v2346, %v2367
  %v2386 = vmul.f32 %v2345, %v2367
  %v2387 = vmul.f32 %v2344, %v2367
  %v2388 = vmul.f32 %v2343, %v2367
  %v2389 = vmul.f32 %v2342, %v2367
  %v2390 = vmul.f32 %v2341, %v2367
  %v2391 = vmul.f32 %v2340, %v2367
  %v2392 = vmul.f32 %v2339, %v2367
  %v2393 = vmul.f32 %v2338, %v2367
  %v2394 = vmul.f32 %v2337, %v2367
  %v2395 = vmul.f32 %v2336, %v2367
  %v2396 = vmul.f32 %v2335, %v2367
  %v2397 = vmul.f32 %v2334, %v2367
  %v2398 = vmul.f32 %v2333, %v2367
  %v2399 = vmul.f32 %v2332, %v2367
  %v2400 = vmul.f32 %v2331, %v2367
  %v2401 = vmul.f32 %v2330, %v2367
  %v2402 = vmul.f32 %v2329, %v2367
  %v2403 = vmul.f32 %v2328, %v2367
  %v2404 = vmul.f32 %v2327, %v2367
  %v2405 = vmul.f32 %v2326, %v2367
  %v2406 = vmul.f32 %v2325, %v2367
  %v2407 = vmul.f32 %v2324, %v2367
  %v2408 = vmul.f32 %v2323, %v2367
  %v2409 = vmul.f32 %v2322, %v2367
  %v2410 = vmul.f32 %v2321, %v2367
  %v2411 = vmul.f32 %v2320, %v2367
  %v2412 = vmul.f32 %v2319, %v2367
  %v2413 = vmul.f32 %v2318, %v2367
  %v2414 = vmul.f32 %v2317, %v2367
  %v2415 = vmul.f32 %v2316, %v2367
  %v2416 = vmul.f32 %v2315, %v2367
  %v2417 = vmul.f32 %v2314, %v2367
  %v2418 = vmul.f32 %v2313, %v2367
  %v2419 = vmul.f32 %v2312, %v2367
  %v2420 = vmul.f32 %v2311, %v2367
  %v2421 = vmul.f32 %v2310, %v2367
  %v2422 = vmul.f32 %v2309, %v2367
  %v2423 = vmul.f32 %v2308, %v2367
  %v2424 = vmul.f32 %v2307, %v2367
  %v2425 = vmul.f32 %v2306, %v2367
  %v2426 = vmul.f32 %v2305, %v2367
  %v2427 = vmul.f32 %v2304, %v2367
  %v2428 = vmul.f32 %v2303, %v2367
  %v2429 = vmul.f32 %v2302, %v2367
  %v2430 = vmul.f32 %v2301, %v2367
  %v2431 = vmul.f32 %v2300, %v2367
  %2432 = vset.pattern.permute.xlu0 2
  %2433 = vperm.xlu0 %2432, %v1269
  %v2434 = vpop.permute.xlu0 %2433
  %2436 = vset.pattern.permute.xlu0 2
  %2437 = vperm.xlu0 %2436, %v1270
  %v2438 = vpop.permute.xlu0 %2437
  %2440 = vset.pattern.permute.xlu0 2
  %2441 = vperm.xlu0 %2440, %v1271
  %v2442 = vpop.permute.xlu0 %2441
  %2444 = vset.pattern.permute.xlu0 2
  %2445 = vperm.xlu0 %2444, %v1272
  %v2446 = vpop.permute.xlu0 %2445
  %2448 = vset.pattern.permute.xlu0 2
  %2449 = vperm.xlu0 %2448, %v1273
  %v2450 = vpop.permute.xlu0 %2449
  %2452 = vset.pattern.permute.xlu0 2
  %2453 = vperm.xlu0 %2452, %v1274
  %v2454 = vpop.permute.xlu0 %2453
  %2456 = vset.pattern.permute.xlu0 2
  %2457 = vperm.xlu0 %2456, %v1275
  %v2458 = vpop.permute.xlu0 %2457
  %2460 = vset.pattern.permute.xlu0 2
  %2461 = vperm.xlu0 %2460, %v1276
  %v2462 = vpop.permute.xlu0 %2461
  %2464 = vset.pattern.permute.xlu0 2
  %2465 = vperm.xlu0 %2464, %v1277
  %v2466 = vpop.permute.xlu0 %2465
  %2468 = vset.pattern.permute.xlu0 2
  %2469 = vperm.xlu0 %2468, %v1278
  %v2470 = vpop.permute.xlu0 %2469
  %2472 = vset.pattern.permute.xlu0 2
  %2473 = vperm.xlu0 %2472, %v1279
  %v2474 = vpop.permute.xlu0 %2473
  %2476 = vset.pattern.permute.xlu0 2
  %2477 = vperm.xlu0 %2476, %v1280
  %v2478 = vpop.permute.xlu0 %2477
  %2480 = vset.pattern.permute.xlu0 2
  %2481 = vperm.xlu0 %2480, %v1281
  %v2482 = vpop.permute.xlu0 %2481
  %2484 = vset.pattern.permute.xlu0 2
  %2485 = vperm.xlu0 %2484, %v1282
  %v2486 = vpop.permute.xlu0 %2485
  %2488 = vset.pattern.permute.xlu0 2
  %2489 = vperm.xlu0 %2488, %v1283
  %v2490 = vpop.permute.xlu0 %2489
  %2492 = vset.pattern.permute.xlu0 2
  %2493 = vperm.xlu0 %2492, %v1284
  %v2494 = vpop.permute.xlu0 %2493
  %2496 = vset.pattern.permute.xlu0 2
  %2497 = vperm.xlu0 %2496, %v1285
  %v2498 = vpop.permute.xlu0 %2497
  %2500 = vset.pattern.permute.xlu0 2
  %2501 = vperm.xlu0 %2500, %v1286
  %v2502 = vpop.permute.xlu0 %2501
  %2504 = vset.pattern.permute.xlu0 2
  %2505 = vperm.xlu0 %2504, %v1287
  %v2506 = vpop.permute.xlu0 %2505
  %2508 = vset.pattern.permute.xlu0 2
  %2509 = vperm.xlu0 %2508, %v1288
  %v2510 = vpop.permute.xlu0 %2509
  %2512 = vset.pattern.permute.xlu0 2
  %2513 = vperm.xlu0 %2512, %v1289
  %v2514 = vpop.permute.xlu0 %2513
  %2516 = vset.pattern.permute.xlu0 2
  %2517 = vperm.xlu0 %2516, %v1290
  %v2518 = vpop.permute.xlu0 %2517
  %2520 = vset.pattern.permute.xlu0 2
  %2521 = vperm.xlu0 %2520, %v1291
  %v2522 = vpop.permute.xlu0 %2521
  %2524 = vset.pattern.permute.xlu0 2
  %2525 = vperm.xlu0 %2524, %v1292
  %v2526 = vpop.permute.xlu0 %2525
  %2528 = vset.pattern.permute.xlu0 2
  %2529 = vperm.xlu0 %2528, %v1293
  %v2530 = vpop.permute.xlu0 %2529
  %2532 = vset.pattern.permute.xlu0 2
  %2533 = vperm.xlu0 %2532, %v1294
  %v2534 = vpop.permute.xlu0 %2533
  %2536 = vset.pattern.permute.xlu0 2
  %2537 = vperm.xlu0 %2536, %v1295
  %v2538 = vpop.permute.xlu0 %2537
  %2540 = vset.pattern.permute.xlu0 2
  %2541 = vperm.xlu0 %2540, %v1296
  %v2542 = vpop.permute.xlu0 %2541
  %2544 = vset.pattern.permute.xlu0 2
  %2545 = vperm.xlu0 %2544, %v1297
  %v2546 = vpop.permute.xlu0 %2545
  %2548 = vset.pattern.permute.xlu0 2
  %2549 = vperm.xlu0 %2548, %v1298
  %v2550 = vpop.permute.xlu0 %2549
  %2552 = vset.pattern.permute.xlu0 2
  %2553 = vperm.xlu0 %2552, %v1299
  %v2554 = vpop.permute.xlu0 %2553
  %2556 = vset.pattern.permute.xlu0 2
  %2557 = vperm.xlu0 %2556, %v1300
  %v2558 = vpop.permute.xlu0 %2557
  %2560 = vset.pattern.permute.xlu0 2
  %2561 = vperm.xlu0 %2560, %v1301
  %v2562 = vpop.permute.xlu0 %2561
  %2564 = vset.pattern.permute.xlu0 2
  %2565 = vperm.xlu0 %2564, %v1302
  %v2566 = vpop.permute.xlu0 %2565
  %2568 = vset.pattern.permute.xlu0 2
  %2569 = vperm.xlu0 %2568, %v1303
  %v2570 = vpop.permute.xlu0 %2569
  %2572 = vset.pattern.permute.xlu0 2
  %2573 = vperm.xlu0 %2572, %v1304
  %v2574 = vpop.permute.xlu0 %2573
  %2576 = vset.pattern.permute.xlu0 2
  %2577 = vperm.xlu0 %2576, %v1305
  %v2578 = vpop.permute.xlu0 %2577
  %2580 = vset.pattern.permute.xlu0 2
  %2581 = vperm.xlu0 %2580, %v1306
  %v2582 = vpop.permute.xlu0 %2581
  %2584 = vset.pattern.permute.xlu0 2
  %2585 = vperm.xlu0 %2584, %v1307
  %v2586 = vpop.permute.xlu0 %2585
  %2588 = vset.pattern.permute.xlu0 2
  %2589 = vperm.xlu0 %2588, %v1308
  %v2590 = vpop.permute.xlu0 %2589
  %2592 = vset.pattern.permute.xlu0 2
  %2593 = vperm.xlu0 %2592, %v1309
  %v2594 = vpop.permute.xlu0 %2593
  %2596 = vset.pattern.permute.xlu0 2
  %2597 = vperm.xlu0 %2596, %v1310
  %v2598 = vpop.permute.xlu0 %2597
  %2600 = vset.pattern.permute.xlu0 2
  %2601 = vperm.xlu0 %2600, %v1311
  %v2602 = vpop.permute.xlu0 %2601
  %2604 = vset.pattern.permute.xlu0 2
  %2605 = vperm.xlu0 %2604, %v1312
  %v2606 = vpop.permute.xlu0 %2605
  %2608 = vset.pattern.permute.xlu0 2
  %2609 = vperm.xlu0 %2608, %v1313
  %v2610 = vpop.permute.xlu0 %2609
  %2612 = vset.pattern.permute.xlu0 2
  %2613 = vperm.xlu0 %2612, %v1314
  %v2614 = vpop.permute.xlu0 %2613
  %2616 = vset.pattern.permute.xlu0 2
  %2617 = vperm.xlu0 %2616, %v1315
  %v2618 = vpop.permute.xlu0 %2617
  %2620 = vset.pattern.permute.xlu0 2
  %2621 = vperm.xlu0 %2620, %v1316
  %v2622 = vpop.permute.xlu0 %2621
  %2624 = vset.pattern.permute.xlu0 2
  %2625 = vperm.xlu0 %2624, %v1317
  %v2626 = vpop.permute.xlu0 %2625
  %2628 = vset.pattern.permute.xlu0 2
  %2629 = vperm.xlu0 %2628, %v1318
  %v2630 = vpop.permute.xlu0 %2629
  %2632 = vset.pattern.permute.xlu0 2
  %2633 = vperm.xlu0 %2632, %v1319
  %v2634 = vpop.permute.xlu0 %2633
  %2636 = vset.pattern.permute.xlu0 2
  %2637 = vperm.xlu0 %2636, %v1320
  %v2638 = vpop.permute.xlu0 %2637
  %2640 = vset.pattern.permute.xlu0 2
  %2641 = vperm.xlu0 %2640, %v1321
  %v2642 = vpop.permute.xlu0 %2641
  %2644 = vset.pattern.permute.xlu0 2
  %2645 = vperm.xlu0 %2644, %v1322
  %v2646 = vpop.permute.xlu0 %2645
  %2648 = vset.pattern.permute.xlu0 2
  %2649 = vperm.xlu0 %2648, %v1323
  %v2650 = vpop.permute.xlu0 %2649
  %2652 = vset.pattern.permute.xlu0 2
  %2653 = vperm.xlu0 %2652, %v1324
  %v2654 = vpop.permute.xlu0 %2653
  %2656 = vset.pattern.permute.xlu0 2
  %2657 = vperm.xlu0 %2656, %v1325
  %v2658 = vpop.permute.xlu0 %2657
  %2660 = vset.pattern.permute.xlu0 2
  %2661 = vperm.xlu0 %2660, %v1326
  %v2662 = vpop.permute.xlu0 %2661
  %2664 = vset.pattern.permute.xlu0 2
  %2665 = vperm.xlu0 %2664, %v1327
  %v2666 = vpop.permute.xlu0 %2665
  %2668 = vset.pattern.permute.xlu0 2
  %2669 = vperm.xlu0 %2668, %v1328
  %v2670 = vpop.permute.xlu0 %2669
  %2672 = vset.pattern.permute.xlu0 2
  %2673 = vperm.xlu0 %2672, %v1329
  %v2674 = vpop.permute.xlu0 %2673
  %2676 = vset.pattern.permute.xlu0 2
  %2677 = vperm.xlu0 %2676, %v1330
  %v2678 = vpop.permute.xlu0 %2677
  %2680 = vset.pattern.permute.xlu0 2
  %2681 = vperm.xlu0 %2680, %v1331
  %v2682 = vpop.permute.xlu0 %2681
  %2684 = vset.pattern.permute.xlu0 2
  %2685 = vperm.xlu0 %2684, %v1332
  %v2686 = vpop.permute.xlu0 %2685
  %v2688 = vmul.f32 %v2368, %v2434
  %v2689 = vmul.f32 %v2369, %v2438
  %v2690 = vmul.f32 %v2370, %v2442
  %v2691 = vmul.f32 %v2371, %v2446
  %v2692 = vmul.f32 %v2372, %v2450
  %v2693 = vmul.f32 %v2373, %v2454
  %v2694 = vmul.f32 %v2374, %v2458
  %v2695 = vmul.f32 %v2375, %v2462
  %v2696 = vmul.f32 %v2376, %v2466
  %v2697 = vmul.f32 %v2377, %v2470
  %v2698 = vmul.f32 %v2378, %v2474
  %v2699 = vmul.f32 %v2379, %v2478
  %v2700 = vmul.f32 %v2380, %v2482
  %v2701 = vmul.f32 %v2381, %v2486
  %v2702 = vmul.f32 %v2382, %v2490
  %v2703 = vmul.f32 %v2383, %v2494
  %v2704 = vmul.f32 %v2384, %v2498
  %v2705 = vmul.f32 %v2385, %v2502
  %v2706 = vmul.f32 %v2386, %v2506
  %v2707 = vmul.f32 %v2387, %v2510
  %v2708 = vmul.f32 %v2388, %v2514
  %v2709 = vmul.f32 %v2389, %v2518
  %v2710 = vmul.f32 %v2390, %v2522
  %v2711 = vmul.f32 %v2391, %v2526
  %v2712 = vmul.f32 %v2392, %v2530
  %v2713 = vmul.f32 %v2393, %v2534
  %v2714 = vmul.f32 %v2394, %v2538
  %v2715 = vmul.f32 %v2395, %v2542
  %v2716 = vmul.f32 %v2396, %v2546
  %v2717 = vmul.f32 %v2397, %v2550
  %v2718 = vmul.f32 %v2398, %v2554
  %v2719 = vmul.f32 %v2399, %v2558
  %v2720 = vmul.f32 %v2400, %v2562
  %v2721 = vmul.f32 %v2401, %v2566
  %v2722 = vmul.f32 %v2402, %v2570
  %v2723 = vmul.f32 %v2403, %v2574
  %v2724 = vmul.f32 %v2404, %v2578
  %v2725 = vmul.f32 %v2405, %v2582
  %v2726 = vmul.f32 %v2406, %v2586
  %v2727 = vmul.f32 %v2407, %v2590
  %v2728 = vmul.f32 %v2408, %v2594
  %v2729 = vmul.f32 %v2409, %v2598
  %v2730 = vmul.f32 %v2410, %v2602
  %v2731 = vmul.f32 %v2411, %v2606
  %v2732 = vmul.f32 %v2412, %v2610
  %v2733 = vmul.f32 %v2413, %v2614
  %v2734 = vmul.f32 %v2414, %v2618
  %v2735 = vmul.f32 %v2415, %v2622
  %v2736 = vmul.f32 %v2416, %v2626
  %v2737 = vmul.f32 %v2417, %v2630
  %v2738 = vmul.f32 %v2418, %v2634
  %v2739 = vmul.f32 %v2419, %v2638
  %v2740 = vmul.f32 %v2420, %v2642
  %v2741 = vmul.f32 %v2421, %v2646
  %v2742 = vmul.f32 %v2422, %v2650
  %v2743 = vmul.f32 %v2423, %v2654
  %v2744 = vmul.f32 %v2424, %v2658
  %v2745 = vmul.f32 %v2425, %v2662
  %v2746 = vmul.f32 %v2426, %v2666
  %v2747 = vmul.f32 %v2427, %v2670
  %v2748 = vmul.f32 %v2428, %v2674
  %v2749 = vmul.f32 %v2429, %v2678
  %v2750 = vmul.f32 %v2430, %v2682
  %v2751 = vmul.f32 %v2431, %v2686
  %v2752 = vadd.f32 %v2170, %v2688
  %v2753 = vadd.f32 %v2171, %v2689
  %v2754 = vadd.f32 %v2172, %v2690
  %v2755 = vadd.f32 %v2173, %v2691
  %v2756 = vadd.f32 %v2174, %v2692
  %v2757 = vadd.f32 %v2175, %v2693
  %v2758 = vadd.f32 %v2176, %v2694
  %v2759 = vadd.f32 %v2177, %v2695
  %v2760 = vadd.f32 %v2178, %v2696
  %v2761 = vadd.f32 %v2179, %v2697
  %v2762 = vadd.f32 %v2180, %v2698
  %v2763 = vadd.f32 %v2181, %v2699
  %v2764 = vadd.f32 %v2182, %v2700
  %v2765 = vadd.f32 %v2183, %v2701
  %v2766 = vadd.f32 %v2184, %v2702
  %v2767 = vadd.f32 %v2185, %v2703
  %v2768 = vadd.f32 %v2186, %v2704
  %v2769 = vadd.f32 %v2187, %v2705
  %v2770 = vadd.f32 %v2188, %v2706
  %v2771 = vadd.f32 %v2189, %v2707
  %v2772 = vadd.f32 %v2190, %v2708
  %v2773 = vadd.f32 %v2191, %v2709
  %v2774 = vadd.f32 %v2192, %v2710
  %v2775 = vadd.f32 %v2193, %v2711
  %v2776 = vadd.f32 %v2194, %v2712
  %v2777 = vadd.f32 %v2195, %v2713
  %v2778 = vadd.f32 %v2196, %v2714
  %v2779 = vadd.f32 %v2197, %v2715
  %v2780 = vadd.f32 %v2198, %v2716
  %v2781 = vadd.f32 %v2199, %v2717
  %v2782 = vadd.f32 %v2200, %v2718
  %v2783 = vadd.f32 %v2201, %v2719
  %v2784 = vadd.f32 %v2202, %v2720
  %v2785 = vadd.f32 %v2203, %v2721
  %v2786 = vadd.f32 %v2204, %v2722
  %v2787 = vadd.f32 %v2205, %v2723
  %v2788 = vadd.f32 %v2206, %v2724
  %v2789 = vadd.f32 %v2207, %v2725
  %v2790 = vadd.f32 %v2208, %v2726
  %v2791 = vadd.f32 %v2209, %v2727
  %v2792 = vadd.f32 %v2210, %v2728
  %v2793 = vadd.f32 %v2211, %v2729
  %v2794 = vadd.f32 %v2212, %v2730
  %v2795 = vadd.f32 %v2213, %v2731
  %v2796 = vadd.f32 %v2214, %v2732
  %v2797 = vadd.f32 %v2215, %v2733
  %v2798 = vadd.f32 %v2216, %v2734
  %v2799 = vadd.f32 %v2217, %v2735
  %v2800 = vadd.f32 %v2218, %v2736
  %v2801 = vadd.f32 %v2219, %v2737
  %v2802 = vadd.f32 %v2220, %v2738
  %v2803 = vadd.f32 %v2221, %v2739
  %v2804 = vadd.f32 %v2222, %v2740
  %v2805 = vadd.f32 %v2223, %v2741
  %v2806 = vadd.f32 %v2224, %v2742
  %v2807 = vadd.f32 %v2225, %v2743
  %v2808 = vadd.f32 %v2226, %v2744
  %v2809 = vadd.f32 %v2227, %v2745
  %v2810 = vadd.f32 %v2228, %v2746
  %v2811 = vadd.f32 %v2229, %v2747
  %v2812 = vadd.f32 %v2230, %v2748
  %v2813 = vadd.f32 %v2231, %v2749
  %v2814 = vadd.f32 %v2232, %v2750
  %v2815 = vadd.f32 %v2233, %v2751
  %v2816 = vld [vmem:[%s3 + $0x6] sm:$0x1]
  %v2817 = vlaneseq
  %v2818 = vshrl.u32 %v2817, 7
  %v2819 = vsub.s32 0, %v2818
  %v2820 = vrot.slane %v2816, %v2819
  %v2821 = vmul.f32 %v1199, %v2820
  %v2822 = vmul.f32 %v1198, %v2820
  %v2823 = vmul.f32 %v1197, %v2820
  %v2824 = vmul.f32 %v1196, %v2820
  %v2825 = vmul.f32 %v1195, %v2820
  %v2826 = vmul.f32 %v1194, %v2820
  %v2827 = vmul.f32 %v1193, %v2820
  %v2828 = vmul.f32 %v1192, %v2820
  %v2829 = vmul.f32 %v1191, %v2820
  %v2830 = vmul.f32 %v1190, %v2820
  %v2831 = vmul.f32 %v1189, %v2820
  %v2832 = vmul.f32 %v1188, %v2820
  %v2833 = vmul.f32 %v1187, %v2820
  %v2834 = vmul.f32 %v1186, %v2820
  %v2835 = vmul.f32 %v1185, %v2820
  %v2836 = vmul.f32 %v1184, %v2820
  %v2837 = vmul.f32 %v1183, %v2820
  %v2838 = vmul.f32 %v1182, %v2820
  %v2839 = vmul.f32 %v1181, %v2820
  %v2840 = vmul.f32 %v1180, %v2820
  %v2841 = vmul.f32 %v1179, %v2820
  %v2842 = vmul.f32 %v1178, %v2820
  %v2843 = vmul.f32 %v1177, %v2820
  %v2844 = vmul.f32 %v1176, %v2820
  %v2845 = vmul.f32 %v1175, %v2820
  %v2846 = vmul.f32 %v1174, %v2820
  %v2847 = vmul.f32 %v1173, %v2820
  %v2848 = vmul.f32 %v1172, %v2820
  %v2849 = vmul.f32 %v1171, %v2820
  %v2850 = vmul.f32 %v1170, %v2820
  %v2851 = vmul.f32 %v1169, %v2820
  %v2852 = vmul.f32 %v1168, %v2820
  %v2853 = vmul.f32 %v1167, %v2820
  %v2854 = vmul.f32 %v1166, %v2820
  %v2855 = vmul.f32 %v1165, %v2820
  %v2856 = vmul.f32 %v1164, %v2820
  %v2857 = vmul.f32 %v1163, %v2820
  %v2858 = vmul.f32 %v1162, %v2820
  %v2859 = vmul.f32 %v1161, %v2820
  %v2860 = vmul.f32 %v1160, %v2820
  %v2861 = vmul.f32 %v1159, %v2820
  %v2862 = vmul.f32 %v1158, %v2820
  %v2863 = vmul.f32 %v1157, %v2820
  %v2864 = vmul.f32 %v1156, %v2820
  %v2865 = vmul.f32 %v1155, %v2820
  %v2866 = vmul.f32 %v1154, %v2820
  %v2867 = vmul.f32 %v1153, %v2820
  %v2868 = vmul.f32 %v1152, %v2820
  %v2869 = vmul.f32 %v1151, %v2820
  %v2870 = vmul.f32 %v1150, %v2820
  %v2871 = vmul.f32 %v1149, %v2820
  %v2872 = vmul.f32 %v1148, %v2820
  %v2873 = vmul.f32 %v1147, %v2820
  %v2874 = vmul.f32 %v1146, %v2820
  %v2875 = vmul.f32 %v1145, %v2820
  %v2876 = vmul.f32 %v1144, %v2820
  %v2877 = vmul.f32 %v1143, %v2820
  %v2878 = vmul.f32 %v1142, %v2820
  %v2879 = vmul.f32 %v1141, %v2820
  %v2880 = vmul.f32 %v1140, %v2820
  %v2881 = vmul.f32 %v1139, %v2820
  %v2882 = vmul.f32 %v1138, %v2820
  %v2883 = vmul.f32 %v1137, %v2820
  %v2884 = vmul.f32 %v1136, %v2820
  %2885 = vset.pattern.permute.xlu0 3
  %2886 = vperm.xlu0 %2885, %v1269
  %v2887 = vpop.permute.xlu0 %2886
  %2889 = vset.pattern.permute.xlu0 3
  %2890 = vperm.xlu0 %2889, %v1270
  %v2891 = vpop.permute.xlu0 %2890
  %2893 = vset.pattern.permute.xlu0 3
  %2894 = vperm.xlu0 %2893, %v1271
  %v2895 = vpop.permute.xlu0 %2894
  %2897 = vset.pattern.permute.xlu0 3
  %2898 = vperm.xlu0 %2897, %v1272
  %v2899 = vpop.permute.xlu0 %2898
  %2901 = vset.pattern.permute.xlu0 3
  %2902 = vperm.xlu0 %2901, %v1273
  %v2903 = vpop.permute.xlu0 %2902
  %2905 = vset.pattern.permute.xlu0 3
  %2906 = vperm.xlu0 %2905, %v1274
  %v2907 = vpop.permute.xlu0 %2906
  %2909 = vset.pattern.permute.xlu0 3
  %2910 = vperm.xlu0 %2909, %v1275
  %v2911 = vpop.permute.xlu0 %2910
  %2913 = vset.pattern.permute.xlu0 3
  %2914 = vperm.xlu0 %2913, %v1276
  %v2915 = vpop.permute.xlu0 %2914
  %2917 = vset.pattern.permute.xlu0 3
  %2918 = vperm.xlu0 %2917, %v1277
  %v2919 = vpop.permute.xlu0 %2918
  %2921 = vset.pattern.permute.xlu0 3
  %2922 = vperm.xlu0 %2921, %v1278
  %v2923 = vpop.permute.xlu0 %2922
  %2925 = vset.pattern.permute.xlu0 3
  %2926 = vperm.xlu0 %2925, %v1279
  %v2927 = vpop.permute.xlu0 %2926
  %2929 = vset.pattern.permute.xlu0 3
  %2930 = vperm.xlu0 %2929, %v1280
  %v2931 = vpop.permute.xlu0 %2930
  %2933 = vset.pattern.permute.xlu0 3
  %2934 = vperm.xlu0 %2933, %v1281
  %v2935 = vpop.permute.xlu0 %2934
  %2937 = vset.pattern.permute.xlu0 3
  %2938 = vperm.xlu0 %2937, %v1282
  %v2939 = vpop.permute.xlu0 %2938
  %2941 = vset.pattern.permute.xlu0 3
  %2942 = vperm.xlu0 %2941, %v1283
  %v2943 = vpop.permute.xlu0 %2942
  %2945 = vset.pattern.permute.xlu0 3
  %2946 = vperm.xlu0 %2945, %v1284
  %v2947 = vpop.permute.xlu0 %2946
  %2949 = vset.pattern.permute.xlu0 3
  %2950 = vperm.xlu0 %2949, %v1285
  %v2951 = vpop.permute.xlu0 %2950
  %2953 = vset.pattern.permute.xlu0 3
  %2954 = vperm.xlu0 %2953, %v1286
  %v2955 = vpop.permute.xlu0 %2954
  %2957 = vset.pattern.permute.xlu0 3
  %2958 = vperm.xlu0 %2957, %v1287
  %v2959 = vpop.permute.xlu0 %2958
  %2961 = vset.pattern.permute.xlu0 3
  %2962 = vperm.xlu0 %2961, %v1288
  %v2963 = vpop.permute.xlu0 %2962
  %2965 = vset.pattern.permute.xlu0 3
  %2966 = vperm.xlu0 %2965, %v1289
  %v2967 = vpop.permute.xlu0 %2966
  %2969 = vset.pattern.permute.xlu0 3
  %2970 = vperm.xlu0 %2969, %v1290
  %v2971 = vpop.permute.xlu0 %2970
  %2973 = vset.pattern.permute.xlu0 3
  %2974 = vperm.xlu0 %2973, %v1291
  %v2975 = vpop.permute.xlu0 %2974
  %2977 = vset.pattern.permute.xlu0 3
  %2978 = vperm.xlu0 %2977, %v1292
  %v2979 = vpop.permute.xlu0 %2978
  %2981 = vset.pattern.permute.xlu0 3
  %2982 = vperm.xlu0 %2981, %v1293
  %v2983 = vpop.permute.xlu0 %2982
  %2985 = vset.pattern.permute.xlu0 3
  %2986 = vperm.xlu0 %2985, %v1294
  %v2987 = vpop.permute.xlu0 %2986
  %2989 = vset.pattern.permute.xlu0 3
  %2990 = vperm.xlu0 %2989, %v1295
  %v2991 = vpop.permute.xlu0 %2990
  %2993 = vset.pattern.permute.xlu0 3
  %2994 = vperm.xlu0 %2993, %v1296
  %v2995 = vpop.permute.xlu0 %2994
  %2997 = vset.pattern.permute.xlu0 3
  %2998 = vperm.xlu0 %2997, %v1297
  %v2999 = vpop.permute.xlu0 %2998
  %3001 = vset.pattern.permute.xlu0 3
  %3002 = vperm.xlu0 %3001, %v1298
  %v3003 = vpop.permute.xlu0 %3002
  %3005 = vset.pattern.permute.xlu0 3
  %3006 = vperm.xlu0 %3005, %v1299
  %v3007 = vpop.permute.xlu0 %3006
  %3009 = vset.pattern.permute.xlu0 3
  %3010 = vperm.xlu0 %3009, %v1300
  %v3011 = vpop.permute.xlu0 %3010
  %3013 = vset.pattern.permute.xlu0 3
  %3014 = vperm.xlu0 %3013, %v1301
  %v3015 = vpop.permute.xlu0 %3014
  %3017 = vset.pattern.permute.xlu0 3
  %3018 = vperm.xlu0 %3017, %v1302
  %v3019 = vpop.permute.xlu0 %3018
  %3021 = vset.pattern.permute.xlu0 3
  %3022 = vperm.xlu0 %3021, %v1303
  %v3023 = vpop.permute.xlu0 %3022
  %3025 = vset.pattern.permute.xlu0 3
  %3026 = vperm.xlu0 %3025, %v1304
  %v3027 = vpop.permute.xlu0 %3026
  %3029 = vset.pattern.permute.xlu0 3
  %3030 = vperm.xlu0 %3029, %v1305
  %v3031 = vpop.permute.xlu0 %3030
  %3033 = vset.pattern.permute.xlu0 3
  %3034 = vperm.xlu0 %3033, %v1306
  %v3035 = vpop.permute.xlu0 %3034
  %3037 = vset.pattern.permute.xlu0 3
  %3038 = vperm.xlu0 %3037, %v1307
  %v3039 = vpop.permute.xlu0 %3038
  %3041 = vset.pattern.permute.xlu0 3
  %3042 = vperm.xlu0 %3041, %v1308
  %v3043 = vpop.permute.xlu0 %3042
  %3045 = vset.pattern.permute.xlu0 3
  %3046 = vperm.xlu0 %3045, %v1309
  %v3047 = vpop.permute.xlu0 %3046
  %3049 = vset.pattern.permute.xlu0 3
  %3050 = vperm.xlu0 %3049, %v1310
  %v3051 = vpop.permute.xlu0 %3050
  %3053 = vset.pattern.permute.xlu0 3
  %3054 = vperm.xlu0 %3053, %v1311
  %v3055 = vpop.permute.xlu0 %3054
  %3057 = vset.pattern.permute.xlu0 3
  %3058 = vperm.xlu0 %3057, %v1312
  %v3059 = vpop.permute.xlu0 %3058
  %3061 = vset.pattern.permute.xlu0 3
  %3062 = vperm.xlu0 %3061, %v1313
  %v3063 = vpop.permute.xlu0 %3062
  %3065 = vset.pattern.permute.xlu0 3
  %3066 = vperm.xlu0 %3065, %v1314
  %v3067 = vpop.permute.xlu0 %3066
  %3069 = vset.pattern.permute.xlu0 3
  %3070 = vperm.xlu0 %3069, %v1315
  %v3071 = vpop.permute.xlu0 %3070
  %3073 = vset.pattern.permute.xlu0 3
  %3074 = vperm.xlu0 %3073, %v1316
  %v3075 = vpop.permute.xlu0 %3074
  %3077 = vset.pattern.permute.xlu0 3
  %3078 = vperm.xlu0 %3077, %v1317
  %v3079 = vpop.permute.xlu0 %3078
  %3081 = vset.pattern.permute.xlu0 3
  %3082 = vperm.xlu0 %3081, %v1318
  %v3083 = vpop.permute.xlu0 %3082
  %3085 = vset.pattern.permute.xlu0 3
  %3086 = vperm.xlu0 %3085, %v1319
  %v3087 = vpop.permute.xlu0 %3086
  %3089 = vset.pattern.permute.xlu0 3
  %3090 = vperm.xlu0 %3089, %v1320
  %v3091 = vpop.permute.xlu0 %3090
  %3093 = vset.pattern.permute.xlu0 3
  %3094 = vperm.xlu0 %3093, %v1321
  %v3095 = vpop.permute.xlu0 %3094
  %3097 = vset.pattern.permute.xlu0 3
  %3098 = vperm.xlu0 %3097, %v1322
  %v3099 = vpop.permute.xlu0 %3098
  %3101 = vset.pattern.permute.xlu0 3
  %3102 = vperm.xlu0 %3101, %v1323
  %v3103 = vpop.permute.xlu0 %3102
  %3105 = vset.pattern.permute.xlu0 3
  %3106 = vperm.xlu0 %3105, %v1324
  %v3107 = vpop.permute.xlu0 %3106
  %3109 = vset.pattern.permute.xlu0 3
  %3110 = vperm.xlu0 %3109, %v1325
  %v3111 = vpop.permute.xlu0 %3110
  %3113 = vset.pattern.permute.xlu0 3
  %3114 = vperm.xlu0 %3113, %v1326
  %v3115 = vpop.permute.xlu0 %3114
  %3117 = vset.pattern.permute.xlu0 3
  %3118 = vperm.xlu0 %3117, %v1327
  %v3119 = vpop.permute.xlu0 %3118
  %3121 = vset.pattern.permute.xlu0 3
  %3122 = vperm.xlu0 %3121, %v1328
  %v3123 = vpop.permute.xlu0 %3122
  %3125 = vset.pattern.permute.xlu0 3
  %3126 = vperm.xlu0 %3125, %v1329
  %v3127 = vpop.permute.xlu0 %3126
  %3129 = vset.pattern.permute.xlu0 3
  %3130 = vperm.xlu0 %3129, %v1330
  %v3131 = vpop.permute.xlu0 %3130
  %3133 = vset.pattern.permute.xlu0 3
  %3134 = vperm.xlu0 %3133, %v1331
  %v3135 = vpop.permute.xlu0 %3134
  %3137 = vset.pattern.permute.xlu0 3
  %3138 = vperm.xlu0 %3137, %v1332
  %v3139 = vpop.permute.xlu0 %3138
  %v3141 = vmul.f32 %v2821, %v2887
  %v3142 = vmul.f32 %v2822, %v2891
  %v3143 = vmul.f32 %v2823, %v2895
  %v3144 = vmul.f32 %v2824, %v2899
  %v3145 = vmul.f32 %v2825, %v2903
  %v3146 = vmul.f32 %v2826, %v2907
  %v3147 = vmul.f32 %v2827, %v2911
  %v3148 = vmul.f32 %v2828, %v2915
  %v3149 = vmul.f32 %v2829, %v2919
  %v3150 = vmul.f32 %v2830, %v2923
  %v3151 = vmul.f32 %v2831, %v2927
  %v3152 = vmul.f32 %v2832, %v2931
  %v3153 = vmul.f32 %v2833, %v2935
  %v3154 = vmul.f32 %v2834, %v2939
  %v3155 = vmul.f32 %v2835, %v2943
  %v3156 = vmul.f32 %v2836, %v2947
  %v3157 = vmul.f32 %v2837, %v2951
  %v3158 = vmul.f32 %v2838, %v2955
  %v3159 = vmul.f32 %v2839, %v2959
  %v3160 = vmul.f32 %v2840, %v2963
  %v3161 = vmul.f32 %v2841, %v2967
  %v3162 = vmul.f32 %v2842, %v2971
  %v3163 = vmul.f32 %v2843, %v2975
  %v3164 = vmul.f32 %v2844, %v2979
  %v3165 = vmul.f32 %v2845, %v2983
  %v3166 = vmul.f32 %v2846, %v2987
  %v3167 = vmul.f32 %v2847, %v2991
  %v3168 = vmul.f32 %v2848, %v2995
  %v3169 = vmul.f32 %v2849, %v2999
  %v3170 = vmul.f32 %v2850, %v3003
  %v3171 = vmul.f32 %v2851, %v3007
  %v3172 = vmul.f32 %v2852, %v3011
  %v3173 = vmul.f32 %v2853, %v3015
  %v3174 = vmul.f32 %v2854, %v3019
  %v3175 = vmul.f32 %v2855, %v3023
  %v3176 = vmul.f32 %v2856, %v3027
  %v3177 = vmul.f32 %v2857, %v3031
  %v3178 = vmul.f32 %v2858, %v3035
  %v3179 = vmul.f32 %v2859, %v3039
  %v3180 = vmul.f32 %v2860, %v3043
  %v3181 = vmul.f32 %v2861, %v3047
  %v3182 = vmul.f32 %v2862, %v3051
  %v3183 = vmul.f32 %v2863, %v3055
  %v3184 = vmul.f32 %v2864, %v3059
  %v3185 = vmul.f32 %v2865, %v3063
  %v3186 = vmul.f32 %v2866, %v3067
  %v3187 = vmul.f32 %v2867, %v3071
  %v3188 = vmul.f32 %v2868, %v3075
  %v3189 = vmul.f32 %v2869, %v3079
  %v3190 = vmul.f32 %v2870, %v3083
  %v3191 = vmul.f32 %v2871, %v3087
  %v3192 = vmul.f32 %v2872, %v3091
  %v3193 = vmul.f32 %v2873, %v3095
  %v3194 = vmul.f32 %v2874, %v3099
  %v3195 = vmul.f32 %v2875, %v3103
  %v3196 = vmul.f32 %v2876, %v3107
  %v3197 = vmul.f32 %v2877, %v3111
  %v3198 = vmul.f32 %v2878, %v3115
  %v3199 = vmul.f32 %v2879, %v3119
  %v3200 = vmul.f32 %v2880, %v3123
  %v3201 = vmul.f32 %v2881, %v3127
  %v3202 = vmul.f32 %v2882, %v3131
  %v3203 = vmul.f32 %v2883, %v3135
  %v3204 = vmul.f32 %v2884, %v3139
  %v3205 = vadd.f32 %v2752, %v3141
  %v3206 = vadd.f32 %v2753, %v3142
  %v3207 = vadd.f32 %v2754, %v3143
  %v3208 = vadd.f32 %v2755, %v3144
  %v3209 = vadd.f32 %v2756, %v3145
  %v3210 = vadd.f32 %v2757, %v3146
  %v3211 = vadd.f32 %v2758, %v3147
  %v3212 = vadd.f32 %v2759, %v3148
  %v3213 = vadd.f32 %v2760, %v3149
  %v3214 = vadd.f32 %v2761, %v3150
  %v3215 = vadd.f32 %v2762, %v3151
  %v3216 = vadd.f32 %v2763, %v3152
  %v3217 = vadd.f32 %v2764, %v3153
  %v3218 = vadd.f32 %v2765, %v3154
  %v3219 = vadd.f32 %v2766, %v3155
  %v3220 = vadd.f32 %v2767, %v3156
  %v3221 = vadd.f32 %v2768, %v3157
  %v3222 = vadd.f32 %v2769, %v3158
  %v3223 = vadd.f32 %v2770, %v3159
  %v3224 = vadd.f32 %v2771, %v3160
  %v3225 = vadd.f32 %v2772, %v3161
  %v3226 = vadd.f32 %v2773, %v3162
  %v3227 = vadd.f32 %v2774, %v3163
  %v3228 = vadd.f32 %v2775, %v3164
  %v3229 = vadd.f32 %v2776, %v3165
  %v3230 = vadd.f32 %v2777, %v3166
  %v3231 = vadd.f32 %v2778, %v3167
  %v3232 = vadd.f32 %v2779, %v3168
  %v3233 = vadd.f32 %v2780, %v3169
  %v3234 = vadd.f32 %v2781, %v3170
  %v3235 = vadd.f32 %v2782, %v3171
  %v3236 = vadd.f32 %v2783, %v3172
  %v3237 = vadd.f32 %v2784, %v3173
  %v3238 = vadd.f32 %v2785, %v3174
  %v3239 = vadd.f32 %v2786, %v3175
  %v3240 = vadd.f32 %v2787, %v3176
  %v3241 = vadd.f32 %v2788, %v3177
  %v3242 = vadd.f32 %v2789, %v3178
  %v3243 = vadd.f32 %v2790, %v3179
  %v3244 = vadd.f32 %v2791, %v3180
  %v3245 = vadd.f32 %v2792, %v3181
  %v3246 = vadd.f32 %v2793, %v3182
  %v3247 = vadd.f32 %v2794, %v3183
  %v3248 = vadd.f32 %v2795, %v3184
  %v3249 = vadd.f32 %v2796, %v3185
  %v3250 = vadd.f32 %v2797, %v3186
  %v3251 = vadd.f32 %v2798, %v3187
  %v3252 = vadd.f32 %v2799, %v3188
  %v3253 = vadd.f32 %v2800, %v3189
  %v3254 = vadd.f32 %v2801, %v3190
  %v3255 = vadd.f32 %v2802, %v3191
  %v3256 = vadd.f32 %v2803, %v3192
  %v3257 = vadd.f32 %v2804, %v3193
  %v3258 = vadd.f32 %v2805, %v3194
  %v3259 = vadd.f32 %v2806, %v3195
  %v3260 = vadd.f32 %v2807, %v3196
  %v3261 = vadd.f32 %v2808, %v3197
  %v3262 = vadd.f32 %v2809, %v3198
  %v3263 = vadd.f32 %v2810, %v3199
  %v3264 = vadd.f32 %v2811, %v3200
  %v3265 = vadd.f32 %v2812, %v3201
  %v3266 = vadd.f32 %v2813, %v3202
  %v3267 = vadd.f32 %v2814, %v3203
  %v3268 = vadd.f32 %v2815, %v3204
  %v3269 = vld [vmem:[%s3 + $0x8] sm:$0x1]
  %v3270 = vlaneseq
  %v3271 = vshrl.u32 %v3270, 7
  %v3272 = vsub.s32 0, %v3271
  %v3273 = vrot.slane %v3269, %v3272
  %v3274 = vmul.f32 %v2361, %v3273
  %v3275 = vmul.f32 %v2360, %v3273
  %v3276 = vmul.f32 %v2359, %v3273
  %v3277 = vmul.f32 %v2358, %v3273
  %v3278 = vmul.f32 %v2357, %v3273
  %v3279 = vmul.f32 %v2356, %v3273
  %v3280 = vmul.f32 %v2355, %v3273
  %v3281 = vmul.f32 %v2354, %v3273
  %v3282 = vmul.f32 %v2353, %v3273
  %v3283 = vmul.f32 %v2352, %v3273
  %v3284 = vmul.f32 %v2351, %v3273
  %v3285 = vmul.f32 %v2350, %v3273
  %v3286 = vmul.f32 %v2349, %v3273
  %v3287 = vmul.f32 %v2348, %v3273
  %v3288 = vmul.f32 %v2347, %v3273
  %v3289 = vmul.f32 %v2346, %v3273
  %v3290 = vmul.f32 %v2345, %v3273
  %v3291 = vmul.f32 %v2344, %v3273
  %v3292 = vmul.f32 %v2343, %v3273
  %v3293 = vmul.f32 %v2342, %v3273
  %v3294 = vmul.f32 %v2341, %v3273
  %v3295 = vmul.f32 %v2340, %v3273
  %v3296 = vmul.f32 %v2339, %v3273
  %v3297 = vmul.f32 %v2338, %v3273
  %v3298 = vmul.f32 %v2337, %v3273
  %v3299 = vmul.f32 %v2336, %v3273
  %v3300 = vmul.f32 %v2335, %v3273
  %v3301 = vmul.f32 %v2334, %v3273
  %v3302 = vmul.f32 %v2333, %v3273
  %v3303 = vmul.f32 %v2332, %v3273
  %v3304 = vmul.f32 %v2331, %v3273
  %v3305 = vmul.f32 %v2330, %v3273
  %v3306 = vmul.f32 %v2329, %v3273
  %v3307 = vmul.f32 %v2328, %v3273
  %v3308 = vmul.f32 %v2327, %v3273
  %v3309 = vmul.f32 %v2326, %v3273
  %v3310 = vmul.f32 %v2325, %v3273
  %v3311 = vmul.f32 %v2324, %v3273
  %v3312 = vmul.f32 %v2323, %v3273
  %v3313 = vmul.f32 %v2322, %v3273
  %v3314 = vmul.f32 %v2321, %v3273
  %v3315 = vmul.f32 %v2320, %v3273
  %v3316 = vmul.f32 %v2319, %v3273
  %v3317 = vmul.f32 %v2318, %v3273
  %v3318 = vmul.f32 %v2317, %v3273
  %v3319 = vmul.f32 %v2316, %v3273
  %v3320 = vmul.f32 %v2315, %v3273
  %v3321 = vmul.f32 %v2314, %v3273
  %v3322 = vmul.f32 %v2313, %v3273
  %v3323 = vmul.f32 %v2312, %v3273
  %v3324 = vmul.f32 %v2311, %v3273
  %v3325 = vmul.f32 %v2310, %v3273
  %v3326 = vmul.f32 %v2309, %v3273
  %v3327 = vmul.f32 %v2308, %v3273
  %v3328 = vmul.f32 %v2307, %v3273
  %v3329 = vmul.f32 %v2306, %v3273
  %v3330 = vmul.f32 %v2305, %v3273
  %v3331 = vmul.f32 %v2304, %v3273
  %v3332 = vmul.f32 %v2303, %v3273
  %v3333 = vmul.f32 %v2302, %v3273
  %v3334 = vmul.f32 %v2301, %v3273
  %v3335 = vmul.f32 %v2300, %v3273
  %v3336 = vmul.f32 %v2299, %v3273
  %v3337 = vmul.f32 %v2362, %v3273
  %3338 = vset.pattern.permute.xlu0 5
  %3339 = vperm.xlu0 %3338, %v1269
  %v3340 = vpop.permute.xlu0 %3339
  %3342 = vset.pattern.permute.xlu0 5
  %3343 = vperm.xlu0 %3342, %v1270
  %v3344 = vpop.permute.xlu0 %3343
  %3346 = vset.pattern.permute.xlu0 5
  %3347 = vperm.xlu0 %3346, %v1271
  %v3348 = vpop.permute.xlu0 %3347
  %3350 = vset.pattern.permute.xlu0 5
  %3351 = vperm.xlu0 %3350, %v1272
  %v3352 = vpop.permute.xlu0 %3351
  %3354 = vset.pattern.permute.xlu0 5
  %3355 = vperm.xlu0 %3354, %v1273
  %v3356 = vpop.permute.xlu0 %3355
  %3358 = vset.pattern.permute.xlu0 5
  %3359 = vperm.xlu0 %3358, %v1274
  %v3360 = vpop.permute.xlu0 %3359
  %3362 = vset.pattern.permute.xlu0 5
  %3363 = vperm.xlu0 %3362, %v1275
  %v3364 = vpop.permute.xlu0 %3363
  %3366 = vset.pattern.permute.xlu0 5
  %3367 = vperm.xlu0 %3366, %v1276
  %v3368 = vpop.permute.xlu0 %3367
  %3370 = vset.pattern.permute.xlu0 5
  %3371 = vperm.xlu0 %3370, %v1277
  %v3372 = vpop.permute.xlu0 %3371
  %3374 = vset.pattern.permute.xlu0 5
  %3375 = vperm.xlu0 %3374, %v1278
  %v3376 = vpop.permute.xlu0 %3375
  %3378 = vset.pattern.permute.xlu0 5
  %3379 = vperm.xlu0 %3378, %v1279
  %v3380 = vpop.permute.xlu0 %3379
  %3382 = vset.pattern.permute.xlu0 5
  %3383 = vperm.xlu0 %3382, %v1280
  %v3384 = vpop.permute.xlu0 %3383
  %3386 = vset.pattern.permute.xlu0 5
  %3387 = vperm.xlu0 %3386, %v1281
  %v3388 = vpop.permute.xlu0 %3387
  %3390 = vset.pattern.permute.xlu0 5
  %3391 = vperm.xlu0 %3390, %v1282
  %v3392 = vpop.permute.xlu0 %3391
  %3394 = vset.pattern.permute.xlu0 5
  %3395 = vperm.xlu0 %3394, %v1283
  %v3396 = vpop.permute.xlu0 %3395
  %3398 = vset.pattern.permute.xlu0 5
  %3399 = vperm.xlu0 %3398, %v1284
  %v3400 = vpop.permute.xlu0 %3399
  %3402 = vset.pattern.permute.xlu0 5
  %3403 = vperm.xlu0 %3402, %v1285
  %v3404 = vpop.permute.xlu0 %3403
  %3406 = vset.pattern.permute.xlu0 5
  %3407 = vperm.xlu0 %3406, %v1286
  %v3408 = vpop.permute.xlu0 %3407
  %3410 = vset.pattern.permute.xlu0 5
  %3411 = vperm.xlu0 %3410, %v1287
  %v3412 = vpop.permute.xlu0 %3411
  %3414 = vset.pattern.permute.xlu0 5
  %3415 = vperm.xlu0 %3414, %v1288
  %v3416 = vpop.permute.xlu0 %3415
  %3418 = vset.pattern.permute.xlu0 5
  %3419 = vperm.xlu0 %3418, %v1289
  %v3420 = vpop.permute.xlu0 %3419
  %3422 = vset.pattern.permute.xlu0 5
  %3423 = vperm.xlu0 %3422, %v1290
  %v3424 = vpop.permute.xlu0 %3423
  %3426 = vset.pattern.permute.xlu0 5
  %3427 = vperm.xlu0 %3426, %v1291
  %v3428 = vpop.permute.xlu0 %3427
  %3430 = vset.pattern.permute.xlu0 5
  %3431 = vperm.xlu0 %3430, %v1292
  %v3432 = vpop.permute.xlu0 %3431
  %3434 = vset.pattern.permute.xlu0 5
  %3435 = vperm.xlu0 %3434, %v1293
  %v3436 = vpop.permute.xlu0 %3435
  %3438 = vset.pattern.permute.xlu0 5
  %3439 = vperm.xlu0 %3438, %v1294
  %v3440 = vpop.permute.xlu0 %3439
  %3442 = vset.pattern.permute.xlu0 5
  %3443 = vperm.xlu0 %3442, %v1295
  %v3444 = vpop.permute.xlu0 %3443
  %3446 = vset.pattern.permute.xlu0 5
  %3447 = vperm.xlu0 %3446, %v1296
  %v3448 = vpop.permute.xlu0 %3447
  %3450 = vset.pattern.permute.xlu0 5
  %3451 = vperm.xlu0 %3450, %v1297
  %v3452 = vpop.permute.xlu0 %3451
  %3454 = vset.pattern.permute.xlu0 5
  %3455 = vperm.xlu0 %3454, %v1298
  %v3456 = vpop.permute.xlu0 %3455
  %3458 = vset.pattern.permute.xlu0 5
  %3459 = vperm.xlu0 %3458, %v1299
  %v3460 = vpop.permute.xlu0 %3459
  %3462 = vset.pattern.permute.xlu0 5
  %3463 = vperm.xlu0 %3462, %v1300
  %v3464 = vpop.permute.xlu0 %3463
  %3466 = vset.pattern.permute.xlu0 5
  %3467 = vperm.xlu0 %3466, %v1301
  %v3468 = vpop.permute.xlu0 %3467
  %3470 = vset.pattern.permute.xlu0 5
  %3471 = vperm.xlu0 %3470, %v1302
  %v3472 = vpop.permute.xlu0 %3471
  %3474 = vset.pattern.permute.xlu0 5
  %3475 = vperm.xlu0 %3474, %v1303
  %v3476 = vpop.permute.xlu0 %3475
  %3478 = vset.pattern.permute.xlu0 5
  %3479 = vperm.xlu0 %3478, %v1304
  %v3480 = vpop.permute.xlu0 %3479
  %3482 = vset.pattern.permute.xlu0 5
  %3483 = vperm.xlu0 %3482, %v1305
  %v3484 = vpop.permute.xlu0 %3483
  %3486 = vset.pattern.permute.xlu0 5
  %3487 = vperm.xlu0 %3486, %v1306
  %v3488 = vpop.permute.xlu0 %3487
  %3490 = vset.pattern.permute.xlu0 5
  %3491 = vperm.xlu0 %3490, %v1307
  %v3492 = vpop.permute.xlu0 %3491
  %3494 = vset.pattern.permute.xlu0 5
  %3495 = vperm.xlu0 %3494, %v1308
  %v3496 = vpop.permute.xlu0 %3495
  %3498 = vset.pattern.permute.xlu0 5
  %3499 = vperm.xlu0 %3498, %v1309
  %v3500 = vpop.permute.xlu0 %3499
  %3502 = vset.pattern.permute.xlu0 5
  %3503 = vperm.xlu0 %3502, %v1310
  %v3504 = vpop.permute.xlu0 %3503
  %3506 = vset.pattern.permute.xlu0 5
  %3507 = vperm.xlu0 %3506, %v1311
  %v3508 = vpop.permute.xlu0 %3507
  %3510 = vset.pattern.permute.xlu0 5
  %3511 = vperm.xlu0 %3510, %v1312
  %v3512 = vpop.permute.xlu0 %3511
  %3514 = vset.pattern.permute.xlu0 5
  %3515 = vperm.xlu0 %3514, %v1313
  %v3516 = vpop.permute.xlu0 %3515
  %3518 = vset.pattern.permute.xlu0 5
  %3519 = vperm.xlu0 %3518, %v1314
  %v3520 = vpop.permute.xlu0 %3519
  %3522 = vset.pattern.permute.xlu0 5
  %3523 = vperm.xlu0 %3522, %v1315
  %v3524 = vpop.permute.xlu0 %3523
  %3526 = vset.pattern.permute.xlu0 5
  %3527 = vperm.xlu0 %3526, %v1316
  %v3528 = vpop.permute.xlu0 %3527
  %3530 = vset.pattern.permute.xlu0 5
  %3531 = vperm.xlu0 %3530, %v1317
  %v3532 = vpop.permute.xlu0 %3531
  %3534 = vset.pattern.permute.xlu0 5
  %3535 = vperm.xlu0 %3534, %v1318
  %v3536 = vpop.permute.xlu0 %3535
  %3538 = vset.pattern.permute.xlu0 5
  %3539 = vperm.xlu0 %3538, %v1319
  %v3540 = vpop.permute.xlu0 %3539
  %3542 = vset.pattern.permute.xlu0 5
  %3543 = vperm.xlu0 %3542, %v1320
  %v3544 = vpop.permute.xlu0 %3543
  %3546 = vset.pattern.permute.xlu0 5
  %3547 = vperm.xlu0 %3546, %v1321
  %v3548 = vpop.permute.xlu0 %3547
  %3550 = vset.pattern.permute.xlu0 5
  %3551 = vperm.xlu0 %3550, %v1322
  %v3552 = vpop.permute.xlu0 %3551
  %3554 = vset.pattern.permute.xlu0 5
  %3555 = vperm.xlu0 %3554, %v1323
  %v3556 = vpop.permute.xlu0 %3555
  %3558 = vset.pattern.permute.xlu0 5
  %3559 = vperm.xlu0 %3558, %v1324
  %v3560 = vpop.permute.xlu0 %3559
  %3562 = vset.pattern.permute.xlu0 5
  %3563 = vperm.xlu0 %3562, %v1325
  %v3564 = vpop.permute.xlu0 %3563
  %3566 = vset.pattern.permute.xlu0 5
  %3567 = vperm.xlu0 %3566, %v1326
  %v3568 = vpop.permute.xlu0 %3567
  %3570 = vset.pattern.permute.xlu0 5
  %3571 = vperm.xlu0 %3570, %v1327
  %v3572 = vpop.permute.xlu0 %3571
  %3574 = vset.pattern.permute.xlu0 5
  %3575 = vperm.xlu0 %3574, %v1328
  %v3576 = vpop.permute.xlu0 %3575
  %3578 = vset.pattern.permute.xlu0 5
  %3579 = vperm.xlu0 %3578, %v1329
  %v3580 = vpop.permute.xlu0 %3579
  %3582 = vset.pattern.permute.xlu0 5
  %3583 = vperm.xlu0 %3582, %v1330
  %v3584 = vpop.permute.xlu0 %3583
  %3586 = vset.pattern.permute.xlu0 5
  %3587 = vperm.xlu0 %3586, %v1331
  %v3588 = vpop.permute.xlu0 %3587
  %3590 = vset.pattern.permute.xlu0 5
  %3591 = vperm.xlu0 %3590, %v1332
  %v3592 = vpop.permute.xlu0 %3591
  %v3594 = vmul.f32 %v3274, %v3340
  %v3595 = vmul.f32 %v3275, %v3344
  %v3596 = vmul.f32 %v3276, %v3348
  %v3597 = vmul.f32 %v3277, %v3352
  %v3598 = vmul.f32 %v3278, %v3356
  %v3599 = vmul.f32 %v3279, %v3360
  %v3600 = vmul.f32 %v3280, %v3364
  %v3601 = vmul.f32 %v3281, %v3368
  %v3602 = vmul.f32 %v3282, %v3372
  %v3603 = vmul.f32 %v3283, %v3376
  %v3604 = vmul.f32 %v3284, %v3380
  %v3605 = vmul.f32 %v3285, %v3384
  %v3606 = vmul.f32 %v3286, %v3388
  %v3607 = vmul.f32 %v3287, %v3392
  %v3608 = vmul.f32 %v3288, %v3396
  %v3609 = vmul.f32 %v3289, %v3400
  %v3610 = vmul.f32 %v3290, %v3404
  %v3611 = vmul.f32 %v3291, %v3408
  %v3612 = vmul.f32 %v3292, %v3412
  %v3613 = vmul.f32 %v3293, %v3416
  %v3614 = vmul.f32 %v3294, %v3420
  %v3615 = vmul.f32 %v3295, %v3424
  %v3616 = vmul.f32 %v3296, %v3428
  %v3617 = vmul.f32 %v3297, %v3432
  %v3618 = vmul.f32 %v3298, %v3436
  %v3619 = vmul.f32 %v3299, %v3440
  %v3620 = vmul.f32 %v3300, %v3444
  %v3621 = vmul.f32 %v3301, %v3448
  %v3622 = vmul.f32 %v3302, %v3452
  %v3623 = vmul.f32 %v3303, %v3456
  %v3624 = vmul.f32 %v3304, %v3460
  %v3625 = vmul.f32 %v3305, %v3464
  %v3626 = vmul.f32 %v3306, %v3468
  %v3627 = vmul.f32 %v3307, %v3472
  %v3628 = vmul.f32 %v3308, %v3476
  %v3629 = vmul.f32 %v3309, %v3480
  %v3630 = vmul.f32 %v3310, %v3484
  %v3631 = vmul.f32 %v3311, %v3488
  %v3632 = vmul.f32 %v3312, %v3492
  %v3633 = vmul.f32 %v3313, %v3496
  %v3634 = vmul.f32 %v3314, %v3500
  %v3635 = vmul.f32 %v3315, %v3504
  %v3636 = vmul.f32 %v3316, %v3508
  %v3637 = vmul.f32 %v3317, %v3512
  %v3638 = vmul.f32 %v3318, %v3516
  %v3639 = vmul.f32 %v3319, %v3520
  %v3640 = vmul.f32 %v3320, %v3524
  %v3641 = vmul.f32 %v3321, %v3528
  %v3642 = vmul.f32 %v3322, %v3532
  %v3643 = vmul.f32 %v3323, %v3536
  %v3644 = vmul.f32 %v3324, %v3540
  %v3645 = vmul.f32 %v3325, %v3544
  %v3646 = vmul.f32 %v3326, %v3548
  %v3647 = vmul.f32 %v3327, %v3552
  %v3648 = vmul.f32 %v3328, %v3556
  %v3649 = vmul.f32 %v3329, %v3560
  %v3650 = vmul.f32 %v3330, %v3564
  %v3651 = vmul.f32 %v3331, %v3568
  %v3652 = vmul.f32 %v3332, %v3572
  %v3653 = vmul.f32 %v3333, %v3576
  %v3654 = vmul.f32 %v3334, %v3580
  %v3655 = vmul.f32 %v3335, %v3584
  %v3656 = vmul.f32 %v3336, %v3588
  %v3657 = vmul.f32 %v3337, %v3592
  %v3658 = vadd.f32 %v3205, %v3594
  %v3659 = vadd.f32 %v3206, %v3595
  %v3660 = vadd.f32 %v3207, %v3596
  %v3661 = vadd.f32 %v3208, %v3597
  %v3662 = vadd.f32 %v3209, %v3598
  %v3663 = vadd.f32 %v3210, %v3599
  %v3664 = vadd.f32 %v3211, %v3600
  %v3665 = vadd.f32 %v3212, %v3601
  %v3666 = vadd.f32 %v3213, %v3602
  %v3667 = vadd.f32 %v3214, %v3603
  %v3668 = vadd.f32 %v3215, %v3604
  %v3669 = vadd.f32 %v3216, %v3605
  %v3670 = vadd.f32 %v3217, %v3606
  %v3671 = vadd.f32 %v3218, %v3607
  %v3672 = vadd.f32 %v3219, %v3608
  %v3673 = vadd.f32 %v3220, %v3609
  %v3674 = vadd.f32 %v3221, %v3610
  %v3675 = vadd.f32 %v3222, %v3611
  %v3676 = vadd.f32 %v3223, %v3612
  %v3677 = vadd.f32 %v3224, %v3613
  %v3678 = vadd.f32 %v3225, %v3614
  %v3679 = vadd.f32 %v3226, %v3615
  %v3680 = vadd.f32 %v3227, %v3616
  %v3681 = vadd.f32 %v3228, %v3617
  %v3682 = vadd.f32 %v3229, %v3618
  %v3683 = vadd.f32 %v3230, %v3619
  %v3684 = vadd.f32 %v3231, %v3620
  %v3685 = vadd.f32 %v3232, %v3621
  %v3686 = vadd.f32 %v3233, %v3622
  %v3687 = vadd.f32 %v3234, %v3623
  %v3688 = vadd.f32 %v3235, %v3624
  %v3689 = vadd.f32 %v3236, %v3625
  %v3690 = vadd.f32 %v3237, %v3626
  %v3691 = vadd.f32 %v3238, %v3627
  %v3692 = vadd.f32 %v3239, %v3628
  %v3693 = vadd.f32 %v3240, %v3629
  %v3694 = vadd.f32 %v3241, %v3630
  %v3695 = vadd.f32 %v3242, %v3631
  %v3696 = vadd.f32 %v3243, %v3632
  %v3697 = vadd.f32 %v3244, %v3633
  %v3698 = vadd.f32 %v3245, %v3634
  %v3699 = vadd.f32 %v3246, %v3635
  %v3700 = vadd.f32 %v3247, %v3636
  %v3701 = vadd.f32 %v3248, %v3637
  %v3702 = vadd.f32 %v3249, %v3638
  %v3703 = vadd.f32 %v3250, %v3639
  %v3704 = vadd.f32 %v3251, %v3640
  %v3705 = vadd.f32 %v3252, %v3641
  %v3706 = vadd.f32 %v3253, %v3642
  %v3707 = vadd.f32 %v3254, %v3643
  %v3708 = vadd.f32 %v3255, %v3644
  %v3709 = vadd.f32 %v3256, %v3645
  %v3710 = vadd.f32 %v3257, %v3646
  %v3711 = vadd.f32 %v3258, %v3647
  %v3712 = vadd.f32 %v3259, %v3648
  %v3713 = vadd.f32 %v3260, %v3649
  %v3714 = vadd.f32 %v3261, %v3650
  %v3715 = vadd.f32 %v3262, %v3651
  %v3716 = vadd.f32 %v3263, %v3652
  %v3717 = vadd.f32 %v3264, %v3653
  %v3718 = vadd.f32 %v3265, %v3654
  %v3719 = vadd.f32 %v3266, %v3655
  %v3720 = vadd.f32 %v3267, %v3656
  %v3721 = vadd.f32 %v3268, %v3657
  %v3722 = vld [vmem:[%s3 + $0x9] sm:$0x1]
  %v3723 = vlaneseq
  %v3724 = vshrl.u32 %v3723, 7
  %v3725 = vsub.s32 0, %v3724
  %v3726 = vrot.slane %v3722, %v3725
  %v3727 = vmul.f32 %v1197, %v3726
  %v3728 = vmul.f32 %v1196, %v3726
  %v3729 = vmul.f32 %v1195, %v3726
  %v3730 = vmul.f32 %v1194, %v3726
  %v3731 = vmul.f32 %v1193, %v3726
  %v3732 = vmul.f32 %v1192, %v3726
  %v3733 = vmul.f32 %v1191, %v3726
  %v3734 = vmul.f32 %v1190, %v3726
  %v3735 = vmul.f32 %v1189, %v3726
  %v3736 = vmul.f32 %v1188, %v3726
  %v3737 = vmul.f32 %v1187, %v3726
  %v3738 = vmul.f32 %v1186, %v3726
  %v3739 = vmul.f32 %v1185, %v3726
  %v3740 = vmul.f32 %v1184, %v3726
  %v3741 = vmul.f32 %v1183, %v3726
  %v3742 = vmul.f32 %v1182, %v3726
  %v3743 = vmul.f32 %v1181, %v3726
  %v3744 = vmul.f32 %v1180, %v3726
  %v3745 = vmul.f32 %v1179, %v3726
  %v3746 = vmul.f32 %v1178, %v3726
  %v3747 = vmul.f32 %v1177, %v3726
  %v3748 = vmul.f32 %v1176, %v3726
  %v3749 = vmul.f32 %v1175, %v3726
  %v3750 = vmul.f32 %v1174, %v3726
  %v3751 = vmul.f32 %v1173, %v3726
  %v3752 = vmul.f32 %v1172, %v3726
  %v3753 = vmul.f32 %v1171, %v3726
  %v3754 = vmul.f32 %v1170, %v3726
  %v3755 = vmul.f32 %v1169, %v3726
  %v3756 = vmul.f32 %v1168, %v3726
  %v3757 = vmul.f32 %v1167, %v3726
  %v3758 = vmul.f32 %v1166, %v3726
  %v3759 = vmul.f32 %v1165, %v3726
  %v3760 = vmul.f32 %v1164, %v3726
  %v3761 = vmul.f32 %v1163, %v3726
  %v3762 = vmul.f32 %v1162, %v3726
  %v3763 = vmul.f32 %v1161, %v3726
  %v3764 = vmul.f32 %v1160, %v3726
  %v3765 = vmul.f32 %v1159, %v3726
  %v3766 = vmul.f32 %v1158, %v3726
  %v3767 = vmul.f32 %v1157, %v3726
  %v3768 = vmul.f32 %v1156, %v3726
  %v3769 = vmul.f32 %v1155, %v3726
  %v3770 = vmul.f32 %v1154, %v3726
  %v3771 = vmul.f32 %v1153, %v3726
  %v3772 = vmul.f32 %v1152, %v3726
  %v3773 = vmul.f32 %v1151, %v3726
  %v3774 = vmul.f32 %v1150, %v3726
  %v3775 = vmul.f32 %v1149, %v3726
  %v3776 = vmul.f32 %v1148, %v3726
  %v3777 = vmul.f32 %v1147, %v3726
  %v3778 = vmul.f32 %v1146, %v3726
  %v3779 = vmul.f32 %v1145, %v3726
  %v3780 = vmul.f32 %v1144, %v3726
  %v3781 = vmul.f32 %v1143, %v3726
  %v3782 = vmul.f32 %v1142, %v3726
  %v3783 = vmul.f32 %v1141, %v3726
  %v3784 = vmul.f32 %v1140, %v3726
  %v3785 = vmul.f32 %v1139, %v3726
  %v3786 = vmul.f32 %v1138, %v3726
  %v3787 = vmul.f32 %v1137, %v3726
  %v3788 = vmul.f32 %v1136, %v3726
  %v3789 = vmul.f32 %v1199, %v3726
  %v3790 = vmul.f32 %v1198, %v3726
  %3791 = vset.pattern.permute.xlu0 6
  %3792 = vperm.xlu0 %3791, %v1269
  %v3793 = vpop.permute.xlu0 %3792
  %3795 = vset.pattern.permute.xlu0 6
  %3796 = vperm.xlu0 %3795, %v1270
  %v3797 = vpop.permute.xlu0 %3796
  %3799 = vset.pattern.permute.xlu0 6
  %3800 = vperm.xlu0 %3799, %v1271
  %v3801 = vpop.permute.xlu0 %3800
  %3803 = vset.pattern.permute.xlu0 6
  %3804 = vperm.xlu0 %3803, %v1272
  %v3805 = vpop.permute.xlu0 %3804
  %3807 = vset.pattern.permute.xlu0 6
  %3808 = vperm.xlu0 %3807, %v1273
  %v3809 = vpop.permute.xlu0 %3808
  %3811 = vset.pattern.permute.xlu0 6
  %3812 = vperm.xlu0 %3811, %v1274
  %v3813 = vpop.permute.xlu0 %3812
  %3815 = vset.pattern.permute.xlu0 6
  %3816 = vperm.xlu0 %3815, %v1275
  %v3817 = vpop.permute.xlu0 %3816
  %3819 = vset.pattern.permute.xlu0 6
  %3820 = vperm.xlu0 %3819, %v1276
  %v3821 = vpop.permute.xlu0 %3820
  %3823 = vset.pattern.permute.xlu0 6
  %3824 = vperm.xlu0 %3823, %v1277
  %v3825 = vpop.permute.xlu0 %3824
  %3827 = vset.pattern.permute.xlu0 6
  %3828 = vperm.xlu0 %3827, %v1278
  %v3829 = vpop.permute.xlu0 %3828
  %3831 = vset.pattern.permute.xlu0 6
  %3832 = vperm.xlu0 %3831, %v1279
  %v3833 = vpop.permute.xlu0 %3832
  %3835 = vset.pattern.permute.xlu0 6
  %3836 = vperm.xlu0 %3835, %v1280
  %v3837 = vpop.permute.xlu0 %3836
  %3839 = vset.pattern.permute.xlu0 6
  %3840 = vperm.xlu0 %3839, %v1281
  %v3841 = vpop.permute.xlu0 %3840
  %3843 = vset.pattern.permute.xlu0 6
  %3844 = vperm.xlu0 %3843, %v1282
  %v3845 = vpop.permute.xlu0 %3844
  %3847 = vset.pattern.permute.xlu0 6
  %3848 = vperm.xlu0 %3847, %v1283
  %v3849 = vpop.permute.xlu0 %3848
  %3851 = vset.pattern.permute.xlu0 6
  %3852 = vperm.xlu0 %3851, %v1284
  %v3853 = vpop.permute.xlu0 %3852
  %3855 = vset.pattern.permute.xlu0 6
  %3856 = vperm.xlu0 %3855, %v1285
  %v3857 = vpop.permute.xlu0 %3856
  %3859 = vset.pattern.permute.xlu0 6
  %3860 = vperm.xlu0 %3859, %v1286
  %v3861 = vpop.permute.xlu0 %3860
  %3863 = vset.pattern.permute.xlu0 6
  %3864 = vperm.xlu0 %3863, %v1287
  %v3865 = vpop.permute.xlu0 %3864
  %3867 = vset.pattern.permute.xlu0 6
  %3868 = vperm.xlu0 %3867, %v1288
  %v3869 = vpop.permute.xlu0 %3868
  %3871 = vset.pattern.permute.xlu0 6
  %3872 = vperm.xlu0 %3871, %v1289
  %v3873 = vpop.permute.xlu0 %3872
  %3875 = vset.pattern.permute.xlu0 6
  %3876 = vperm.xlu0 %3875, %v1290
  %v3877 = vpop.permute.xlu0 %3876
  %3879 = vset.pattern.permute.xlu0 6
  %3880 = vperm.xlu0 %3879, %v1291
  %v3881 = vpop.permute.xlu0 %3880
  %3883 = vset.pattern.permute.xlu0 6
  %3884 = vperm.xlu0 %3883, %v1292
  %v3885 = vpop.permute.xlu0 %3884
  %3887 = vset.pattern.permute.xlu0 6
  %3888 = vperm.xlu0 %3887, %v1293
  %v3889 = vpop.permute.xlu0 %3888
  %3891 = vset.pattern.permute.xlu0 6
  %3892 = vperm.xlu0 %3891, %v1294
  %v3893 = vpop.permute.xlu0 %3892
  %3895 = vset.pattern.permute.xlu0 6
  %3896 = vperm.xlu0 %3895, %v1295
  %v3897 = vpop.permute.xlu0 %3896
  %3899 = vset.pattern.permute.xlu0 6
  %3900 = vperm.xlu0 %3899, %v1296
  %v3901 = vpop.permute.xlu0 %3900
  %3903 = vset.pattern.permute.xlu0 6
  %3904 = vperm.xlu0 %3903, %v1297
  %v3905 = vpop.permute.xlu0 %3904
  %3907 = vset.pattern.permute.xlu0 6
  %3908 = vperm.xlu0 %3907, %v1298
  %v3909 = vpop.permute.xlu0 %3908
  %3911 = vset.pattern.permute.xlu0 6
  %3912 = vperm.xlu0 %3911, %v1299
  %v3913 = vpop.permute.xlu0 %3912
  %3915 = vset.pattern.permute.xlu0 6
  %3916 = vperm.xlu0 %3915, %v1300
  %v3917 = vpop.permute.xlu0 %3916
  %3919 = vset.pattern.permute.xlu0 6
  %3920 = vperm.xlu0 %3919, %v1301
  %v3921 = vpop.permute.xlu0 %3920
  %3923 = vset.pattern.permute.xlu0 6
  %3924 = vperm.xlu0 %3923, %v1302
  %v3925 = vpop.permute.xlu0 %3924
  %3927 = vset.pattern.permute.xlu0 6
  %3928 = vperm.xlu0 %3927, %v1303
  %v3929 = vpop.permute.xlu0 %3928
  %3931 = vset.pattern.permute.xlu0 6
  %3932 = vperm.xlu0 %3931, %v1304
  %v3933 = vpop.permute.xlu0 %3932
  %3935 = vset.pattern.permute.xlu0 6
  %3936 = vperm.xlu0 %3935, %v1305
  %v3937 = vpop.permute.xlu0 %3936
  %3939 = vset.pattern.permute.xlu0 6
  %3940 = vperm.xlu0 %3939, %v1306
  %v3941 = vpop.permute.xlu0 %3940
  %3943 = vset.pattern.permute.xlu0 6
  %3944 = vperm.xlu0 %3943, %v1307
  %v3945 = vpop.permute.xlu0 %3944
  %3947 = vset.pattern.permute.xlu0 6
  %3948 = vperm.xlu0 %3947, %v1308
  %v3949 = vpop.permute.xlu0 %3948
  %3951 = vset.pattern.permute.xlu0 6
  %3952 = vperm.xlu0 %3951, %v1309
  %v3953 = vpop.permute.xlu0 %3952
  %3955 = vset.pattern.permute.xlu0 6
  %3956 = vperm.xlu0 %3955, %v1310
  %v3957 = vpop.permute.xlu0 %3956
  %3959 = vset.pattern.permute.xlu0 6
  %3960 = vperm.xlu0 %3959, %v1311
  %v3961 = vpop.permute.xlu0 %3960
  %3963 = vset.pattern.permute.xlu0 6
  %3964 = vperm.xlu0 %3963, %v1312
  %v3965 = vpop.permute.xlu0 %3964
  %3967 = vset.pattern.permute.xlu0 6
  %3968 = vperm.xlu0 %3967, %v1313
  %v3969 = vpop.permute.xlu0 %3968
  %3971 = vset.pattern.permute.xlu0 6
  %3972 = vperm.xlu0 %3971, %v1314
  %v3973 = vpop.permute.xlu0 %3972
  %3975 = vset.pattern.permute.xlu0 6
  %3976 = vperm.xlu0 %3975, %v1315
  %v3977 = vpop.permute.xlu0 %3976
  %3979 = vset.pattern.permute.xlu0 6
  %3980 = vperm.xlu0 %3979, %v1316
  %v3981 = vpop.permute.xlu0 %3980
  %3983 = vset.pattern.permute.xlu0 6
  %3984 = vperm.xlu0 %3983, %v1317
  %v3985 = vpop.permute.xlu0 %3984
  %3987 = vset.pattern.permute.xlu0 6
  %3988 = vperm.xlu0 %3987, %v1318
  %v3989 = vpop.permute.xlu0 %3988
  %3991 = vset.pattern.permute.xlu0 6
  %3992 = vperm.xlu0 %3991, %v1319
  %v3993 = vpop.permute.xlu0 %3992
  %3995 = vset.pattern.permute.xlu0 6
  %3996 = vperm.xlu0 %3995, %v1320
  %v3997 = vpop.permute.xlu0 %3996
  %3999 = vset.pattern.permute.xlu0 6
  %4000 = vperm.xlu0 %3999, %v1321
  %v4001 = vpop.permute.xlu0 %4000
  %4003 = vset.pattern.permute.xlu0 6
  %4004 = vperm.xlu0 %4003, %v1322
  %v4005 = vpop.permute.xlu0 %4004
  %4007 = vset.pattern.permute.xlu0 6
  %4008 = vperm.xlu0 %4007, %v1323
  %v4009 = vpop.permute.xlu0 %4008
  %4011 = vset.pattern.permute.xlu0 6
  %4012 = vperm.xlu0 %4011, %v1324
  %v4013 = vpop.permute.xlu0 %4012
  %4015 = vset.pattern.permute.xlu0 6
  %4016 = vperm.xlu0 %4015, %v1325
  %v4017 = vpop.permute.xlu0 %4016
  %4019 = vset.pattern.permute.xlu0 6
  %4020 = vperm.xlu0 %4019, %v1326
  %v4021 = vpop.permute.xlu0 %4020
  %4023 = vset.pattern.permute.xlu0 6
  %4024 = vperm.xlu0 %4023, %v1327
  %v4025 = vpop.permute.xlu0 %4024
  %4027 = vset.pattern.permute.xlu0 6
  %4028 = vperm.xlu0 %4027, %v1328
  %v4029 = vpop.permute.xlu0 %4028
  %4031 = vset.pattern.permute.xlu0 6
  %4032 = vperm.xlu0 %4031, %v1329
  %v4033 = vpop.permute.xlu0 %4032
  %4035 = vset.pattern.permute.xlu0 6
  %4036 = vperm.xlu0 %4035, %v1330
  %v4037 = vpop.permute.xlu0 %4036
  %4039 = vset.pattern.permute.xlu0 6
  %4040 = vperm.xlu0 %4039, %v1331
  %v4041 = vpop.permute.xlu0 %4040
  %4043 = vset.pattern.permute.xlu0 6
  %4044 = vperm.xlu0 %4043, %v1332
  %v4045 = vpop.permute.xlu0 %4044
  %v4047 = vmul.f32 %v3727, %v3793
  %v4048 = vmul.f32 %v3728, %v3797
  %v4049 = vmul.f32 %v3729, %v3801
  %v4050 = vmul.f32 %v3730, %v3805
  %v4051 = vmul.f32 %v3731, %v3809
  %v4052 = vmul.f32 %v3732, %v3813
  %v4053 = vmul.f32 %v3733, %v3817
  %v4054 = vmul.f32 %v3734, %v3821
  %v4055 = vmul.f32 %v3735, %v3825
  %v4056 = vmul.f32 %v3736, %v3829
  %v4057 = vmul.f32 %v3737, %v3833
  %v4058 = vmul.f32 %v3738, %v3837
  %v4059 = vmul.f32 %v3739, %v3841
  %v4060 = vmul.f32 %v3740, %v3845
  %v4061 = vmul.f32 %v3741, %v3849
  %v4062 = vmul.f32 %v3742, %v3853
  %v4063 = vmul.f32 %v3743, %v3857
  %v4064 = vmul.f32 %v3744, %v3861
  %v4065 = vmul.f32 %v3745, %v3865
  %v4066 = vmul.f32 %v3746, %v3869
  %v4067 = vmul.f32 %v3747, %v3873
  %v4068 = vmul.f32 %v3748, %v3877
  %v4069 = vmul.f32 %v3749, %v3881
  %v4070 = vmul.f32 %v3750, %v3885
  %v4071 = vmul.f32 %v3751, %v3889
  %v4072 = vmul.f32 %v3752, %v3893
  %v4073 = vmul.f32 %v3753, %v3897
  %v4074 = vmul.f32 %v3754, %v3901
  %v4075 = vmul.f32 %v3755, %v3905
  %v4076 = vmul.f32 %v3756, %v3909
  %v4077 = vmul.f32 %v3757, %v3913
  %v4078 = vmul.f32 %v3758, %v3917
  %v4079 = vmul.f32 %v3759, %v3921
  %v4080 = vmul.f32 %v3760, %v3925
  %v4081 = vmul.f32 %v3761, %v3929
  %v4082 = vmul.f32 %v3762, %v3933
  %v4083 = vmul.f32 %v3763, %v3937
  %v4084 = vmul.f32 %v3764, %v3941
  %v4085 = vmul.f32 %v3765, %v3945
  %v4086 = vmul.f32 %v3766, %v3949
  %v4087 = vmul.f32 %v3767, %v3953
  %v4088 = vmul.f32 %v3768, %v3957
  %v4089 = vmul.f32 %v3769, %v3961
  %v4090 = vmul.f32 %v3770, %v3965
  %v4091 = vmul.f32 %v3771, %v3969
  %v4092 = vmul.f32 %v3772, %v3973
  %v4093 = vmul.f32 %v3773, %v3977
  %v4094 = vmul.f32 %v3774, %v3981
  %v4095 = vmul.f32 %v3775, %v3985
  %v4096 = vmul.f32 %v3776, %v3989
  %v4097 = vmul.f32 %v3777, %v3993
  %v4098 = vmul.f32 %v3778, %v3997
  %v4099 = vmul.f32 %v3779, %v4001
  %v4100 = vmul.f32 %v3780, %v4005
  %v4101 = vmul.f32 %v3781, %v4009
  %v4102 = vmul.f32 %v3782, %v4013
  %v4103 = vmul.f32 %v3783, %v4017
  %v4104 = vmul.f32 %v3784, %v4021
  %v4105 = vmul.f32 %v3785, %v4025
  %v4106 = vmul.f32 %v3786, %v4029
  %v4107 = vmul.f32 %v3787, %v4033
  %v4108 = vmul.f32 %v3788, %v4037
  %v4109 = vmul.f32 %v3789, %v4041
  %v4110 = vmul.f32 %v3790, %v4045
  %v4111 = vadd.f32 %v3658, %v4047
  %v4112 = vadd.f32 %v3659, %v4048
  %v4113 = vadd.f32 %v3660, %v4049
  %v4114 = vadd.f32 %v3661, %v4050
  %v4115 = vadd.f32 %v3662, %v4051
  %v4116 = vadd.f32 %v3663, %v4052
  %v4117 = vadd.f32 %v3664, %v4053
  %v4118 = vadd.f32 %v3665, %v4054
  %v4119 = vadd.f32 %v3666, %v4055
  %v4120 = vadd.f32 %v3667, %v4056
  %v4121 = vadd.f32 %v3668, %v4057
  %v4122 = vadd.f32 %v3669, %v4058
  %v4123 = vadd.f32 %v3670, %v4059
  %v4124 = vadd.f32 %v3671, %v4060
  %v4125 = vadd.f32 %v3672, %v4061
  %v4126 = vadd.f32 %v3673, %v4062
  %v4127 = vadd.f32 %v3674, %v4063
  %v4128 = vadd.f32 %v3675, %v4064
  %v4129 = vadd.f32 %v3676, %v4065
  %v4130 = vadd.f32 %v3677, %v4066
  %v4131 = vadd.f32 %v3678, %v4067
  %v4132 = vadd.f32 %v3679, %v4068
  %v4133 = vadd.f32 %v3680, %v4069
  %v4134 = vadd.f32 %v3681, %v4070
  %v4135 = vadd.f32 %v3682, %v4071
  %v4136 = vadd.f32 %v3683, %v4072
  %v4137 = vadd.f32 %v3684, %v4073
  %v4138 = vadd.f32 %v3685, %v4074
  %v4139 = vadd.f32 %v3686, %v4075
  %v4140 = vadd.f32 %v3687, %v4076
  %v4141 = vadd.f32 %v3688, %v4077
  %v4142 = vadd.f32 %v3689, %v4078
  %v4143 = vadd.f32 %v3690, %v4079
  %v4144 = vadd.f32 %v3691, %v4080
  %v4145 = vadd.f32 %v3692, %v4081
  %v4146 = vadd.f32 %v3693, %v4082
  %v4147 = vadd.f32 %v3694, %v4083
  %v4148 = vadd.f32 %v3695, %v4084
  %v4149 = vadd.f32 %v3696, %v4085
  %v4150 = vadd.f32 %v3697, %v4086
  %v4151 = vadd.f32 %v3698, %v4087
  %v4152 = vadd.f32 %v3699, %v4088
  %v4153 = vadd.f32 %v3700, %v4089
  %v4154 = vadd.f32 %v3701, %v4090
  %v4155 = vadd.f32 %v3702, %v4091
  %v4156 = vadd.f32 %v3703, %v4092
  %v4157 = vadd.f32 %v3704, %v4093
  %v4158 = vadd.f32 %v3705, %v4094
  %v4159 = vadd.f32 %v3706, %v4095
  %v4160 = vadd.f32 %v3707, %v4096
  %v4161 = vadd.f32 %v3708, %v4097
  %v4162 = vadd.f32 %v3709, %v4098
  %v4163 = vadd.f32 %v3710, %v4099
  %v4164 = vadd.f32 %v3711, %v4100
  %v4165 = vadd.f32 %v3712, %v4101
  %v4166 = vadd.f32 %v3713, %v4102
  %v4167 = vadd.f32 %v3714, %v4103
  %v4168 = vadd.f32 %v3715, %v4104
  %v4169 = vadd.f32 %v3716, %v4105
  %v4170 = vadd.f32 %v3717, %v4106
  %v4171 = vadd.f32 %v3718, %v4107
  %v4172 = vadd.f32 %v3719, %v4108
  %v4173 = vadd.f32 %v3720, %v4109
  %v4174 = vadd.f32 %v3721, %v4110
  %v4175 = vld [vmem:[%s3 + $0xa] sm:$0x1]
  %v4176 = vlaneseq
  %v4177 = vshrl.u32 %v4176, 7
  %v4178 = vsub.s32 0, %v4177
  %v4179 = vrot.slane %v4175, %v4178
  %v4180 = vmul.f32 %v938, %v4179
  %v4181 = vmul.f32 %v939, %v4179
  %v4182 = vmul.f32 %v940, %v4179
  %v4183 = vmul.f32 %v941, %v4179
  %v4184 = vmul.f32 %v942, %v4179
  %v4185 = vmul.f32 %v943, %v4179
  %v4186 = vmul.f32 %v944, %v4179
  %v4187 = vmul.f32 %v945, %v4179
  %v4188 = vmul.f32 %v946, %v4179
  %v4189 = vmul.f32 %v947, %v4179
  %v4190 = vmul.f32 %v948, %v4179
  %v4191 = vmul.f32 %v949, %v4179
  %v4192 = vmul.f32 %v950, %v4179
  %v4193 = vmul.f32 %v951, %v4179
  %v4194 = vmul.f32 %v952, %v4179
  %v4195 = vmul.f32 %v953, %v4179
  %v4196 = vmul.f32 %v954, %v4179
  %v4197 = vmul.f32 %v955, %v4179
  %v4198 = vmul.f32 %v956, %v4179
  %v4199 = vmul.f32 %v957, %v4179
  %v4200 = vmul.f32 %v958, %v4179
  %v4201 = vmul.f32 %v959, %v4179
  %v4202 = vmul.f32 %v960, %v4179
  %v4203 = vmul.f32 %v961, %v4179
  %v4204 = vmul.f32 %v962, %v4179
  %v4205 = vmul.f32 %v963, %v4179
  %v4206 = vmul.f32 %v964, %v4179
  %v4207 = vmul.f32 %v965, %v4179
  %v4208 = vmul.f32 %v966, %v4179
  %v4209 = vmul.f32 %v967, %v4179
  %v4210 = vmul.f32 %v968, %v4179
  %v4211 = vmul.f32 %v969, %v4179
  %v4212 = vmul.f32 %v970, %v4179
  %v4213 = vmul.f32 %v971, %v4179
  %v4214 = vmul.f32 %v972, %v4179
  %v4215 = vmul.f32 %v973, %v4179
  %v4216 = vmul.f32 %v974, %v4179
  %v4217 = vmul.f32 %v975, %v4179
  %v4218 = vmul.f32 %v976, %v4179
  %v4219 = vmul.f32 %v977, %v4179
  %v4220 = vmul.f32 %v978, %v4179
  %v4221 = vmul.f32 %v979, %v4179
  %v4222 = vmul.f32 %v980, %v4179
  %v4223 = vmul.f32 %v981, %v4179
  %v4224 = vmul.f32 %v982, %v4179
  %v4225 = vmul.f32 %v983, %v4179
  %v4226 = vmul.f32 %v984, %v4179
  %v4227 = vmul.f32 %v985, %v4179
  %v4228 = vmul.f32 %v986, %v4179
  %v4229 = vmul.f32 %v987, %v4179
  %v4230 = vmul.f32 %v988, %v4179
  %v4231 = vmul.f32 %v989, %v4179
  %v4232 = vmul.f32 %v990, %v4179
  %v4233 = vmul.f32 %v991, %v4179
  %v4234 = vmul.f32 %v992, %v4179
  %v4235 = vmul.f32 %v993, %v4179
  %v4236 = vmul.f32 %v994, %v4179
  %v4237 = vmul.f32 %v995, %v4179
  %v4238 = vmul.f32 %v996, %v4179
  %v4239 = vmul.f32 %v997, %v4179
  %v4240 = vmul.f32 %v998, %v4179
  %v4241 = vmul.f32 %v999, %v4179
  %v4242 = vmul.f32 %v936, %v4179
  %v4243 = vmul.f32 %v937, %v4179
  %4244 = vset.pattern.permute.xlu0 7
  %4245 = vperm.xlu0 %4244, %v1269
  %v4246 = vpop.permute.xlu0 %4245
  %4248 = vset.pattern.permute.xlu0 7
  %4249 = vperm.xlu0 %4248, %v1270
  %v4250 = vpop.permute.xlu0 %4249
  %4252 = vset.pattern.permute.xlu0 7
  %4253 = vperm.xlu0 %4252, %v1271
  %v4254 = vpop.permute.xlu0 %4253
  %4256 = vset.pattern.permute.xlu0 7
  %4257 = vperm.xlu0 %4256, %v1272
  %v4258 = vpop.permute.xlu0 %4257
  %4260 = vset.pattern.permute.xlu0 7
  %4261 = vperm.xlu0 %4260, %v1273
  %v4262 = vpop.permute.xlu0 %4261
  %4264 = vset.pattern.permute.xlu0 7
  %4265 = vperm.xlu0 %4264, %v1274
  %v4266 = vpop.permute.xlu0 %4265
  %4268 = vset.pattern.permute.xlu0 7
  %4269 = vperm.xlu0 %4268, %v1275
  %v4270 = vpop.permute.xlu0 %4269
  %4272 = vset.pattern.permute.xlu0 7
  %4273 = vperm.xlu0 %4272, %v1276
  %v4274 = vpop.permute.xlu0 %4273
  %4276 = vset.pattern.permute.xlu0 7
  %4277 = vperm.xlu0 %4276, %v1277
  %v4278 = vpop.permute.xlu0 %4277
  %4280 = vset.pattern.permute.xlu0 7
  %4281 = vperm.xlu0 %4280, %v1278
  %v4282 = vpop.permute.xlu0 %4281
  %4284 = vset.pattern.permute.xlu0 7
  %4285 = vperm.xlu0 %4284, %v1279
  %v4286 = vpop.permute.xlu0 %4285
  %4288 = vset.pattern.permute.xlu0 7
  %4289 = vperm.xlu0 %4288, %v1280
  %v4290 = vpop.permute.xlu0 %4289
  %4292 = vset.pattern.permute.xlu0 7
  %4293 = vperm.xlu0 %4292, %v1281
  %v4294 = vpop.permute.xlu0 %4293
  %4296 = vset.pattern.permute.xlu0 7
  %4297 = vperm.xlu0 %4296, %v1282
  %v4298 = vpop.permute.xlu0 %4297
  %4300 = vset.pattern.permute.xlu0 7
  %4301 = vperm.xlu0 %4300, %v1283
  %v4302 = vpop.permute.xlu0 %4301
  %4304 = vset.pattern.permute.xlu0 7
  %4305 = vperm.xlu0 %4304, %v1284
  %v4306 = vpop.permute.xlu0 %4305
  %4308 = vset.pattern.permute.xlu0 7
  %4309 = vperm.xlu0 %4308, %v1285
  %v4310 = vpop.permute.xlu0 %4309
  %4312 = vset.pattern.permute.xlu0 7
  %4313 = vperm.xlu0 %4312, %v1286
  %v4314 = vpop.permute.xlu0 %4313
  %4316 = vset.pattern.permute.xlu0 7
  %4317 = vperm.xlu0 %4316, %v1287
  %v4318 = vpop.permute.xlu0 %4317
  %4320 = vset.pattern.permute.xlu0 7
  %4321 = vperm.xlu0 %4320, %v1288
  %v4322 = vpop.permute.xlu0 %4321
  %4324 = vset.pattern.permute.xlu0 7
  %4325 = vperm.xlu0 %4324, %v1289
  %v4326 = vpop.permute.xlu0 %4325
  %4328 = vset.pattern.permute.xlu0 7
  %4329 = vperm.xlu0 %4328, %v1290
  %v4330 = vpop.permute.xlu0 %4329
  %4332 = vset.pattern.permute.xlu0 7
  %4333 = vperm.xlu0 %4332, %v1291
  %v4334 = vpop.permute.xlu0 %4333
  %4336 = vset.pattern.permute.xlu0 7
  %4337 = vperm.xlu0 %4336, %v1292
  %v4338 = vpop.permute.xlu0 %4337
  %4340 = vset.pattern.permute.xlu0 7
  %4341 = vperm.xlu0 %4340, %v1293
  %v4342 = vpop.permute.xlu0 %4341
  %4344 = vset.pattern.permute.xlu0 7
  %4345 = vperm.xlu0 %4344, %v1294
  %v4346 = vpop.permute.xlu0 %4345
  %4348 = vset.pattern.permute.xlu0 7
  %4349 = vperm.xlu0 %4348, %v1295
  %v4350 = vpop.permute.xlu0 %4349
  %4352 = vset.pattern.permute.xlu0 7
  %4353 = vperm.xlu0 %4352, %v1296
  %v4354 = vpop.permute.xlu0 %4353
  %4356 = vset.pattern.permute.xlu0 7
  %4357 = vperm.xlu0 %4356, %v1297
  %v4358 = vpop.permute.xlu0 %4357
  %4360 = vset.pattern.permute.xlu0 7
  %4361 = vperm.xlu0 %4360, %v1298
  %v4362 = vpop.permute.xlu0 %4361
  %4364 = vset.pattern.permute.xlu0 7
  %4365 = vperm.xlu0 %4364, %v1299
  %v4366 = vpop.permute.xlu0 %4365
  %4368 = vset.pattern.permute.xlu0 7
  %4369 = vperm.xlu0 %4368, %v1300
  %v4370 = vpop.permute.xlu0 %4369
  %4372 = vset.pattern.permute.xlu0 7
  %4373 = vperm.xlu0 %4372, %v1301
  %v4374 = vpop.permute.xlu0 %4373
  %4376 = vset.pattern.permute.xlu0 7
  %4377 = vperm.xlu0 %4376, %v1302
  %v4378 = vpop.permute.xlu0 %4377
  %4380 = vset.pattern.permute.xlu0 7
  %4381 = vperm.xlu0 %4380, %v1303
  %v4382 = vpop.permute.xlu0 %4381
  %4384 = vset.pattern.permute.xlu0 7
  %4385 = vperm.xlu0 %4384, %v1304
  %v4386 = vpop.permute.xlu0 %4385
  %4388 = vset.pattern.permute.xlu0 7
  %4389 = vperm.xlu0 %4388, %v1305
  %v4390 = vpop.permute.xlu0 %4389
  %4392 = vset.pattern.permute.xlu0 7
  %4393 = vperm.xlu0 %4392, %v1306
  %v4394 = vpop.permute.xlu0 %4393
  %4396 = vset.pattern.permute.xlu0 7
  %4397 = vperm.xlu0 %4396, %v1307
  %v4398 = vpop.permute.xlu0 %4397
  %4400 = vset.pattern.permute.xlu0 7
  %4401 = vperm.xlu0 %4400, %v1308
  %v4402 = vpop.permute.xlu0 %4401
  %4404 = vset.pattern.permute.xlu0 7
  %4405 = vperm.xlu0 %4404, %v1309
  %v4406 = vpop.permute.xlu0 %4405
  %4408 = vset.pattern.permute.xlu0 7
  %4409 = vperm.xlu0 %4408, %v1310
  %v4410 = vpop.permute.xlu0 %4409
  %4412 = vset.pattern.permute.xlu0 7
  %4413 = vperm.xlu0 %4412, %v1311
  %v4414 = vpop.permute.xlu0 %4413
  %4416 = vset.pattern.permute.xlu0 7
  %4417 = vperm.xlu0 %4416, %v1312
  %v4418 = vpop.permute.xlu0 %4417
  %4420 = vset.pattern.permute.xlu0 7
  %4421 = vperm.xlu0 %4420, %v1313
  %v4422 = vpop.permute.xlu0 %4421
  %4424 = vset.pattern.permute.xlu0 7
  %4425 = vperm.xlu0 %4424, %v1314
  %v4426 = vpop.permute.xlu0 %4425
  %4428 = vset.pattern.permute.xlu0 7
  %4429 = vperm.xlu0 %4428, %v1315
  %v4430 = vpop.permute.xlu0 %4429
  %4432 = vset.pattern.permute.xlu0 7
  %4433 = vperm.xlu0 %4432, %v1316
  %v4434 = vpop.permute.xlu0 %4433
  %4436 = vset.pattern.permute.xlu0 7
  %4437 = vperm.xlu0 %4436, %v1317
  %v4438 = vpop.permute.xlu0 %4437
  %4440 = vset.pattern.permute.xlu0 7
  %4441 = vperm.xlu0 %4440, %v1318
  %v4442 = vpop.permute.xlu0 %4441
  %4444 = vset.pattern.permute.xlu0 7
  %4445 = vperm.xlu0 %4444, %v1319
  %v4446 = vpop.permute.xlu0 %4445
  %4448 = vset.pattern.permute.xlu0 7
  %4449 = vperm.xlu0 %4448, %v1320
  %v4450 = vpop.permute.xlu0 %4449
  %4452 = vset.pattern.permute.xlu0 7
  %4453 = vperm.xlu0 %4452, %v1321
  %v4454 = vpop.permute.xlu0 %4453
  %4456 = vset.pattern.permute.xlu0 7
  %4457 = vperm.xlu0 %4456, %v1322
  %v4458 = vpop.permute.xlu0 %4457
  %4460 = vset.pattern.permute.xlu0 7
  %4461 = vperm.xlu0 %4460, %v1323
  %v4462 = vpop.permute.xlu0 %4461
  %4464 = vset.pattern.permute.xlu0 7
  %4465 = vperm.xlu0 %4464, %v1324
  %v4466 = vpop.permute.xlu0 %4465
  %4468 = vset.pattern.permute.xlu0 7
  %4469 = vperm.xlu0 %4468, %v1325
  %v4470 = vpop.permute.xlu0 %4469
  %4472 = vset.pattern.permute.xlu0 7
  %4473 = vperm.xlu0 %4472, %v1326
  %v4474 = vpop.permute.xlu0 %4473
  %4476 = vset.pattern.permute.xlu0 7
  %4477 = vperm.xlu0 %4476, %v1327
  %v4478 = vpop.permute.xlu0 %4477
  %4480 = vset.pattern.permute.xlu0 7
  %4481 = vperm.xlu0 %4480, %v1328
  %v4482 = vpop.permute.xlu0 %4481
  %4484 = vset.pattern.permute.xlu0 7
  %4485 = vperm.xlu0 %4484, %v1329
  %v4486 = vpop.permute.xlu0 %4485
  %4488 = vset.pattern.permute.xlu0 7
  %4489 = vperm.xlu0 %4488, %v1330
  %v4490 = vpop.permute.xlu0 %4489
  %4492 = vset.pattern.permute.xlu0 7
  %4493 = vperm.xlu0 %4492, %v1331
  %v4494 = vpop.permute.xlu0 %4493
  %4496 = vset.pattern.permute.xlu0 7
  %4497 = vperm.xlu0 %4496, %v1332
  %v4498 = vpop.permute.xlu0 %4497
  %v4500 = vmul.f32 %v4180, %v4246
  %v4501 = vmul.f32 %v4181, %v4250
  %v4502 = vmul.f32 %v4182, %v4254
  %v4503 = vmul.f32 %v4183, %v4258
  %v4504 = vmul.f32 %v4184, %v4262
  %v4505 = vmul.f32 %v4185, %v4266
  %v4506 = vmul.f32 %v4186, %v4270
  %v4507 = vmul.f32 %v4187, %v4274
  %v4508 = vmul.f32 %v4188, %v4278
  %v4509 = vmul.f32 %v4189, %v4282
  %v4510 = vmul.f32 %v4190, %v4286
  %v4511 = vmul.f32 %v4191, %v4290
  %v4512 = vmul.f32 %v4192, %v4294
  %v4513 = vmul.f32 %v4193, %v4298
  %v4514 = vmul.f32 %v4194, %v4302
  %v4515 = vmul.f32 %v4195, %v4306
  %v4516 = vmul.f32 %v4196, %v4310
  %v4517 = vmul.f32 %v4197, %v4314
  %v4518 = vmul.f32 %v4198, %v4318
  %v4519 = vmul.f32 %v4199, %v4322
  %v4520 = vmul.f32 %v4200, %v4326
  %v4521 = vmul.f32 %v4201, %v4330
  %v4522 = vmul.f32 %v4202, %v4334
  %v4523 = vmul.f32 %v4203, %v4338
  %v4524 = vmul.f32 %v4204, %v4342
  %v4525 = vmul.f32 %v4205, %v4346
  %v4526 = vmul.f32 %v4206, %v4350
  %v4527 = vmul.f32 %v4207, %v4354
  %v4528 = vmul.f32 %v4208, %v4358
  %v4529 = vmul.f32 %v4209, %v4362
  %v4530 = vmul.f32 %v4210, %v4366
  %v4531 = vmul.f32 %v4211, %v4370
  %v4532 = vmul.f32 %v4212, %v4374
  %v4533 = vmul.f32 %v4213, %v4378
  %v4534 = vmul.f32 %v4214, %v4382
  %v4535 = vmul.f32 %v4215, %v4386
  %v4536 = vmul.f32 %v4216, %v4390
  %v4537 = vmul.f32 %v4217, %v4394
  %v4538 = vmul.f32 %v4218, %v4398
  %v4539 = vmul.f32 %v4219, %v4402
  %v4540 = vmul.f32 %v4220, %v4406
  %v4541 = vmul.f32 %v4221, %v4410
  %v4542 = vmul.f32 %v4222, %v4414
  %v4543 = vmul.f32 %v4223, %v4418
  %v4544 = vmul.f32 %v4224, %v4422
  %v4545 = vmul.f32 %v4225, %v4426
  %v4546 = vmul.f32 %v4226, %v4430
  %v4547 = vmul.f32 %v4227, %v4434
  %v4548 = vmul.f32 %v4228, %v4438
  %v4549 = vmul.f32 %v4229, %v4442
  %v4550 = vmul.f32 %v4230, %v4446
  %v4551 = vmul.f32 %v4231, %v4450
  %v4552 = vmul.f32 %v4232, %v4454
  %v4553 = vmul.f32 %v4233, %v4458
  %v4554 = vmul.f32 %v4234, %v4462
  %v4555 = vmul.f32 %v4235, %v4466
  %v4556 = vmul.f32 %v4236, %v4470
  %v4557 = vmul.f32 %v4237, %v4474
  %v4558 = vmul.f32 %v4238, %v4478
  %v4559 = vmul.f32 %v4239, %v4482
  %v4560 = vmul.f32 %v4240, %v4486
  %v4561 = vmul.f32 %v4241, %v4490
  %v4562 = vmul.f32 %v4242, %v4494
  %v4563 = vmul.f32 %v4243, %v4498
  %v4564 = vadd.f32 %v4111, %v4500
  %v4565 = vadd.f32 %v4112, %v4501
  %v4566 = vadd.f32 %v4113, %v4502
  %v4567 = vadd.f32 %v4114, %v4503
  %v4568 = vadd.f32 %v4115, %v4504
  %v4569 = vadd.f32 %v4116, %v4505
  %v4570 = vadd.f32 %v4117, %v4506
  %v4571 = vadd.f32 %v4118, %v4507
  %v4572 = vadd.f32 %v4119, %v4508
  %v4573 = vadd.f32 %v4120, %v4509
  %v4574 = vadd.f32 %v4121, %v4510
  %v4575 = vadd.f32 %v4122, %v4511
  %v4576 = vadd.f32 %v4123, %v4512
  %v4577 = vadd.f32 %v4124, %v4513
  %v4578 = vadd.f32 %v4125, %v4514
  %v4579 = vadd.f32 %v4126, %v4515
  %v4580 = vadd.f32 %v4127, %v4516
  %v4581 = vadd.f32 %v4128, %v4517
  %v4582 = vadd.f32 %v4129, %v4518
  %v4583 = vadd.f32 %v4130, %v4519
  %v4584 = vadd.f32 %v4131, %v4520
  %v4585 = vadd.f32 %v4132, %v4521
  %v4586 = vadd.f32 %v4133, %v4522
  %v4587 = vadd.f32 %v4134, %v4523
  %v4588 = vadd.f32 %v4135, %v4524
  %v4589 = vadd.f32 %v4136, %v4525
  %v4590 = vadd.f32 %v4137, %v4526
  %v4591 = vadd.f32 %v4138, %v4527
  %v4592 = vadd.f32 %v4139, %v4528
  %v4593 = vadd.f32 %v4140, %v4529
  %v4594 = vadd.f32 %v4141, %v4530
  %v4595 = vadd.f32 %v4142, %v4531
  %v4596 = vadd.f32 %v4143, %v4532
  %v4597 = vadd.f32 %v4144, %v4533
  %v4598 = vadd.f32 %v4145, %v4534
  %v4599 = vadd.f32 %v4146, %v4535
  %v4600 = vadd.f32 %v4147, %v4536
  %v4601 = vadd.f32 %v4148, %v4537
  %v4602 = vadd.f32 %v4149, %v4538
  %v4603 = vadd.f32 %v4150, %v4539
  %v4604 = vadd.f32 %v4151, %v4540
  %v4605 = vadd.f32 %v4152, %v4541
  %v4606 = vadd.f32 %v4153, %v4542
  %v4607 = vadd.f32 %v4154, %v4543
  %v4608 = vadd.f32 %v4155, %v4544
  %v4609 = vadd.f32 %v4156, %v4545
  %v4610 = vadd.f32 %v4157, %v4546
  %v4611 = vadd.f32 %v4158, %v4547
  %v4612 = vadd.f32 %v4159, %v4548
  %v4613 = vadd.f32 %v4160, %v4549
  %v4614 = vadd.f32 %v4161, %v4550
  %v4615 = vadd.f32 %v4162, %v4551
  %v4616 = vadd.f32 %v4163, %v4552
  %v4617 = vadd.f32 %v4164, %v4553
  %v4618 = vadd.f32 %v4165, %v4554
  %v4619 = vadd.f32 %v4166, %v4555
  %v4620 = vadd.f32 %v4167, %v4556
  %v4621 = vadd.f32 %v4168, %v4557
  %v4622 = vadd.f32 %v4169, %v4558
  %v4623 = vadd.f32 %v4170, %v4559
  %v4624 = vadd.f32 %v4171, %v4560
  %v4625 = vadd.f32 %v4172, %v4561
  %v4626 = vadd.f32 %v4173, %v4562
  %v4627 = vadd.f32 %v4174, %v4563
  %v4628 = vld [vmem:[%s3 + $0xb] sm:$0x1]
  %v4629 = vlaneseq
  %v4630 = vshrl.u32 %v4629, 7
  %v4631 = vsub.s32 0, %v4630
  %v4632 = vrot.slane %v4628, %v4631
  %v4633 = vmul.f32 %v2359, %v4632
  %v4634 = vmul.f32 %v2358, %v4632
  %v4635 = vmul.f32 %v2357, %v4632
  %v4636 = vmul.f32 %v2356, %v4632
  %v4637 = vmul.f32 %v2355, %v4632
  %v4638 = vmul.f32 %v2354, %v4632
  %v4639 = vmul.f32 %v2353, %v4632
  %v4640 = vmul.f32 %v2352, %v4632
  %v4641 = vmul.f32 %v2351, %v4632
  %v4642 = vmul.f32 %v2350, %v4632
  %v4643 = vmul.f32 %v2349, %v4632
  %v4644 = vmul.f32 %v2348, %v4632
  %v4645 = vmul.f32 %v2347, %v4632
  %v4646 = vmul.f32 %v2346, %v4632
  %v4647 = vmul.f32 %v2345, %v4632
  %v4648 = vmul.f32 %v2344, %v4632
  %v4649 = vmul.f32 %v2343, %v4632
  %v4650 = vmul.f32 %v2342, %v4632
  %v4651 = vmul.f32 %v2341, %v4632
  %v4652 = vmul.f32 %v2340, %v4632
  %v4653 = vmul.f32 %v2339, %v4632
  %v4654 = vmul.f32 %v2338, %v4632
  %v4655 = vmul.f32 %v2337, %v4632
  %v4656 = vmul.f32 %v2336, %v4632
  %v4657 = vmul.f32 %v2335, %v4632
  %v4658 = vmul.f32 %v2334, %v4632
  %v4659 = vmul.f32 %v2333, %v4632
  %v4660 = vmul.f32 %v2332, %v4632
  %v4661 = vmul.f32 %v2331, %v4632
  %v4662 = vmul.f32 %v2330, %v4632
  %v4663 = vmul.f32 %v2329, %v4632
  %v4664 = vmul.f32 %v2328, %v4632
  %v4665 = vmul.f32 %v2327, %v4632
  %v4666 = vmul.f32 %v2326, %v4632
  %v4667 = vmul.f32 %v2325, %v4632
  %v4668 = vmul.f32 %v2324, %v4632
  %v4669 = vmul.f32 %v2323, %v4632
  %v4670 = vmul.f32 %v2322, %v4632
  %v4671 = vmul.f32 %v2321, %v4632
  %v4672 = vmul.f32 %v2320, %v4632
  %v4673 = vmul.f32 %v2319, %v4632
  %v4674 = vmul.f32 %v2318, %v4632
  %v4675 = vmul.f32 %v2317, %v4632
  %v4676 = vmul.f32 %v2316, %v4632
  %v4677 = vmul.f32 %v2315, %v4632
  %v4678 = vmul.f32 %v2314, %v4632
  %v4679 = vmul.f32 %v2313, %v4632
  %v4680 = vmul.f32 %v2312, %v4632
  %v4681 = vmul.f32 %v2311, %v4632
  %v4682 = vmul.f32 %v2310, %v4632
  %v4683 = vmul.f32 %v2309, %v4632
  %v4684 = vmul.f32 %v2308, %v4632
  %v4685 = vmul.f32 %v2307, %v4632
  %v4686 = vmul.f32 %v2306, %v4632
  %v4687 = vmul.f32 %v2305, %v4632
  %v4688 = vmul.f32 %v2304, %v4632
  %v4689 = vmul.f32 %v2303, %v4632
  %v4690 = vmul.f32 %v2302, %v4632
  %v4691 = vmul.f32 %v2301, %v4632
  %v4692 = vmul.f32 %v2300, %v4632
  %v4693 = vmul.f32 %v2299, %v4632
  %v4694 = vmul.f32 %v2362, %v4632
  %v4695 = vmul.f32 %v2361, %v4632
  %v4696 = vmul.f32 %v2360, %v4632
  %4697 = vset.pattern.permute.xlu0 8
  %4698 = vperm.xlu0 %4697, %v1269
  %v4699 = vpop.permute.xlu0 %4698
  %4701 = vset.pattern.permute.xlu0 8
  %4702 = vperm.xlu0 %4701, %v1270
  %v4703 = vpop.permute.xlu0 %4702
  %4705 = vset.pattern.permute.xlu0 8
  %4706 = vperm.xlu0 %4705, %v1271
  %v4707 = vpop.permute.xlu0 %4706
  %4709 = vset.pattern.permute.xlu0 8
  %4710 = vperm.xlu0 %4709, %v1272
  %v4711 = vpop.permute.xlu0 %4710
  %4713 = vset.pattern.permute.xlu0 8
  %4714 = vperm.xlu0 %4713, %v1273
  %v4715 = vpop.permute.xlu0 %4714
  %4717 = vset.pattern.permute.xlu0 8
  %4718 = vperm.xlu0 %4717, %v1274
  %v4719 = vpop.permute.xlu0 %4718
  %4721 = vset.pattern.permute.xlu0 8
  %4722 = vperm.xlu0 %4721, %v1275
  %v4723 = vpop.permute.xlu0 %4722
  %4725 = vset.pattern.permute.xlu0 8
  %4726 = vperm.xlu0 %4725, %v1276
  %v4727 = vpop.permute.xlu0 %4726
  %4729 = vset.pattern.permute.xlu0 8
  %4730 = vperm.xlu0 %4729, %v1277
  %v4731 = vpop.permute.xlu0 %4730
  %4733 = vset.pattern.permute.xlu0 8
  %4734 = vperm.xlu0 %4733, %v1278
  %v4735 = vpop.permute.xlu0 %4734
  %4737 = vset.pattern.permute.xlu0 8
  %4738 = vperm.xlu0 %4737, %v1279
  %v4739 = vpop.permute.xlu0 %4738
  %4741 = vset.pattern.permute.xlu0 8
  %4742 = vperm.xlu0 %4741, %v1280
  %v4743 = vpop.permute.xlu0 %4742
  %4745 = vset.pattern.permute.xlu0 8
  %4746 = vperm.xlu0 %4745, %v1281
  %v4747 = vpop.permute.xlu0 %4746
  %4749 = vset.pattern.permute.xlu0 8
  %4750 = vperm.xlu0 %4749, %v1282
  %v4751 = vpop.permute.xlu0 %4750
  %4753 = vset.pattern.permute.xlu0 8
  %4754 = vperm.xlu0 %4753, %v1283
  %v4755 = vpop.permute.xlu0 %4754
  %4757 = vset.pattern.permute.xlu0 8
  %4758 = vperm.xlu0 %4757, %v1284
  %v4759 = vpop.permute.xlu0 %4758
  %4761 = vset.pattern.permute.xlu0 8
  %4762 = vperm.xlu0 %4761, %v1285
  %v4763 = vpop.permute.xlu0 %4762
  %4765 = vset.pattern.permute.xlu0 8
  %4766 = vperm.xlu0 %4765, %v1286
  %v4767 = vpop.permute.xlu0 %4766
  %4769 = vset.pattern.permute.xlu0 8
  %4770 = vperm.xlu0 %4769, %v1287
  %v4771 = vpop.permute.xlu0 %4770
  %4773 = vset.pattern.permute.xlu0 8
  %4774 = vperm.xlu0 %4773, %v1288
  %v4775 = vpop.permute.xlu0 %4774
  %4777 = vset.pattern.permute.xlu0 8
  %4778 = vperm.xlu0 %4777, %v1289
  %v4779 = vpop.permute.xlu0 %4778
  %4781 = vset.pattern.permute.xlu0 8
  %4782 = vperm.xlu0 %4781, %v1290
  %v4783 = vpop.permute.xlu0 %4782
  %4785 = vset.pattern.permute.xlu0 8
  %4786 = vperm.xlu0 %4785, %v1291
  %v4787 = vpop.permute.xlu0 %4786
  %4789 = vset.pattern.permute.xlu0 8
  %4790 = vperm.xlu0 %4789, %v1292
  %v4791 = vpop.permute.xlu0 %4790
  %4793 = vset.pattern.permute.xlu0 8
  %4794 = vperm.xlu0 %4793, %v1293
  %v4795 = vpop.permute.xlu0 %4794
  %4797 = vset.pattern.permute.xlu0 8
  %4798 = vperm.xlu0 %4797, %v1294
  %v4799 = vpop.permute.xlu0 %4798
  %4801 = vset.pattern.permute.xlu0 8
  %4802 = vperm.xlu0 %4801, %v1295
  %v4803 = vpop.permute.xlu0 %4802
  %4805 = vset.pattern.permute.xlu0 8
  %4806 = vperm.xlu0 %4805, %v1296
  %v4807 = vpop.permute.xlu0 %4806
  %4809 = vset.pattern.permute.xlu0 8
  %4810 = vperm.xlu0 %4809, %v1297
  %v4811 = vpop.permute.xlu0 %4810
  %4813 = vset.pattern.permute.xlu0 8
  %4814 = vperm.xlu0 %4813, %v1298
  %v4815 = vpop.permute.xlu0 %4814
  %4817 = vset.pattern.permute.xlu0 8
  %4818 = vperm.xlu0 %4817, %v1299
  %v4819 = vpop.permute.xlu0 %4818
  %4821 = vset.pattern.permute.xlu0 8
  %4822 = vperm.xlu0 %4821, %v1300
  %v4823 = vpop.permute.xlu0 %4822
  %4825 = vset.pattern.permute.xlu0 8
  %4826 = vperm.xlu0 %4825, %v1301
  %v4827 = vpop.permute.xlu0 %4826
  %4829 = vset.pattern.permute.xlu0 8
  %4830 = vperm.xlu0 %4829, %v1302
  %v4831 = vpop.permute.xlu0 %4830
  %4833 = vset.pattern.permute.xlu0 8
  %4834 = vperm.xlu0 %4833, %v1303
  %v4835 = vpop.permute.xlu0 %4834
  %4837 = vset.pattern.permute.xlu0 8
  %4838 = vperm.xlu0 %4837, %v1304
  %v4839 = vpop.permute.xlu0 %4838
  %4841 = vset.pattern.permute.xlu0 8
  %4842 = vperm.xlu0 %4841, %v1305
  %v4843 = vpop.permute.xlu0 %4842
  %4845 = vset.pattern.permute.xlu0 8
  %4846 = vperm.xlu0 %4845, %v1306
  %v4847 = vpop.permute.xlu0 %4846
  %4849 = vset.pattern.permute.xlu0 8
  %4850 = vperm.xlu0 %4849, %v1307
  %v4851 = vpop.permute.xlu0 %4850
  %4853 = vset.pattern.permute.xlu0 8
  %4854 = vperm.xlu0 %4853, %v1308
  %v4855 = vpop.permute.xlu0 %4854
  %4857 = vset.pattern.permute.xlu0 8
  %4858 = vperm.xlu0 %4857, %v1309
  %v4859 = vpop.permute.xlu0 %4858
  %4861 = vset.pattern.permute.xlu0 8
  %4862 = vperm.xlu0 %4861, %v1310
  %v4863 = vpop.permute.xlu0 %4862
  %4865 = vset.pattern.permute.xlu0 8
  %4866 = vperm.xlu0 %4865, %v1311
  %v4867 = vpop.permute.xlu0 %4866
  %4869 = vset.pattern.permute.xlu0 8
  %4870 = vperm.xlu0 %4869, %v1312
  %v4871 = vpop.permute.xlu0 %4870
  %4873 = vset.pattern.permute.xlu0 8
  %4874 = vperm.xlu0 %4873, %v1313
  %v4875 = vpop.permute.xlu0 %4874
  %4877 = vset.pattern.permute.xlu0 8
  %4878 = vperm.xlu0 %4877, %v1314
  %v4879 = vpop.permute.xlu0 %4878
  %4881 = vset.pattern.permute.xlu0 8
  %4882 = vperm.xlu0 %4881, %v1315
  %v4883 = vpop.permute.xlu0 %4882
  %4885 = vset.pattern.permute.xlu0 8
  %4886 = vperm.xlu0 %4885, %v1316
  %v4887 = vpop.permute.xlu0 %4886
  %4889 = vset.pattern.permute.xlu0 8
  %4890 = vperm.xlu0 %4889, %v1317
  %v4891 = vpop.permute.xlu0 %4890
  %4893 = vset.pattern.permute.xlu0 8
  %4894 = vperm.xlu0 %4893, %v1318
  %v4895 = vpop.permute.xlu0 %4894
  %4897 = vset.pattern.permute.xlu0 8
  %4898 = vperm.xlu0 %4897, %v1319
  %v4899 = vpop.permute.xlu0 %4898
  %4901 = vset.pattern.permute.xlu0 8
  %4902 = vperm.xlu0 %4901, %v1320
  %v4903 = vpop.permute.xlu0 %4902
  %4905 = vset.pattern.permute.xlu0 8
  %4906 = vperm.xlu0 %4905, %v1321
  %v4907 = vpop.permute.xlu0 %4906
  %4909 = vset.pattern.permute.xlu0 8
  %4910 = vperm.xlu0 %4909, %v1322
  %v4911 = vpop.permute.xlu0 %4910
  %4913 = vset.pattern.permute.xlu0 8
  %4914 = vperm.xlu0 %4913, %v1323
  %v4915 = vpop.permute.xlu0 %4914
  %4917 = vset.pattern.permute.xlu0 8
  %4918 = vperm.xlu0 %4917, %v1324
  %v4919 = vpop.permute.xlu0 %4918
  %4921 = vset.pattern.permute.xlu0 8
  %4922 = vperm.xlu0 %4921, %v1325
  %v4923 = vpop.permute.xlu0 %4922
  %4925 = vset.pattern.permute.xlu0 8
  %4926 = vperm.xlu0 %4925, %v1326
  %v4927 = vpop.permute.xlu0 %4926
  %4929 = vset.pattern.permute.xlu0 8
  %4930 = vperm.xlu0 %4929, %v1327
  %v4931 = vpop.permute.xlu0 %4930
  %4933 = vset.pattern.permute.xlu0 8
  %4934 = vperm.xlu0 %4933, %v1328
  %v4935 = vpop.permute.xlu0 %4934
  %4937 = vset.pattern.permute.xlu0 8
  %4938 = vperm.xlu0 %4937, %v1329
  %v4939 = vpop.permute.xlu0 %4938
  %4941 = vset.pattern.permute.xlu0 8
  %4942 = vperm.xlu0 %4941, %v1330
  %v4943 = vpop.permute.xlu0 %4942
  %4945 = vset.pattern.permute.xlu0 8
  %4946 = vperm.xlu0 %4945, %v1331
  %v4947 = vpop.permute.xlu0 %4946
  %4949 = vset.pattern.permute.xlu0 8
  %4950 = vperm.xlu0 %4949, %v1332
  %v4951 = vpop.permute.xlu0 %4950
  %v4953 = vmul.f32 %v4633, %v4699
  %v4954 = vmul.f32 %v4634, %v4703
  %v4955 = vmul.f32 %v4635, %v4707
  %v4956 = vmul.f32 %v4636, %v4711
  %v4957 = vmul.f32 %v4637, %v4715
  %v4958 = vmul.f32 %v4638, %v4719
  %v4959 = vmul.f32 %v4639, %v4723
  %v4960 = vmul.f32 %v4640, %v4727
  %v4961 = vmul.f32 %v4641, %v4731
  %v4962 = vmul.f32 %v4642, %v4735
  %v4963 = vmul.f32 %v4643, %v4739
  %v4964 = vmul.f32 %v4644, %v4743
  %v4965 = vmul.f32 %v4645, %v4747
  %v4966 = vmul.f32 %v4646, %v4751
  %v4967 = vmul.f32 %v4647, %v4755
  %v4968 = vmul.f32 %v4648, %v4759
  %v4969 = vmul.f32 %v4649, %v4763
  %v4970 = vmul.f32 %v4650, %v4767
  %v4971 = vmul.f32 %v4651, %v4771
  %v4972 = vmul.f32 %v4652, %v4775
  %v4973 = vmul.f32 %v4653, %v4779
  %v4974 = vmul.f32 %v4654, %v4783
  %v4975 = vmul.f32 %v4655, %v4787
  %v4976 = vmul.f32 %v4656, %v4791
  %v4977 = vmul.f32 %v4657, %v4795
  %v4978 = vmul.f32 %v4658, %v4799
  %v4979 = vmul.f32 %v4659, %v4803
  %v4980 = vmul.f32 %v4660, %v4807
  %v4981 = vmul.f32 %v4661, %v4811
  %v4982 = vmul.f32 %v4662, %v4815
  %v4983 = vmul.f32 %v4663, %v4819
  %v4984 = vmul.f32 %v4664, %v4823
  %v4985 = vmul.f32 %v4665, %v4827
  %v4986 = vmul.f32 %v4666, %v4831
  %v4987 = vmul.f32 %v4667, %v4835
  %v4988 = vmul.f32 %v4668, %v4839
  %v4989 = vmul.f32 %v4669, %v4843
  %v4990 = vmul.f32 %v4670, %v4847
  %v4991 = vmul.f32 %v4671, %v4851
  %v4992 = vmul.f32 %v4672, %v4855
  %v4993 = vmul.f32 %v4673, %v4859
  %v4994 = vmul.f32 %v4674, %v4863
  %v4995 = vmul.f32 %v4675, %v4867
  %v4996 = vmul.f32 %v4676, %v4871
  %v4997 = vmul.f32 %v4677, %v4875
  %v4998 = vmul.f32 %v4678, %v4879
  %v4999 = vmul.f32 %v4679, %v4883
  %v5000 = vmul.f32 %v4680, %v4887
  %v5001 = vmul.f32 %v4681, %v4891
  %v5002 = vmul.f32 %v4682, %v4895
  %v5003 = vmul.f32 %v4683, %v4899
  %v5004 = vmul.f32 %v4684, %v4903
  %v5005 = vmul.f32 %v4685, %v4907
  %v5006 = vmul.f32 %v4686, %v4911
  %v5007 = vmul.f32 %v4687, %v4915
  %v5008 = vmul.f32 %v4688, %v4919
  %v5009 = vmul.f32 %v4689, %v4923
  %v5010 = vmul.f32 %v4690, %v4927
  %v5011 = vmul.f32 %v4691, %v4931
  %v5012 = vmul.f32 %v4692, %v4935
  %v5013 = vmul.f32 %v4693, %v4939
  %v5014 = vmul.f32 %v4694, %v4943
  %v5015 = vmul.f32 %v4695, %v4947
  %v5016 = vmul.f32 %v4696, %v4951
  %v5017 = vadd.f32 %v4564, %v4953
  %v5018 = vadd.f32 %v4565, %v4954
  %v5019 = vadd.f32 %v4566, %v4955
  %v5020 = vadd.f32 %v4567, %v4956
  %v5021 = vadd.f32 %v4568, %v4957
  %v5022 = vadd.f32 %v4569, %v4958
  %v5023 = vadd.f32 %v4570, %v4959
  %v5024 = vadd.f32 %v4571, %v4960
  %v5025 = vadd.f32 %v4572, %v4961
  %v5026 = vadd.f32 %v4573, %v4962
  %v5027 = vadd.f32 %v4574, %v4963
  %v5028 = vadd.f32 %v4575, %v4964
  %v5029 = vadd.f32 %v4576, %v4965
  %v5030 = vadd.f32 %v4577, %v4966
  %v5031 = vadd.f32 %v4578, %v4967
  %v5032 = vadd.f32 %v4579, %v4968
  %v5033 = vadd.f32 %v4580, %v4969
  %v5034 = vadd.f32 %v4581, %v4970
  %v5035 = vadd.f32 %v4582, %v4971
  %v5036 = vadd.f32 %v4583, %v4972
  %v5037 = vadd.f32 %v4584, %v4973
  %v5038 = vadd.f32 %v4585, %v4974
  %v5039 = vadd.f32 %v4586, %v4975
  %v5040 = vadd.f32 %v4587, %v4976
  %v5041 = vadd.f32 %v4588, %v4977
  %v5042 = vadd.f32 %v4589, %v4978
  %v5043 = vadd.f32 %v4590, %v4979
  %v5044 = vadd.f32 %v4591, %v4980
  %v5045 = vadd.f32 %v4592, %v4981
  %v5046 = vadd.f32 %v4593, %v4982
  %v5047 = vadd.f32 %v4594, %v4983
  %v5048 = vadd.f32 %v4595, %v4984
  %v5049 = vadd.f32 %v4596, %v4985
  %v5050 = vadd.f32 %v4597, %v4986
  %v5051 = vadd.f32 %v4598, %v4987
  %v5052 = vadd.f32 %v4599, %v4988
  %v5053 = vadd.f32 %v4600, %v4989
  %v5054 = vadd.f32 %v4601, %v4990
  %v5055 = vadd.f32 %v4602, %v4991
  %v5056 = vadd.f32 %v4603, %v4992
  %v5057 = vadd.f32 %v4604, %v4993
  %v5058 = vadd.f32 %v4605, %v4994
  %v5059 = vadd.f32 %v4606, %v4995
  %v5060 = vadd.f32 %v4607, %v4996
  %v5061 = vadd.f32 %v4608, %v4997
  %v5062 = vadd.f32 %v4609, %v4998
  %v5063 = vadd.f32 %v4610, %v4999
  %v5064 = vadd.f32 %v4611, %v5000
  %v5065 = vadd.f32 %v4612, %v5001
  %v5066 = vadd.f32 %v4613, %v5002
  %v5067 = vadd.f32 %v4614, %v5003
  %v5068 = vadd.f32 %v4615, %v5004
  %v5069 = vadd.f32 %v4616, %v5005
  %v5070 = vadd.f32 %v4617, %v5006
  %v5071 = vadd.f32 %v4618, %v5007
  %v5072 = vadd.f32 %v4619, %v5008
  %v5073 = vadd.f32 %v4620, %v5009
  %v5074 = vadd.f32 %v4621, %v5010
  %v5075 = vadd.f32 %v4622, %v5011
  %v5076 = vadd.f32 %v4623, %v5012
  %v5077 = vadd.f32 %v4624, %v5013
  %v5078 = vadd.f32 %v4625, %v5014
  %v5079 = vadd.f32 %v4626, %v5015
  %v5080 = vadd.f32 %v4627, %v5016
  %v5081 = vld [vmem:[%s3 + $0xc] sm:$0x1]
  %v5082 = vlaneseq
  %v5083 = vshrl.u32 %v5082, 7
  %v5084 = vsub.s32 0, %v5083
  %v5085 = vrot.slane %v5081, %v5084
  %v5086 = vadd.f32 %v5017, %v5085
  %v5087 = vadd.f32 %v5018, %v5085
  %v5088 = vadd.f32 %v5019, %v5085
  %v5089 = vadd.f32 %v5020, %v5085
  %v5090 = vadd.f32 %v5021, %v5085
  %v5091 = vadd.f32 %v5022, %v5085
  %v5092 = vadd.f32 %v5023, %v5085
  %v5093 = vadd.f32 %v5024, %v5085
  %v5094 = vadd.f32 %v5025, %v5085
  %v5095 = vadd.f32 %v5026, %v5085
  %v5096 = vadd.f32 %v5027, %v5085
  %v5097 = vadd.f32 %v5028, %v5085
  %v5098 = vadd.f32 %v5029, %v5085
  %v5099 = vadd.f32 %v5030, %v5085
  %v5100 = vadd.f32 %v5031, %v5085
  %v5101 = vadd.f32 %v5032, %v5085
  %v5102 = vadd.f32 %v5033, %v5085
  %v5103 = vadd.f32 %v5034, %v5085
  %v5104 = vadd.f32 %v5035, %v5085
  %v5105 = vadd.f32 %v5036, %v5085
  %v5106 = vadd.f32 %v5037, %v5085
  %v5107 = vadd.f32 %v5038, %v5085
  %v5108 = vadd.f32 %v5039, %v5085
  %v5109 = vadd.f32 %v5040, %v5085
  %v5110 = vadd.f32 %v5041, %v5085
  %v5111 = vadd.f32 %v5042, %v5085
  %v5112 = vadd.f32 %v5043, %v5085
  %v5113 = vadd.f32 %v5044, %v5085
  %v5114 = vadd.f32 %v5045, %v5085
  %v5115 = vadd.f32 %v5046, %v5085
  %v5116 = vadd.f32 %v5047, %v5085
  %v5117 = vadd.f32 %v5048, %v5085
  %v5118 = vadd.f32 %v5049, %v5085
  %v5119 = vadd.f32 %v5050, %v5085
  %v5120 = vadd.f32 %v5051, %v5085
  %v5121 = vadd.f32 %v5052, %v5085
  %v5122 = vadd.f32 %v5053, %v5085
  %v5123 = vadd.f32 %v5054, %v5085
  %v5124 = vadd.f32 %v5055, %v5085
  %v5125 = vadd.f32 %v5056, %v5085
  %v5126 = vadd.f32 %v5057, %v5085
  %v5127 = vadd.f32 %v5058, %v5085
  %v5128 = vadd.f32 %v5059, %v5085
  %v5129 = vadd.f32 %v5060, %v5085
  %v5130 = vadd.f32 %v5061, %v5085
  %v5131 = vadd.f32 %v5062, %v5085
  %v5132 = vadd.f32 %v5063, %v5085
  %v5133 = vadd.f32 %v5064, %v5085
  %v5134 = vadd.f32 %v5065, %v5085
  %v5135 = vadd.f32 %v5066, %v5085
  %v5136 = vadd.f32 %v5067, %v5085
  %v5137 = vadd.f32 %v5068, %v5085
  %v5138 = vadd.f32 %v5069, %v5085
  %v5139 = vadd.f32 %v5070, %v5085
  %v5140 = vadd.f32 %v5071, %v5085
  %v5141 = vadd.f32 %v5072, %v5085
  %v5142 = vadd.f32 %v5073, %v5085
  %v5143 = vadd.f32 %v5074, %v5085
  %v5144 = vadd.f32 %v5075, %v5085
  %v5145 = vadd.f32 %v5076, %v5085
  %v5146 = vadd.f32 %v5077, %v5085
  %v5147 = vadd.f32 %v5078, %v5085
  %v5148 = vadd.f32 %v5079, %v5085
  %v5149 = vadd.f32 %v5080, %v5085
  %v5150 = vld [vmem:[%s3 + $0xd] sm:$0x1]
  %v5151 = vld [vmem:[%s3 + $0xe] sm:$0x1]
  %v5152 = vadd.f32 %v5086, %v5087
  %v5153 = vadd.f32 %v5152, %v5088
  %v5154 = vadd.f32 %v5153, %v5089
  %v5155 = vadd.f32 %v5154, %v5090
  %v5156 = vadd.f32 %v5155, %v5091
  %v5157 = vadd.f32 %v5156, %v5092
  %v5158 = vadd.f32 %v5157, %v5093
  %v5159 = vadd.f32 %v5158, %v5094
  %v5160 = vadd.f32 %v5159, %v5095
  %v5161 = vadd.f32 %v5160, %v5096
  %v5162 = vadd.f32 %v5161, %v5097
  %v5163 = vadd.f32 %v5162, %v5098
  %v5164 = vadd.f32 %v5163, %v5099
  %v5165 = vadd.f32 %v5164, %v5100
  %v5166 = vadd.f32 %v5165, %v5101
  %v5167 = vadd.f32 %v5166, %v5102
  %v5168 = vadd.f32 %v5167, %v5103
  %v5169 = vadd.f32 %v5168, %v5104
  %v5170 = vadd.f32 %v5169, %v5105
  %v5171 = vadd.f32 %v5170, %v5106
  %v5172 = vadd.f32 %v5171, %v5107
  %v5173 = vadd.f32 %v5172, %v5108
  %v5174 = vadd.f32 %v5173, %v5109
  %v5175 = vadd.f32 %v5174, %v5110
  %v5176 = vadd.f32 %v5175, %v5111
  %v5177 = vadd.f32 %v5176, %v5112
  %v5178 = vadd.f32 %v5177, %v5113
  %v5179 = vadd.f32 %v5178, %v5114
  %v5180 = vadd.f32 %v5179, %v5115
  %v5181 = vadd.f32 %v5180, %v5116
  %v5182 = vadd.f32 %v5181, %v5117
  %v5183 = vadd.f32 %v5182, %v5118
  %v5184 = vadd.f32 %v5183, %v5119
  %v5185 = vadd.f32 %v5184, %v5120
  %v5186 = vadd.f32 %v5185, %v5121
  %v5187 = vadd.f32 %v5186, %v5122
  %v5188 = vadd.f32 %v5187, %v5123
  %v5189 = vadd.f32 %v5188, %v5124
  %v5190 = vadd.f32 %v5189, %v5125
  %v5191 = vadd.f32 %v5190, %v5126
  %v5192 = vadd.f32 %v5191, %v5127
  %v5193 = vadd.f32 %v5192, %v5128
  %v5194 = vadd.f32 %v5193, %v5129
  %v5195 = vadd.f32 %v5194, %v5130
  %v5196 = vadd.f32 %v5195, %v5131
  %v5197 = vadd.f32 %v5196, %v5132
  %v5198 = vadd.f32 %v5197, %v5133
  %v5199 = vadd.f32 %v5198, %v5134
  %v5200 = vadd.f32 %v5199, %v5135
  %v5201 = vadd.f32 %v5200, %v5136
  %v5202 = vadd.f32 %v5201, %v5137
  %v5203 = vadd.f32 %v5202, %v5138
  %v5204 = vadd.f32 %v5203, %v5139
  %v5205 = vadd.f32 %v5204, %v5140
  %v5206 = vadd.f32 %v5205, %v5141
  %v5207 = vadd.f32 %v5206, %v5142
  %v5208 = vadd.f32 %v5207, %v5143
  %v5209 = vadd.f32 %v5208, %v5144
  %v5210 = vadd.f32 %v5209, %v5145
  %v5211 = vadd.f32 %v5210, %v5146
  %v5212 = vadd.f32 %v5211, %v5147
  %v5213 = vadd.f32 %v5212, %v5148
  %v5214 = vadd.f32 %v5213, %v5149
  %v5215 = vrot.slane %v5214, 4
  %v5216 = vadd.f32 %v5214, %v5215
  %v5217 = vrot.slane %v5216, 2
  %v5218 = vadd.f32 %v5216, %v5217
  %v5219 = vrot.slane %v5218, 1
  %v5220 = vadd.f32 %v5218, %v5219
  %v5221 = vmul.f32 %v5220, 0.001953125
  %v5222 = vsub.f32 %v5086, %v5221
  %v5223 = vsub.f32 %v5087, %v5221
  %v5224 = vsub.f32 %v5088, %v5221
  %v5225 = vsub.f32 %v5089, %v5221
  %v5226 = vsub.f32 %v5090, %v5221
  %v5227 = vsub.f32 %v5091, %v5221
  %v5228 = vsub.f32 %v5092, %v5221
  %v5229 = vsub.f32 %v5093, %v5221
  %v5230 = vsub.f32 %v5094, %v5221
  %v5231 = vsub.f32 %v5095, %v5221
  %v5232 = vsub.f32 %v5096, %v5221
  %v5233 = vsub.f32 %v5097, %v5221
  %v5234 = vsub.f32 %v5098, %v5221
  %v5235 = vsub.f32 %v5099, %v5221
  %v5236 = vsub.f32 %v5100, %v5221
  %v5237 = vsub.f32 %v5101, %v5221
  %v5238 = vsub.f32 %v5102, %v5221
  %v5239 = vsub.f32 %v5103, %v5221
  %v5240 = vsub.f32 %v5104, %v5221
  %v5241 = vsub.f32 %v5105, %v5221
  %v5242 = vsub.f32 %v5106, %v5221
  %v5243 = vsub.f32 %v5107, %v5221
  %v5244 = vsub.f32 %v5108, %v5221
  %v5245 = vsub.f32 %v5109, %v5221
  %v5246 = vsub.f32 %v5110, %v5221
  %v5247 = vsub.f32 %v5111, %v5221
  %v5248 = vsub.f32 %v5112, %v5221
  %v5249 = vsub.f32 %v5113, %v5221
  %v5250 = vsub.f32 %v5114, %v5221
  %v5251 = vsub.f32 %v5115, %v5221
  %v5252 = vsub.f32 %v5116, %v5221
  %v5253 = vsub.f32 %v5117, %v5221
  %v5254 = vsub.f32 %v5118, %v5221
  %v5255 = vsub.f32 %v5119, %v5221
  %v5256 = vsub.f32 %v5120, %v5221
  %v5257 = vsub.f32 %v5121, %v5221
  %v5258 = vsub.f32 %v5122, %v5221
  %v5259 = vsub.f32 %v5123, %v5221
  %v5260 = vsub.f32 %v5124, %v5221
  %v5261 = vsub.f32 %v5125, %v5221
  %v5262 = vsub.f32 %v5126, %v5221
  %v5263 = vsub.f32 %v5127, %v5221
  %v5264 = vsub.f32 %v5128, %v5221
  %v5265 = vsub.f32 %v5129, %v5221
  %v5266 = vsub.f32 %v5130, %v5221
  %v5267 = vsub.f32 %v5131, %v5221
  %v5268 = vsub.f32 %v5132, %v5221
  %v5269 = vsub.f32 %v5133, %v5221
  %v5270 = vsub.f32 %v5134, %v5221
  %v5271 = vsub.f32 %v5135, %v5221
  %v5272 = vsub.f32 %v5136, %v5221
  %v5273 = vsub.f32 %v5137, %v5221
  %v5274 = vsub.f32 %v5138, %v5221
  %v5275 = vsub.f32 %v5139, %v5221
  %v5276 = vsub.f32 %v5140, %v5221
  %v5277 = vsub.f32 %v5141, %v5221
  %v5278 = vsub.f32 %v5142, %v5221
  %v5279 = vsub.f32 %v5143, %v5221
  %v5280 = vsub.f32 %v5144, %v5221
  %v5281 = vsub.f32 %v5145, %v5221
  %v5282 = vsub.f32 %v5146, %v5221
  %v5283 = vsub.f32 %v5147, %v5221
  %v5284 = vsub.f32 %v5148, %v5221
  %v5285 = vsub.f32 %v5149, %v5221
  %v5286 = vmul.f32 %v5222, %v5222
  %v5287 = vmul.f32 %v5223, %v5223
  %v5288 = vmul.f32 %v5224, %v5224
  %v5289 = vmul.f32 %v5225, %v5225
  %v5290 = vmul.f32 %v5226, %v5226
  %v5291 = vmul.f32 %v5227, %v5227
  %v5292 = vmul.f32 %v5228, %v5228
  %v5293 = vmul.f32 %v5229, %v5229
  %v5294 = vmul.f32 %v5230, %v5230
  %v5295 = vmul.f32 %v5231, %v5231
  %v5296 = vmul.f32 %v5232, %v5232
  %v5297 = vmul.f32 %v5233, %v5233
  %v5298 = vmul.f32 %v5234, %v5234
  %v5299 = vmul.f32 %v5235, %v5235
  %v5300 = vmul.f32 %v5236, %v5236
  %v5301 = vmul.f32 %v5237, %v5237
  %v5302 = vmul.f32 %v5238, %v5238
  %v5303 = vmul.f32 %v5239, %v5239
  %v5304 = vmul.f32 %v5240, %v5240
  %v5305 = vmul.f32 %v5241, %v5241
  %v5306 = vmul.f32 %v5242, %v5242
  %v5307 = vmul.f32 %v5243, %v5243
  %v5308 = vmul.f32 %v5244, %v5244
  %v5309 = vmul.f32 %v5245, %v5245
  %v5310 = vmul.f32 %v5246, %v5246
  %v5311 = vmul.f32 %v5247, %v5247
  %v5312 = vmul.f32 %v5248, %v5248
  %v5313 = vmul.f32 %v5249, %v5249
  %v5314 = vmul.f32 %v5250, %v5250
  %v5315 = vmul.f32 %v5251, %v5251
  %v5316 = vmul.f32 %v5252, %v5252
  %v5317 = vmul.f32 %v5253, %v5253
  %v5318 = vmul.f32 %v5254, %v5254
  %v5319 = vmul.f32 %v5255, %v5255
  %v5320 = vmul.f32 %v5256, %v5256
  %v5321 = vmul.f32 %v5257, %v5257
  %v5322 = vmul.f32 %v5258, %v5258
  %v5323 = vmul.f32 %v5259, %v5259
  %v5324 = vmul.f32 %v5260, %v5260
  %v5325 = vmul.f32 %v5261, %v5261
  %v5326 = vmul.f32 %v5262, %v5262
  %v5327 = vmul.f32 %v5263, %v5263
  %v5328 = vmul.f32 %v5264, %v5264
  %v5329 = vmul.f32 %v5265, %v5265
  %v5330 = vmul.f32 %v5266, %v5266
  %v5331 = vmul.f32 %v5267, %v5267
  %v5332 = vmul.f32 %v5268, %v5268
  %v5333 = vmul.f32 %v5269, %v5269
  %v5334 = vmul.f32 %v5270, %v5270
  %v5335 = vmul.f32 %v5271, %v5271
  %v5336 = vmul.f32 %v5272, %v5272
  %v5337 = vmul.f32 %v5273, %v5273
  %v5338 = vmul.f32 %v5274, %v5274
  %v5339 = vmul.f32 %v5275, %v5275
  %v5340 = vmul.f32 %v5276, %v5276
  %v5341 = vmul.f32 %v5277, %v5277
  %v5342 = vmul.f32 %v5278, %v5278
  %v5343 = vmul.f32 %v5279, %v5279
  %v5344 = vmul.f32 %v5280, %v5280
  %v5345 = vmul.f32 %v5281, %v5281
  %v5346 = vmul.f32 %v5282, %v5282
  %v5347 = vmul.f32 %v5283, %v5283
  %v5348 = vmul.f32 %v5284, %v5284
  %v5349 = vmul.f32 %v5285, %v5285
  %v5350 = vadd.f32 %v5286, %v5287
  %v5351 = vadd.f32 %v5350, %v5288
  %v5352 = vadd.f32 %v5351, %v5289
  %v5353 = vadd.f32 %v5352, %v5290
  %v5354 = vadd.f32 %v5353, %v5291
  %v5355 = vadd.f32 %v5354, %v5292
  %v5356 = vadd.f32 %v5355, %v5293
  %v5357 = vadd.f32 %v5356, %v5294
  %v5358 = vadd.f32 %v5357, %v5295
  %v5359 = vadd.f32 %v5358, %v5296
  %v5360 = vadd.f32 %v5359, %v5297
  %v5361 = vadd.f32 %v5360, %v5298
  %v5362 = vadd.f32 %v5361, %v5299
  %v5363 = vadd.f32 %v5362, %v5300
  %v5364 = vadd.f32 %v5363, %v5301
  %v5365 = vadd.f32 %v5364, %v5302
  %v5366 = vadd.f32 %v5365, %v5303
  %v5367 = vadd.f32 %v5366, %v5304
  %v5368 = vadd.f32 %v5367, %v5305
  %v5369 = vadd.f32 %v5368, %v5306
  %v5370 = vadd.f32 %v5369, %v5307
  %v5371 = vadd.f32 %v5370, %v5308
  %v5372 = vadd.f32 %v5371, %v5309
  %v5373 = vadd.f32 %v5372, %v5310
  %v5374 = vadd.f32 %v5373, %v5311
  %v5375 = vadd.f32 %v5374, %v5312
  %v5376 = vadd.f32 %v5375, %v5313
  %v5377 = vadd.f32 %v5376, %v5314
  %v5378 = vadd.f32 %v5377, %v5315
  %v5379 = vadd.f32 %v5378, %v5316
  %v5380 = vadd.f32 %v5379, %v5317
  %v5381 = vadd.f32 %v5380, %v5318
  %v5382 = vadd.f32 %v5381, %v5319
  %v5383 = vadd.f32 %v5382, %v5320
  %v5384 = vadd.f32 %v5383, %v5321
  %v5385 = vadd.f32 %v5384, %v5322
  %v5386 = vadd.f32 %v5385, %v5323
  %v5387 = vadd.f32 %v5386, %v5324
  %v5388 = vadd.f32 %v5387, %v5325
  %v5389 = vadd.f32 %v5388, %v5326
  %v5390 = vadd.f32 %v5389, %v5327
  %v5391 = vadd.f32 %v5390, %v5328
  %v5392 = vadd.f32 %v5391, %v5329
  %v5393 = vadd.f32 %v5392, %v5330
  %v5394 = vadd.f32 %v5393, %v5331
  %v5395 = vadd.f32 %v5394, %v5332
  %v5396 = vadd.f32 %v5395, %v5333
  %v5397 = vadd.f32 %v5396, %v5334
  %v5398 = vadd.f32 %v5397, %v5335
  %v5399 = vadd.f32 %v5398, %v5336
  %v5400 = vadd.f32 %v5399, %v5337
  %v5401 = vadd.f32 %v5400, %v5338
  %v5402 = vadd.f32 %v5401, %v5339
  %v5403 = vadd.f32 %v5402, %v5340
  %v5404 = vadd.f32 %v5403, %v5341
  %v5405 = vadd.f32 %v5404, %v5342
  %v5406 = vadd.f32 %v5405, %v5343
  %v5407 = vadd.f32 %v5406, %v5344
  %v5408 = vadd.f32 %v5407, %v5345
  %v5409 = vadd.f32 %v5408, %v5346
  %v5410 = vadd.f32 %v5409, %v5347
  %v5411 = vadd.f32 %v5410, %v5348
  %v5412 = vadd.f32 %v5411, %v5349
  %v5413 = vrot.slane %v5412, 4
  %v5414 = vadd.f32 %v5412, %v5413
  %v5415 = vrot.slane %v5414, 2
  %v5416 = vadd.f32 %v5414, %v5415
  %v5417 = vrot.slane %v5416, 1
  %v5418 = vadd.f32 %v5416, %v5417
  %v5419 = vmul.f32 %v5418, 0.001953125
  %v5420 = vadd.f32 %v5419, 1e-05
  %v5421 = vrsqrt.pop %v5420
  %v5422 = vmul.f32 %v5421, %v5150
  %v5423 = vlaneseq
  %v5424 = vshrl.u32 %v5423, 7
  %v5425 = vsub.s32 0, %v5424
  %v5426 = vrot.slane %v5422, %v5425
  %v5427 = vmul.f32 %v5222, %v5426
  %v5428 = vmul.f32 %v5223, %v5426
  %v5429 = vmul.f32 %v5224, %v5426
  %v5430 = vmul.f32 %v5225, %v5426
  %v5431 = vmul.f32 %v5226, %v5426
  %v5432 = vmul.f32 %v5227, %v5426
  %v5433 = vmul.f32 %v5228, %v5426
  %v5434 = vmul.f32 %v5229, %v5426
  %v5435 = vmul.f32 %v5230, %v5426
  %v5436 = vmul.f32 %v5231, %v5426
  %v5437 = vmul.f32 %v5232, %v5426
  %v5438 = vmul.f32 %v5233, %v5426
  %v5439 = vmul.f32 %v5234, %v5426
  %v5440 = vmul.f32 %v5235, %v5426
  %v5441 = vmul.f32 %v5236, %v5426
  %v5442 = vmul.f32 %v5237, %v5426
  %v5443 = vmul.f32 %v5238, %v5426
  %v5444 = vmul.f32 %v5239, %v5426
  %v5445 = vmul.f32 %v5240, %v5426
  %v5446 = vmul.f32 %v5241, %v5426
  %v5447 = vmul.f32 %v5242, %v5426
  %v5448 = vmul.f32 %v5243, %v5426
  %v5449 = vmul.f32 %v5244, %v5426
  %v5450 = vmul.f32 %v5245, %v5426
  %v5451 = vmul.f32 %v5246, %v5426
  %v5452 = vmul.f32 %v5247, %v5426
  %v5453 = vmul.f32 %v5248, %v5426
  %v5454 = vmul.f32 %v5249, %v5426
  %v5455 = vmul.f32 %v5250, %v5426
  %v5456 = vmul.f32 %v5251, %v5426
  %v5457 = vmul.f32 %v5252, %v5426
  %v5458 = vmul.f32 %v5253, %v5426
  %v5459 = vmul.f32 %v5254, %v5426
  %v5460 = vmul.f32 %v5255, %v5426
  %v5461 = vmul.f32 %v5256, %v5426
  %v5462 = vmul.f32 %v5257, %v5426
  %v5463 = vmul.f32 %v5258, %v5426
  %v5464 = vmul.f32 %v5259, %v5426
  %v5465 = vmul.f32 %v5260, %v5426
  %v5466 = vmul.f32 %v5261, %v5426
  %v5467 = vmul.f32 %v5262, %v5426
  %v5468 = vmul.f32 %v5263, %v5426
  %v5469 = vmul.f32 %v5264, %v5426
  %v5470 = vmul.f32 %v5265, %v5426
  %v5471 = vmul.f32 %v5266, %v5426
  %v5472 = vmul.f32 %v5267, %v5426
  %v5473 = vmul.f32 %v5268, %v5426
  %v5474 = vmul.f32 %v5269, %v5426
  %v5475 = vmul.f32 %v5270, %v5426
  %v5476 = vmul.f32 %v5271, %v5426
  %v5477 = vmul.f32 %v5272, %v5426
  %v5478 = vmul.f32 %v5273, %v5426
  %v5479 = vmul.f32 %v5274, %v5426
  %v5480 = vmul.f32 %v5275, %v5426
  %v5481 = vmul.f32 %v5276, %v5426
  %v5482 = vmul.f32 %v5277, %v5426
  %v5483 = vmul.f32 %v5278, %v5426
  %v5484 = vmul.f32 %v5279, %v5426
  %v5485 = vmul.f32 %v5280, %v5426
  %v5486 = vmul.f32 %v5281, %v5426
  %v5487 = vmul.f32 %v5282, %v5426
  %v5488 = vmul.f32 %v5283, %v5426
  %v5489 = vmul.f32 %v5284, %v5426
  %v5490 = vmul.f32 %v5285, %v5426
  %v5491 = vlaneseq
  %v5492 = vshrl.u32 %v5491, 7
  %v5493 = vsub.s32 0, %v5492
  %v5494 = vrot.slane %v5151, %v5493
  %v5495 = vadd.f32 %v5427, %v5494
  %v5496 = vadd.f32 %v5428, %v5494
  %v5497 = vadd.f32 %v5429, %v5494
  %v5498 = vadd.f32 %v5430, %v5494
  %v5499 = vadd.f32 %v5431, %v5494
  %v5500 = vadd.f32 %v5432, %v5494
  %v5501 = vadd.f32 %v5433, %v5494
  %v5502 = vadd.f32 %v5434, %v5494
  %v5503 = vadd.f32 %v5435, %v5494
  %v5504 = vadd.f32 %v5436, %v5494
  %v5505 = vadd.f32 %v5437, %v5494
  %v5506 = vadd.f32 %v5438, %v5494
  %v5507 = vadd.f32 %v5439, %v5494
  %v5508 = vadd.f32 %v5440, %v5494
  %v5509 = vadd.f32 %v5441, %v5494
  %v5510 = vadd.f32 %v5442, %v5494
  %v5511 = vadd.f32 %v5443, %v5494
  %v5512 = vadd.f32 %v5444, %v5494
  %v5513 = vadd.f32 %v5445, %v5494
  %v5514 = vadd.f32 %v5446, %v5494
  %v5515 = vadd.f32 %v5447, %v5494
  %v5516 = vadd.f32 %v5448, %v5494
  %v5517 = vadd.f32 %v5449, %v5494
  %v5518 = vadd.f32 %v5450, %v5494
  %v5519 = vadd.f32 %v5451, %v5494
  %v5520 = vadd.f32 %v5452, %v5494
  %v5521 = vadd.f32 %v5453, %v5494
  %v5522 = vadd.f32 %v5454, %v5494
  %v5523 = vadd.f32 %v5455, %v5494
  %v5524 = vadd.f32 %v5456, %v5494
  %v5525 = vadd.f32 %v5457, %v5494
  %v5526 = vadd.f32 %v5458, %v5494
  %v5527 = vadd.f32 %v5459, %v5494
  %v5528 = vadd.f32 %v5460, %v5494
  %v5529 = vadd.f32 %v5461, %v5494
  %v5530 = vadd.f32 %v5462, %v5494
  %v5531 = vadd.f32 %v5463, %v5494
  %v5532 = vadd.f32 %v5464, %v5494
  %v5533 = vadd.f32 %v5465, %v5494
  %v5534 = vadd.f32 %v5466, %v5494
  %v5535 = vadd.f32 %v5467, %v5494
  %v5536 = vadd.f32 %v5468, %v5494
  %v5537 = vadd.f32 %v5469, %v5494
  %v5538 = vadd.f32 %v5470, %v5494
  %v5539 = vadd.f32 %v5471, %v5494
  %v5540 = vadd.f32 %v5472, %v5494
  %v5541 = vadd.f32 %v5473, %v5494
  %v5542 = vadd.f32 %v5474, %v5494
  %v5543 = vadd.f32 %v5475, %v5494
  %v5544 = vadd.f32 %v5476, %v5494
  %v5545 = vadd.f32 %v5477, %v5494
  %v5546 = vadd.f32 %v5478, %v5494
  %v5547 = vadd.f32 %v5479, %v5494
  %v5548 = vadd.f32 %v5480, %v5494
  %v5549 = vadd.f32 %v5481, %v5494
  %v5550 = vadd.f32 %v5482, %v5494
  %v5551 = vadd.f32 %v5483, %v5494
  %v5552 = vadd.f32 %v5484, %v5494
  %v5553 = vadd.f32 %v5485, %v5494
  %v5554 = vadd.f32 %v5486, %v5494
  %v5555 = vadd.f32 %v5487, %v5494
  %v5556 = vadd.f32 %v5488, %v5494
  %v5557 = vadd.f32 %v5489, %v5494
  %v5558 = vadd.f32 %v5490, %v5494
  %v5559 = vpack.c.bf16 %v5496, %v5495
  %v5560 = vpack.c.bf16 %v5498, %v5497
  %v5561 = vpack.c.bf16 %v5500, %v5499
  %v5562 = vpack.c.bf16 %v5502, %v5501
  %v5563 = vpack.c.bf16 %v5504, %v5503
  %v5564 = vpack.c.bf16 %v5506, %v5505
  %v5565 = vpack.c.bf16 %v5508, %v5507
  %v5566 = vpack.c.bf16 %v5510, %v5509
  %v5567 = vpack.c.bf16 %v5512, %v5511
  %v5568 = vpack.c.bf16 %v5514, %v5513
  %v5569 = vpack.c.bf16 %v5516, %v5515
  %v5570 = vpack.c.bf16 %v5518, %v5517
  %v5571 = vpack.c.bf16 %v5520, %v5519
  %v5572 = vpack.c.bf16 %v5522, %v5521
  %v5573 = vpack.c.bf16 %v5524, %v5523
  %v5574 = vpack.c.bf16 %v5526, %v5525
  %v5575 = vpack.c.bf16 %v5528, %v5527
  %v5576 = vpack.c.bf16 %v5530, %v5529
  %v5577 = vpack.c.bf16 %v5532, %v5531
  %v5578 = vpack.c.bf16 %v5534, %v5533
  %v5579 = vpack.c.bf16 %v5536, %v5535
  %v5580 = vpack.c.bf16 %v5538, %v5537
  %v5581 = vpack.c.bf16 %v5540, %v5539
  %v5582 = vpack.c.bf16 %v5542, %v5541
  %v5583 = vpack.c.bf16 %v5544, %v5543
  %v5584 = vpack.c.bf16 %v5546, %v5545
  %v5585 = vpack.c.bf16 %v5548, %v5547
  %v5586 = vpack.c.bf16 %v5550, %v5549
  %v5587 = vpack.c.bf16 %v5552, %v5551
  %v5588 = vpack.c.bf16 %v5554, %v5553
  %v5589 = vpack.c.bf16 %v5556, %v5555
  %v5590 = vpack.c.bf16 %v5558, %v5557
  %v5591 = vld [vmem:[%s2] sm:$0xf]
  %v5592 = vld [vmem:[%s2 + $0x4] sm:$0xf]
  %v5593 = vld [vmem:[%s2 + $0x8] sm:$0xf]
  %v5594 = vld [vmem:[%s2 + $0xc] sm:$0xf]
  %v5595 = vld [vmem:[%s2 + $0x10] sm:$0xf]
  %v5596 = vld [vmem:[%s2 + $0x14] sm:$0xf]
  %v5597 = vld [vmem:[%s2 + $0x18] sm:$0xf]
  %v5598 = vld [vmem:[%s2 + $0x1c] sm:$0xf]
  %v5599 = vld [vmem:[%s2 + $0x20] sm:$0xf]
  %v5600 = vld [vmem:[%s2 + $0x24] sm:$0xf]
  %v5601 = vld [vmem:[%s2 + $0x28] sm:$0xf]
  %v5602 = vld [vmem:[%s2 + $0x2c] sm:$0xf]
  %v5603 = vld [vmem:[%s2 + $0x30] sm:$0xf]
  %v5604 = vld [vmem:[%s2 + $0x34] sm:$0xf]
  %v5605 = vld [vmem:[%s2 + $0x38] sm:$0xf]
  %v5606 = vld [vmem:[%s2 + $0x3c] sm:$0xf]
  %v5607 = vld [vmem:[%s4] sm:$0x1]
  %v5608 = vlaneseq
  %v5609 = vshrl.u32 %v5608, 7
  %v5610 = vsub.s32 0, %v5609
  %v5611 = vrot.slane %v5607, %v5610
  %v5628 = vunpack.c.l.b16 %v5591
  %v5629 = vunpack.c.l.b16 %v5592
  %v5630 = vunpack.c.l.b16 %v5593
  %v5631 = vunpack.c.l.b16 %v5594
  %v5632 = vunpack.c.l.b16 %v5595
  %v5633 = vunpack.c.l.b16 %v5596
  %v5634 = vunpack.c.l.b16 %v5597
  %v5635 = vunpack.c.l.b16 %v5598
  %v5636 = vunpack.c.l.b16 %v5599
  %v5637 = vunpack.c.l.b16 %v5600
  %v5638 = vunpack.c.l.b16 %v5601
  %v5639 = vunpack.c.l.b16 %v5602
  %v5640 = vunpack.c.l.b16 %v5603
  %v5641 = vunpack.c.l.b16 %v5604
  %v5642 = vunpack.c.l.b16 %v5605
  %v5643 = vunpack.c.l.b16 %v5606
  %v5644 = vpack.c.b16 %v5629, %v5628
  %v5645 = vpack.c.b16 %v5631, %v5630
  %v5646 = vpack.c.b16 %v5633, %v5632
  %v5647 = vpack.c.b16 %v5635, %v5634
  %v5648 = vpack.c.b16 %v5637, %v5636
  %v5649 = vpack.c.b16 %v5639, %v5638
  %v5650 = vpack.c.b16 %v5641, %v5640
  %v5651 = vpack.c.b16 %v5643, %v5642
  %5660 = vmatprep.subr.bf16.mxu0 0
  %5661 = vmatpush1.bf16.msra.mxu0 %v5644
  %5662 = vmatprep.subr.bf16.mxu0 0
  %5663 = vmatpush1.bf16.msra.mxu0 %v5645
  %5664 = vmatprep.subr.bf16.mxu0 0
  %5665 = vmatpush1.bf16.msra.mxu0 %v5646
  %5666 = vmatprep.subr.bf16.mxu0 0
  %5667 = vmatpush1.bf16.msra.mxu0 %v5647
  %5668 = vmatprep.subr.bf16.mxu0 0
  %5669 = vmatpush1.bf16.msra.mxu0 %v5648
  %5670 = vmatprep.subr.bf16.mxu0 0
  %5671 = vmatpush1.bf16.msra.mxu0 %v5649
  %5672 = vmatprep.subr.bf16.mxu0 0
  %5673 = vmatpush1.bf16.msra.mxu0 %v5650
  %5674 = vmatprep.subr.bf16.mxu0 0
  %5675 = vmatpush1.bf16.msra.mxu0 %v5651
  %5676 = vmatprep.subr.bf16.mxu0 0
  %5677 = vmatpush1.bf16.msra.mxu0 0
  %5678 = vmatprep.subr.bf16.mxu0 0
  %5679 = vmatpush1.bf16.msra.mxu0 0
  %5680 = vmatprep.subr.bf16.mxu0 0
  %5681 = vmatpush1.bf16.msra.mxu0 0
  %5682 = vmatprep.subr.bf16.mxu0 0
  %5683 = vmatpush1.bf16.msra.mxu0 0
  %5684 = vmatprep.subr.bf16.mxu0 0
  %5685 = vmatpush1.bf16.msra.mxu0 0
  %5686 = vmatprep.subr.bf16.mxu0 0
  %5687 = vmatpush1.bf16.msra.mxu0 0
  %5688 = vmatprep.subr.bf16.mxu0 0
  %5689 = vmatpush1.bf16.msra.mxu0 0
  %5690 = vmatprep.subr.bf16.mxu0 0
  %5691 = vmatpush1.bf16.msra.mxu0 0
  %5692 = vmatprep.mubr.bf16.mxu0 0
  %5693 = vmatmul.mubr.bf16.gmra.mrb[0].mxu0 %v5559
  %v5694 = vpop.f32.mrb[0].mxu0
  %v5695 = vadd.f32 %v5611, %v5694
  %v5696 = vpop.f32.mrb[0].mxu0
  %v5697 = vpop.f32.mrb[0].mxu0
  %v5698 = vadd.f32 %v5611, %v5697
  %v5699 = vpop.f32.mrb[0].mxu0
  %5700 = vmatprep.mubr.bf16.mxu0 0
  %5701 = vmatmul.mubr.bf16.gmra.mrb[0].mxu0 %v5560
  %v5702 = vpop.f32.mrb[0].mxu0
  %v5703 = vadd.f32 %v5611, %v5702
  %v5704 = vpop.f32.mrb[0].mxu0
  %v5705 = vpop.f32.mrb[0].mxu0
  %v5706 = vadd.f32 %v5611, %v5705
  %v5707 = vpop.f32.mrb[0].mxu0
  %5708 = vmatprep.mubr.bf16.mxu0 0
  %5709 = vmatmul.mubr.bf16.gmra.mrb[0].mxu0 %v5561
  %v5710 = vpop.f32.mrb[0].mxu0
  %v5711 = vadd.f32 %v5611, %v5710
  %v5712 = vpop.f32.mrb[0].mxu0
  %v5713 = vpop.f32.mrb[0].mxu0
  %v5714 = vadd.f32 %v5611, %v5713
  %v5715 = vpop.f32.mrb[0].mxu0
  %5716 = vmatprep.mubr.bf16.mxu0 0
  %5717 = vmatmul.mubr.bf16.gmra.mrb[0].mxu0 %v5562
  %v5718 = vpop.f32.mrb[0].mxu0
  %v5719 = vadd.f32 %v5611, %v5718
  %v5720 = vpop.f32.mrb[0].mxu0
  %v5721 = vpop.f32.mrb[0].mxu0
  %v5722 = vadd.f32 %v5611, %v5721
  %v5723 = vpop.f32.mrb[0].mxu0
  %5724 = vmatprep.mubr.bf16.mxu0 0
  %5725 = vmatmul.mubr.bf16.gmra.mrb[0].mxu0 %v5563
  %v5726 = vpop.f32.mrb[0].mxu0
  %v5727 = vadd.f32 %v5611, %v5726
  %v5728 = vpop.f32.mrb[0].mxu0
  %v5729 = vpop.f32.mrb[0].mxu0
  %v5730 = vadd.f32 %v5611, %v5729
  %v5731 = vpop.f32.mrb[0].mxu0
  %5732 = vmatprep.mubr.bf16.mxu0 0
  %5733 = vmatmul.mubr.bf16.gmra.mrb[0].mxu0 %v5564
  %v5734 = vpop.f32.mrb[0].mxu0
  %v5735 = vadd.f32 %v5611, %v5734
  %v5736 = vpop.f32.mrb[0].mxu0
  %v5737 = vpop.f32.mrb[0].mxu0
  %v5738 = vadd.f32 %v5611, %v5737
  %v5739 = vpop.f32.mrb[0].mxu0
  %5740 = vmatprep.mubr.bf16.mxu0 0
  %5741 = vmatmul.mubr.bf16.gmra.mrb[0].mxu0 %v5565
  %v5742 = vpop.f32.mrb[0].mxu0
  %v5743 = vadd.f32 %v5611, %v5742
  %v5744 = vpop.f32.mrb[0].mxu0
  %v5745 = vpop.f32.mrb[0].mxu0
  %v5746 = vadd.f32 %v5611, %v5745
  %v5747 = vpop.f32.mrb[0].mxu0
  %5748 = vmatprep.mubr.bf16.mxu0 0
  %5749 = vmatmul.mubr.bf16.gmra.mrb[0].mxu0 %v5566
  %v5750 = vpop.f32.mrb[0].mxu0
  %v5751 = vadd.f32 %v5611, %v5750
  %v5752 = vpop.f32.mrb[0].mxu0
  %v5753 = vpop.f32.mrb[0].mxu0
  %v5754 = vadd.f32 %v5611, %v5753
  %v5755 = vpop.f32.mrb[0].mxu0
  %5756 = vmatprep.mubr.bf16.mxu0 0
  %5757 = vmatmul.mubr.bf16.gmra.mrb[0].mxu0 %v5567
  %v5758 = vpop.f32.mrb[0].mxu0
  %v5759 = vadd.f32 %v5611, %v5758
  %v5760 = vpop.f32.mrb[0].mxu0
  %v5761 = vpop.f32.mrb[0].mxu0
  %v5762 = vadd.f32 %v5611, %v5761
  %v5763 = vpop.f32.mrb[0].mxu0
  %5764 = vmatprep.mubr.bf16.mxu0 0
  %5765 = vmatmul.mubr.bf16.gmra.mrb[0].mxu0 %v5568
  %v5766 = vpop.f32.mrb[0].mxu0
  %v5767 = vadd.f32 %v5611, %v5766
  %v5768 = vpop.f32.mrb[0].mxu0
  %v5769 = vpop.f32.mrb[0].mxu0
  %v5770 = vadd.f32 %v5611, %v5769
  %v5771 = vpop.f32.mrb[0].mxu0
  %5772 = vmatprep.mubr.bf16.mxu0 0
  %5773 = vmatmul.mubr.bf16.gmra.mrb[0].mxu0 %v5569
  %v5774 = vpop.f32.mrb[0].mxu0
  %v5775 = vadd.f32 %v5611, %v5774
  %v5776 = vpop.f32.mrb[0].mxu0
  %v5777 = vpop.f32.mrb[0].mxu0
  %v5778 = vadd.f32 %v5611, %v5777
  %v5779 = vpop.f32.mrb[0].mxu0
  %5780 = vmatprep.mubr.bf16.mxu0 0
  %5781 = vmatmul.mubr.bf16.gmra.mrb[0].mxu0 %v5570
  %v5782 = vpop.f32.mrb[0].mxu0
  %v5783 = vadd.f32 %v5611, %v5782
  %v5784 = vpop.f32.mrb[0].mxu0
  %v5785 = vpop.f32.mrb[0].mxu0
  %v5786 = vadd.f32 %v5611, %v5785
  %v5787 = vpop.f32.mrb[0].mxu0
  %5788 = vmatprep.mubr.bf16.mxu0 0
  %5789 = vmatmul.mubr.bf16.gmra.mrb[0].mxu0 %v5571
  %v5790 = vpop.f32.mrb[0].mxu0
  %v5791 = vadd.f32 %v5611, %v5790
  %v5792 = vpop.f32.mrb[0].mxu0
  %v5793 = vpop.f32.mrb[0].mxu0
  %v5794 = vadd.f32 %v5611, %v5793
  %v5795 = vpop.f32.mrb[0].mxu0
  %5796 = vmatprep.mubr.bf16.mxu0 0
  %5797 = vmatmul.mubr.bf16.gmra.mrb[0].mxu0 %v5572
  %v5798 = vpop.f32.mrb[0].mxu0
  %v5799 = vadd.f32 %v5611, %v5798
  %v5800 = vpop.f32.mrb[0].mxu0
  %v5801 = vpop.f32.mrb[0].mxu0
  %v5802 = vadd.f32 %v5611, %v5801
  %v5803 = vpop.f32.mrb[0].mxu0
  %5804 = vmatprep.mubr.bf16.mxu0 0
  %5805 = vmatmul.mubr.bf16.gmra.mrb[0].mxu0 %v5573
  %v5806 = vpop.f32.mrb[0].mxu0
  %v5807 = vadd.f32 %v5611, %v5806
  %v5808 = vpop.f32.mrb[0].mxu0
  %v5809 = vpop.f32.mrb[0].mxu0
  %v5810 = vadd.f32 %v5611, %v5809
  %v5811 = vpop.f32.mrb[0].mxu0
  %5812 = vmatprep.mubr.bf16.mxu0 0
  %5813 = vmatmul.mubr.bf16.gmra.mrb[0].mxu0 %v5574
  %v5814 = vpop.f32.mrb[0].mxu0
  %v5815 = vadd.f32 %v5611, %v5814
  %v5816 = vpop.f32.mrb[0].mxu0
  %v5817 = vpop.f32.mrb[0].mxu0
  %v5818 = vadd.f32 %v5611, %v5817
  %v5819 = vpop.f32.mrb[0].mxu0
  %5820 = vmatprep.mubr.bf16.mxu0 0
  %5821 = vmatmul.mubr.bf16.gmra.mrb[0].mxu0 %v5575
  %v5822 = vpop.f32.mrb[0].mxu0
  %v5823 = vadd.f32 %v5611, %v5822
  %v5824 = vpop.f32.mrb[0].mxu0
  %v5825 = vpop.f32.mrb[0].mxu0
  %v5826 = vadd.f32 %v5611, %v5825
  %v5827 = vpop.f32.mrb[0].mxu0
  %5828 = vmatprep.mubr.bf16.mxu0 0
  %5829 = vmatmul.mubr.bf16.gmra.mrb[0].mxu0 %v5576
  %v5830 = vpop.f32.mrb[0].mxu0
  %v5831 = vadd.f32 %v5611, %v5830
  %v5832 = vpop.f32.mrb[0].mxu0
  %v5833 = vpop.f32.mrb[0].mxu0
  %v5834 = vadd.f32 %v5611, %v5833
  %v5835 = vpop.f32.mrb[0].mxu0
  %5836 = vmatprep.mubr.bf16.mxu0 0
  %5837 = vmatmul.mubr.bf16.gmra.mrb[0].mxu0 %v5577
  %v5838 = vpop.f32.mrb[0].mxu0
  %v5839 = vadd.f32 %v5611, %v5838
  %v5840 = vpop.f32.mrb[0].mxu0
  %v5841 = vpop.f32.mrb[0].mxu0
  %v5842 = vadd.f32 %v5611, %v5841
  %v5843 = vpop.f32.mrb[0].mxu0
  %5844 = vmatprep.mubr.bf16.mxu0 0
  %5845 = vmatmul.mubr.bf16.gmra.mrb[0].mxu0 %v5578
  %v5846 = vpop.f32.mrb[0].mxu0
  %v5847 = vadd.f32 %v5611, %v5846
  %v5848 = vpop.f32.mrb[0].mxu0
  %v5849 = vpop.f32.mrb[0].mxu0
  %v5850 = vadd.f32 %v5611, %v5849
  %v5851 = vpop.f32.mrb[0].mxu0
  %5852 = vmatprep.mubr.bf16.mxu0 0
  %5853 = vmatmul.mubr.bf16.gmra.mrb[0].mxu0 %v5579
  %v5854 = vpop.f32.mrb[0].mxu0
  %v5855 = vadd.f32 %v5611, %v5854
  %v5856 = vpop.f32.mrb[0].mxu0
  %v5857 = vpop.f32.mrb[0].mxu0
  %v5858 = vadd.f32 %v5611, %v5857
  %v5859 = vpop.f32.mrb[0].mxu0
  %5860 = vmatprep.mubr.bf16.mxu0 0
  %5861 = vmatmul.mubr.bf16.gmra.mrb[0].mxu0 %v5580
  %v5862 = vpop.f32.mrb[0].mxu0
  %v5863 = vadd.f32 %v5611, %v5862
  %v5864 = vpop.f32.mrb[0].mxu0
  %v5865 = vpop.f32.mrb[0].mxu0
  %v5866 = vadd.f32 %v5611, %v5865
  %v5867 = vpop.f32.mrb[0].mxu0
  %5868 = vmatprep.mubr.bf16.mxu0 0
  %5869 = vmatmul.mubr.bf16.gmra.mrb[0].mxu0 %v5581
  %v5870 = vpop.f32.mrb[0].mxu0
  %v5871 = vadd.f32 %v5611, %v5870
  %v5872 = vpop.f32.mrb[0].mxu0
  %v5873 = vpop.f32.mrb[0].mxu0
  %v5874 = vadd.f32 %v5611, %v5873
  %v5875 = vpop.f32.mrb[0].mxu0
  %5876 = vmatprep.mubr.bf16.mxu0 0
  %5877 = vmatmul.mubr.bf16.gmra.mrb[0].mxu0 %v5582
  %v5878 = vpop.f32.mrb[0].mxu0
  %v5879 = vadd.f32 %v5611, %v5878
  %v5880 = vpop.f32.mrb[0].mxu0
  %v5881 = vpop.f32.mrb[0].mxu0
  %v5882 = vadd.f32 %v5611, %v5881
  %v5883 = vpop.f32.mrb[0].mxu0
  %5884 = vmatprep.mubr.bf16.mxu0 0
  %5885 = vmatmul.mubr.bf16.gmra.mrb[0].mxu0 %v5583
  %v5886 = vpop.f32.mrb[0].mxu0
  %v5887 = vadd.f32 %v5611, %v5886
  %v5888 = vpop.f32.mrb[0].mxu0
  %v5889 = vpop.f32.mrb[0].mxu0
  %v5890 = vadd.f32 %v5611, %v5889
  %v5891 = vpop.f32.mrb[0].mxu0
  %5892 = vmatprep.mubr.bf16.mxu0 0
  %5893 = vmatmul.mubr.bf16.gmra.mrb[0].mxu0 %v5584
  %v5894 = vpop.f32.mrb[0].mxu0
  %v5895 = vadd.f32 %v5611, %v5894
  %v5896 = vpop.f32.mrb[0].mxu0
  %v5897 = vpop.f32.mrb[0].mxu0
  %v5898 = vadd.f32 %v5611, %v5897
  %v5899 = vpop.f32.mrb[0].mxu0
  %5900 = vmatprep.mubr.bf16.mxu0 0
  %5901 = vmatmul.mubr.bf16.gmra.mrb[0].mxu0 %v5585
  %v5902 = vpop.f32.mrb[0].mxu0
  %v5903 = vadd.f32 %v5611, %v5902
  %v5904 = vpop.f32.mrb[0].mxu0
  %v5905 = vpop.f32.mrb[0].mxu0
  %v5906 = vadd.f32 %v5611, %v5905
  %v5907 = vpop.f32.mrb[0].mxu0
  %5908 = vmatprep.mubr.bf16.mxu0 0
  %5909 = vmatmul.mubr.bf16.gmra.mrb[0].mxu0 %v5586
  %v5910 = vpop.f32.mrb[0].mxu0
  %v5911 = vadd.f32 %v5611, %v5910
  %v5912 = vpop.f32.mrb[0].mxu0
  %v5913 = vpop.f32.mrb[0].mxu0
  %v5914 = vadd.f32 %v5611, %v5913
  %v5915 = vpop.f32.mrb[0].mxu0
  %5916 = vmatprep.mubr.bf16.mxu0 0
  %5917 = vmatmul.mubr.bf16.gmra.mrb[0].mxu0 %v5587
  %v5918 = vpop.f32.mrb[0].mxu0
  %v5919 = vadd.f32 %v5611, %v5918
  %v5920 = vpop.f32.mrb[0].mxu0
  %v5921 = vpop.f32.mrb[0].mxu0
  %v5922 = vadd.f32 %v5611, %v5921
  %v5923 = vpop.f32.mrb[0].mxu0
  %5924 = vmatprep.mubr.bf16.mxu0 0
  %5925 = vmatmul.mubr.bf16.gmra.mrb[0].mxu0 %v5588
  %v5926 = vpop.f32.mrb[0].mxu0
  %v5927 = vadd.f32 %v5611, %v5926
  %v5928 = vpop.f32.mrb[0].mxu0
  %v5929 = vpop.f32.mrb[0].mxu0
  %v5930 = vadd.f32 %v5611, %v5929
  %v5931 = vpop.f32.mrb[0].mxu0
  %5932 = vmatprep.mubr.bf16.mxu0 0
  %5933 = vmatmul.mubr.bf16.gmra.mrb[0].mxu0 %v5589
  %v5934 = vpop.f32.mrb[0].mxu0
  %v5935 = vadd.f32 %v5611, %v5934
  %v5936 = vpop.f32.mrb[0].mxu0
  %v5937 = vpop.f32.mrb[0].mxu0
  %v5938 = vadd.f32 %v5611, %v5937
  %v5939 = vpop.f32.mrb[0].mxu0
  %5940 = vmatprep.mubr.bf16.mxu0 0
  %5941 = vmatmul.mubr.bf16.gmra.mrb[0].mxu0 %v5590
  %v5942 = vpop.f32.mrb[0].mxu0
  %v5943 = vadd.f32 %v5611, %v5942
  %v5944 = vpop.f32.mrb[0].mxu0
  %v5945 = vpop.f32.mrb[0].mxu0
  %v5946 = vadd.f32 %v5611, %v5945
  %v5947 = vpop.f32.mrb[0].mxu0
  %5948 = vdwg.mxu0
  %v5949 = vld [vmem:[%s4 + $0x1] sm:$0x1]
  %v5950 = vld [vmem:[%s4 + $0x2] sm:$0x1]
  %v5951 = vsel %vm137, %v5695, 0.0
  %v5952 = vsel %vm137, %v5698, 0.0
  %v5953 = vadd.f32 %v5951, %v5952
  %v5954 = vsel %vm137, %v5703, 0.0
  %v5955 = vadd.f32 %v5953, %v5954
  %v5956 = vsel %vm137, %v5706, 0.0
  %v5957 = vadd.f32 %v5955, %v5956
  %v5958 = vsel %vm137, %v5711, 0.0
  %v5959 = vadd.f32 %v5957, %v5958
  %v5960 = vsel %vm137, %v5714, 0.0
  %v5961 = vadd.f32 %v5959, %v5960
  %v5962 = vsel %vm137, %v5719, 0.0
  %v5963 = vadd.f32 %v5961, %v5962
  %v5964 = vsel %vm137, %v5722, 0.0
  %v5965 = vadd.f32 %v5963, %v5964
  %v5966 = vsel %vm137, %v5727, 0.0
  %v5967 = vadd.f32 %v5965, %v5966
  %v5968 = vsel %vm137, %v5730, 0.0
  %v5969 = vadd.f32 %v5967, %v5968
  %v5970 = vsel %vm137, %v5735, 0.0
  %v5971 = vadd.f32 %v5969, %v5970
  %v5972 = vsel %vm137, %v5738, 0.0
  %v5973 = vadd.f32 %v5971, %v5972
  %v5974 = vsel %vm137, %v5743, 0.0
  %v5975 = vadd.f32 %v5973, %v5974
  %v5976 = vsel %vm137, %v5746, 0.0
  %v5977 = vadd.f32 %v5975, %v5976
  %v5978 = vsel %vm137, %v5751, 0.0
  %v5979 = vadd.f32 %v5977, %v5978
  %v5980 = vsel %vm137, %v5754, 0.0
  %v5981 = vadd.f32 %v5979, %v5980
  %v5982 = vsel %vm137, %v5759, 0.0
  %v5983 = vadd.f32 %v5981, %v5982
  %v5984 = vsel %vm137, %v5762, 0.0
  %v5985 = vadd.f32 %v5983, %v5984
  %v5986 = vsel %vm137, %v5767, 0.0
  %v5987 = vadd.f32 %v5985, %v5986
  %v5988 = vsel %vm137, %v5770, 0.0
  %v5989 = vadd.f32 %v5987, %v5988
  %v5990 = vsel %vm137, %v5775, 0.0
  %v5991 = vadd.f32 %v5989, %v5990
  %v5992 = vsel %vm137, %v5778, 0.0
  %v5993 = vadd.f32 %v5991, %v5992
  %v5994 = vsel %vm137, %v5783, 0.0
  %v5995 = vadd.f32 %v5993, %v5994
  %v5996 = vsel %vm137, %v5786, 0.0
  %v5997 = vadd.f32 %v5995, %v5996
  %v5998 = vsel %vm137, %v5791, 0.0
  %v5999 = vadd.f32 %v5997, %v5998
  %v6000 = vsel %vm137, %v5794, 0.0
  %v6001 = vadd.f32 %v5999, %v6000
  %v6002 = vsel %vm137, %v5799, 0.0
  %v6003 = vadd.f32 %v6001, %v6002
  %v6004 = vsel %vm137, %v5802, 0.0
  %v6005 = vadd.f32 %v6003, %v6004
  %v6006 = vsel %vm137, %v5807, 0.0
  %v6007 = vadd.f32 %v6005, %v6006
  %v6008 = vsel %vm137, %v5810, 0.0
  %v6009 = vadd.f32 %v6007, %v6008
  %v6010 = vsel %vm137, %v5815, 0.0
  %v6011 = vadd.f32 %v6009, %v6010
  %v6012 = vsel %vm137, %v5818, 0.0
  %v6013 = vadd.f32 %v6011, %v6012
  %v6014 = vsel %vm137, %v5823, 0.0
  %v6015 = vadd.f32 %v6013, %v6014
  %v6016 = vsel %vm137, %v5826, 0.0
  %v6017 = vadd.f32 %v6015, %v6016
  %v6018 = vsel %vm137, %v5831, 0.0
  %v6019 = vadd.f32 %v6017, %v6018
  %v6020 = vsel %vm137, %v5834, 0.0
  %v6021 = vadd.f32 %v6019, %v6020
  %v6022 = vsel %vm137, %v5839, 0.0
  %v6023 = vadd.f32 %v6021, %v6022
  %v6024 = vsel %vm137, %v5842, 0.0
  %v6025 = vadd.f32 %v6023, %v6024
  %v6026 = vsel %vm137, %v5847, 0.0
  %v6027 = vadd.f32 %v6025, %v6026
  %v6028 = vsel %vm137, %v5850, 0.0
  %v6029 = vadd.f32 %v6027, %v6028
  %v6030 = vsel %vm137, %v5855, 0.0
  %v6031 = vadd.f32 %v6029, %v6030
  %v6032 = vsel %vm137, %v5858, 0.0
  %v6033 = vadd.f32 %v6031, %v6032
  %v6034 = vsel %vm137, %v5863, 0.0
  %v6035 = vadd.f32 %v6033, %v6034
  %v6036 = vsel %vm137, %v5866, 0.0
  %v6037 = vadd.f32 %v6035, %v6036
  %v6038 = vsel %vm137, %v5871, 0.0
  %v6039 = vadd.f32 %v6037, %v6038
  %v6040 = vsel %vm137, %v5874, 0.0
  %v6041 = vadd.f32 %v6039, %v6040
  %v6042 = vsel %vm137, %v5879, 0.0
  %v6043 = vadd.f32 %v6041, %v6042
  %v6044 = vsel %vm137, %v5882, 0.0
  %v6045 = vadd.f32 %v6043, %v6044
  %v6046 = vsel %vm137, %v5887, 0.0
  %v6047 = vadd.f32 %v6045, %v6046
  %v6048 = vsel %vm137, %v5890, 0.0
  %v6049 = vadd.f32 %v6047, %v6048
  %v6050 = vsel %vm137, %v5895, 0.0
  %v6051 = vadd.f32 %v6049, %v6050
  %v6052 = vsel %vm137, %v5898, 0.0
  %v6053 = vadd.f32 %v6051, %v6052
  %v6054 = vsel %vm137, %v5903, 0.0
  %v6055 = vadd.f32 %v6053, %v6054
  %v6056 = vsel %vm137, %v5906, 0.0
  %v6057 = vadd.f32 %v6055, %v6056
  %v6058 = vsel %vm137, %v5911, 0.0
  %v6059 = vadd.f32 %v6057, %v6058
  %v6060 = vsel %vm137, %v5914, 0.0
  %v6061 = vadd.f32 %v6059, %v6060
  %v6062 = vsel %vm137, %v5919, 0.0
  %v6063 = vadd.f32 %v6061, %v6062
  %v6064 = vsel %vm137, %v5922, 0.0
  %v6065 = vadd.f32 %v6063, %v6064
  %v6066 = vsel %vm137, %v5927, 0.0
  %v6067 = vadd.f32 %v6065, %v6066
  %v6068 = vsel %vm137, %v5930, 0.0
  %v6069 = vadd.f32 %v6067, %v6068
  %v6070 = vsel %vm137, %v5935, 0.0
  %v6071 = vadd.f32 %v6069, %v6070
  %v6072 = vsel %vm137, %v5938, 0.0
  %v6073 = vadd.f32 %v6071, %v6072
  %v6074 = vsel %vm137, %v5943, 0.0
  %v6075 = vadd.f32 %v6073, %v6074
  %v6076 = vsel %vm137, %v5946, 0.0
  %v6077 = vadd.f32 %v6075, %v6076
  %v6078 = vrot.slane %v6077, 4
  %v6079 = vadd.f32 %v6077, %v6078
  %v6080 = vrot.slane %v6079, 2
  %v6081 = vadd.f32 %v6079, %v6080
  %v6082 = vrot.slane %v6081, 1
  %v6083 = vadd.f32 %v6081, %v6082
  %v6084 = vmul.f32 %v6083, 0.001953125
  %v6085 = vsub.f32 %v5695, %v6084
  %v6086 = vsub.f32 %v5698, %v6084
  %v6087 = vsub.f32 %v5703, %v6084
  %v6088 = vsub.f32 %v5706, %v6084
  %v6089 = vsub.f32 %v5711, %v6084
  %v6090 = vsub.f32 %v5714, %v6084
  %v6091 = vsub.f32 %v5719, %v6084
  %v6092 = vsub.f32 %v5722, %v6084
  %v6093 = vsub.f32 %v5727, %v6084
  %v6094 = vsub.f32 %v5730, %v6084
  %v6095 = vsub.f32 %v5735, %v6084
  %v6096 = vsub.f32 %v5738, %v6084
  %v6097 = vsub.f32 %v5743, %v6084
  %v6098 = vsub.f32 %v5746, %v6084
  %v6099 = vsub.f32 %v5751, %v6084
  %v6100 = vsub.f32 %v5754, %v6084
  %v6101 = vsub.f32 %v5759, %v6084
  %v6102 = vsub.f32 %v5762, %v6084
  %v6103 = vsub.f32 %v5767, %v6084
  %v6104 = vsub.f32 %v5770, %v6084
  %v6105 = vsub.f32 %v5775, %v6084
  %v6106 = vsub.f32 %v5778, %v6084
  %v6107 = vsub.f32 %v5783, %v6084
  %v6108 = vsub.f32 %v5786, %v6084
  %v6109 = vsub.f32 %v5791, %v6084
  %v6110 = vsub.f32 %v5794, %v6084
  %v6111 = vsub.f32 %v5799, %v6084
  %v6112 = vsub.f32 %v5802, %v6084
  %v6113 = vsub.f32 %v5807, %v6084
  %v6114 = vsub.f32 %v5810, %v6084
  %v6115 = vsub.f32 %v5815, %v6084
  %v6116 = vsub.f32 %v5818, %v6084
  %v6117 = vsub.f32 %v5823, %v6084
  %v6118 = vsub.f32 %v5826, %v6084
  %v6119 = vsub.f32 %v5831, %v6084
  %v6120 = vsub.f32 %v5834, %v6084
  %v6121 = vsub.f32 %v5839, %v6084
  %v6122 = vsub.f32 %v5842, %v6084
  %v6123 = vsub.f32 %v5847, %v6084
  %v6124 = vsub.f32 %v5850, %v6084
  %v6125 = vsub.f32 %v5855, %v6084
  %v6126 = vsub.f32 %v5858, %v6084
  %v6127 = vsub.f32 %v5863, %v6084
  %v6128 = vsub.f32 %v5866, %v6084
  %v6129 = vsub.f32 %v5871, %v6084
  %v6130 = vsub.f32 %v5874, %v6084
  %v6131 = vsub.f32 %v5879, %v6084
  %v6132 = vsub.f32 %v5882, %v6084
  %v6133 = vsub.f32 %v5887, %v6084
  %v6134 = vsub.f32 %v5890, %v6084
  %v6135 = vsub.f32 %v5895, %v6084
  %v6136 = vsub.f32 %v5898, %v6084
  %v6137 = vsub.f32 %v5903, %v6084
  %v6138 = vsub.f32 %v5906, %v6084
  %v6139 = vsub.f32 %v5911, %v6084
  %v6140 = vsub.f32 %v5914, %v6084
  %v6141 = vsub.f32 %v5919, %v6084
  %v6142 = vsub.f32 %v5922, %v6084
  %v6143 = vsub.f32 %v5927, %v6084
  %v6144 = vsub.f32 %v5930, %v6084
  %v6145 = vsub.f32 %v5935, %v6084
  %v6146 = vsub.f32 %v5938, %v6084
  %v6147 = vsub.f32 %v5943, %v6084
  %v6148 = vsub.f32 %v5946, %v6084
  %v6149 = vmul.f32 %v6085, %v6085
  %v6150 = vmul.f32 %v6086, %v6086
  %v6151 = vmul.f32 %v6087, %v6087
  %v6152 = vmul.f32 %v6088, %v6088
  %v6153 = vmul.f32 %v6089, %v6089
  %v6154 = vmul.f32 %v6090, %v6090
  %v6155 = vmul.f32 %v6091, %v6091
  %v6156 = vmul.f32 %v6092, %v6092
  %v6157 = vmul.f32 %v6093, %v6093
  %v6158 = vmul.f32 %v6094, %v6094
  %v6159 = vmul.f32 %v6095, %v6095
  %v6160 = vmul.f32 %v6096, %v6096
  %v6161 = vmul.f32 %v6097, %v6097
  %v6162 = vmul.f32 %v6098, %v6098
  %v6163 = vmul.f32 %v6099, %v6099
  %v6164 = vmul.f32 %v6100, %v6100
  %v6165 = vmul.f32 %v6101, %v6101
  %v6166 = vmul.f32 %v6102, %v6102
  %v6167 = vmul.f32 %v6103, %v6103
  %v6168 = vmul.f32 %v6104, %v6104
  %v6169 = vmul.f32 %v6105, %v6105
  %v6170 = vmul.f32 %v6106, %v6106
  %v6171 = vmul.f32 %v6107, %v6107
  %v6172 = vmul.f32 %v6108, %v6108
  %v6173 = vmul.f32 %v6109, %v6109
  %v6174 = vmul.f32 %v6110, %v6110
  %v6175 = vmul.f32 %v6111, %v6111
  %v6176 = vmul.f32 %v6112, %v6112
  %v6177 = vmul.f32 %v6113, %v6113
  %v6178 = vmul.f32 %v6114, %v6114
  %v6179 = vmul.f32 %v6115, %v6115
  %v6180 = vmul.f32 %v6116, %v6116
  %v6181 = vmul.f32 %v6117, %v6117
  %v6182 = vmul.f32 %v6118, %v6118
  %v6183 = vmul.f32 %v6119, %v6119
  %v6184 = vmul.f32 %v6120, %v6120
  %v6185 = vmul.f32 %v6121, %v6121
  %v6186 = vmul.f32 %v6122, %v6122
  %v6187 = vmul.f32 %v6123, %v6123
  %v6188 = vmul.f32 %v6124, %v6124
  %v6189 = vmul.f32 %v6125, %v6125
  %v6190 = vmul.f32 %v6126, %v6126
  %v6191 = vmul.f32 %v6127, %v6127
  %v6192 = vmul.f32 %v6128, %v6128
  %v6193 = vmul.f32 %v6129, %v6129
  %v6194 = vmul.f32 %v6130, %v6130
  %v6195 = vmul.f32 %v6131, %v6131
  %v6196 = vmul.f32 %v6132, %v6132
  %v6197 = vmul.f32 %v6133, %v6133
  %v6198 = vmul.f32 %v6134, %v6134
  %v6199 = vmul.f32 %v6135, %v6135
  %v6200 = vmul.f32 %v6136, %v6136
  %v6201 = vmul.f32 %v6137, %v6137
  %v6202 = vmul.f32 %v6138, %v6138
  %v6203 = vmul.f32 %v6139, %v6139
  %v6204 = vmul.f32 %v6140, %v6140
  %v6205 = vmul.f32 %v6141, %v6141
  %v6206 = vmul.f32 %v6142, %v6142
  %v6207 = vmul.f32 %v6143, %v6143
  %v6208 = vmul.f32 %v6144, %v6144
  %v6209 = vmul.f32 %v6145, %v6145
  %v6210 = vmul.f32 %v6146, %v6146
  %v6211 = vmul.f32 %v6147, %v6147
  %v6212 = vmul.f32 %v6148, %v6148
  %v6213 = vsel %vm137, %v6149, 0.0
  %v6214 = vsel %vm137, %v6150, 0.0
  %v6215 = vadd.f32 %v6213, %v6214
  %v6216 = vsel %vm137, %v6151, 0.0
  %v6217 = vadd.f32 %v6215, %v6216
  %v6218 = vsel %vm137, %v6152, 0.0
  %v6219 = vadd.f32 %v6217, %v6218
  %v6220 = vsel %vm137, %v6153, 0.0
  %v6221 = vadd.f32 %v6219, %v6220
  %v6222 = vsel %vm137, %v6154, 0.0
  %v6223 = vadd.f32 %v6221, %v6222
  %v6224 = vsel %vm137, %v6155, 0.0
  %v6225 = vadd.f32 %v6223, %v6224
  %v6226 = vsel %vm137, %v6156, 0.0
  %v6227 = vadd.f32 %v6225, %v6226
  %v6228 = vsel %vm137, %v6157, 0.0
  %v6229 = vadd.f32 %v6227, %v6228
  %v6230 = vsel %vm137, %v6158, 0.0
  %v6231 = vadd.f32 %v6229, %v6230
  %v6232 = vsel %vm137, %v6159, 0.0
  %v6233 = vadd.f32 %v6231, %v6232
  %v6234 = vsel %vm137, %v6160, 0.0
  %v6235 = vadd.f32 %v6233, %v6234
  %v6236 = vsel %vm137, %v6161, 0.0
  %v6237 = vadd.f32 %v6235, %v6236
  %v6238 = vsel %vm137, %v6162, 0.0
  %v6239 = vadd.f32 %v6237, %v6238
  %v6240 = vsel %vm137, %v6163, 0.0
  %v6241 = vadd.f32 %v6239, %v6240
  %v6242 = vsel %vm137, %v6164, 0.0
  %v6243 = vadd.f32 %v6241, %v6242
  %v6244 = vsel %vm137, %v6165, 0.0
  %v6245 = vadd.f32 %v6243, %v6244
  %v6246 = vsel %vm137, %v6166, 0.0
  %v6247 = vadd.f32 %v6245, %v6246
  %v6248 = vsel %vm137, %v6167, 0.0
  %v6249 = vadd.f32 %v6247, %v6248
  %v6250 = vsel %vm137, %v6168, 0.0
  %v6251 = vadd.f32 %v6249, %v6250
  %v6252 = vsel %vm137, %v6169, 0.0
  %v6253 = vadd.f32 %v6251, %v6252
  %v6254 = vsel %vm137, %v6170, 0.0
  %v6255 = vadd.f32 %v6253, %v6254
  %v6256 = vsel %vm137, %v6171, 0.0
  %v6257 = vadd.f32 %v6255, %v6256
  %v6258 = vsel %vm137, %v6172, 0.0
  %v6259 = vadd.f32 %v6257, %v6258
  %v6260 = vsel %vm137, %v6173, 0.0
  %v6261 = vadd.f32 %v6259, %v6260
  %v6262 = vsel %vm137, %v6174, 0.0
  %v6263 = vadd.f32 %v6261, %v6262
  %v6264 = vsel %vm137, %v6175, 0.0
  %v6265 = vadd.f32 %v6263, %v6264
  %v6266 = vsel %vm137, %v6176, 0.0
  %v6267 = vadd.f32 %v6265, %v6266
  %v6268 = vsel %vm137, %v6177, 0.0
  %v6269 = vadd.f32 %v6267, %v6268
  %v6270 = vsel %vm137, %v6178, 0.0
  %v6271 = vadd.f32 %v6269, %v6270
  %v6272 = vsel %vm137, %v6179, 0.0
  %v6273 = vadd.f32 %v6271, %v6272
  %v6274 = vsel %vm137, %v6180, 0.0
  %v6275 = vadd.f32 %v6273, %v6274
  %v6276 = vsel %vm137, %v6181, 0.0
  %v6277 = vadd.f32 %v6275, %v6276
  %v6278 = vsel %vm137, %v6182, 0.0
  %v6279 = vadd.f32 %v6277, %v6278
  %v6280 = vsel %vm137, %v6183, 0.0
  %v6281 = vadd.f32 %v6279, %v6280
  %v6282 = vsel %vm137, %v6184, 0.0
  %v6283 = vadd.f32 %v6281, %v6282
  %v6284 = vsel %vm137, %v6185, 0.0
  %v6285 = vadd.f32 %v6283, %v6284
  %v6286 = vsel %vm137, %v6186, 0.0
  %v6287 = vadd.f32 %v6285, %v6286
  %v6288 = vsel %vm137, %v6187, 0.0
  %v6289 = vadd.f32 %v6287, %v6288
  %v6290 = vsel %vm137, %v6188, 0.0
  %v6291 = vadd.f32 %v6289, %v6290
  %v6292 = vsel %vm137, %v6189, 0.0
  %v6293 = vadd.f32 %v6291, %v6292
  %v6294 = vsel %vm137, %v6190, 0.0
  %v6295 = vadd.f32 %v6293, %v6294
  %v6296 = vsel %vm137, %v6191, 0.0
  %v6297 = vadd.f32 %v6295, %v6296
  %v6298 = vsel %vm137, %v6192, 0.0
  %v6299 = vadd.f32 %v6297, %v6298
  %v6300 = vsel %vm137, %v6193, 0.0
  %v6301 = vadd.f32 %v6299, %v6300
  %v6302 = vsel %vm137, %v6194, 0.0
  %v6303 = vadd.f32 %v6301, %v6302
  %v6304 = vsel %vm137, %v6195, 0.0
  %v6305 = vadd.f32 %v6303, %v6304
  %v6306 = vsel %vm137, %v6196, 0.0
  %v6307 = vadd.f32 %v6305, %v6306
  %v6308 = vsel %vm137, %v6197, 0.0
  %v6309 = vadd.f32 %v6307, %v6308
  %v6310 = vsel %vm137, %v6198, 0.0
  %v6311 = vadd.f32 %v6309, %v6310
  %v6312 = vsel %vm137, %v6199, 0.0
  %v6313 = vadd.f32 %v6311, %v6312
  %v6314 = vsel %vm137, %v6200, 0.0
  %v6315 = vadd.f32 %v6313, %v6314
  %v6316 = vsel %vm137, %v6201, 0.0
  %v6317 = vadd.f32 %v6315, %v6316
  %v6318 = vsel %vm137, %v6202, 0.0
  %v6319 = vadd.f32 %v6317, %v6318
  %v6320 = vsel %vm137, %v6203, 0.0
  %v6321 = vadd.f32 %v6319, %v6320
  %v6322 = vsel %vm137, %v6204, 0.0
  %v6323 = vadd.f32 %v6321, %v6322
  %v6324 = vsel %vm137, %v6205, 0.0
  %v6325 = vadd.f32 %v6323, %v6324
  %v6326 = vsel %vm137, %v6206, 0.0
  %v6327 = vadd.f32 %v6325, %v6326
  %v6328 = vsel %vm137, %v6207, 0.0
  %v6329 = vadd.f32 %v6327, %v6328
  %v6330 = vsel %vm137, %v6208, 0.0
  %v6331 = vadd.f32 %v6329, %v6330
  %v6332 = vsel %vm137, %v6209, 0.0
  %v6333 = vadd.f32 %v6331, %v6332
  %v6334 = vsel %vm137, %v6210, 0.0
  %v6335 = vadd.f32 %v6333, %v6334
  %v6336 = vsel %vm137, %v6211, 0.0
  %v6337 = vadd.f32 %v6335, %v6336
  %v6338 = vsel %vm137, %v6212, 0.0
  %v6339 = vadd.f32 %v6337, %v6338
  %v6340 = vrot.slane %v6339, 4
  %v6341 = vadd.f32 %v6339, %v6340
  %v6342 = vrot.slane %v6341, 2
  %v6343 = vadd.f32 %v6341, %v6342
  %v6344 = vrot.slane %v6343, 1
  %v6345 = vadd.f32 %v6343, %v6344
  %v6346 = vmul.f32 %v6345, 0.001953125
  %v6347 = vadd.f32 %v6346, 1e-05
  %v6348 = vrsqrt.pop %v6347
  %v6349 = vmul.f32 %v6348, %v5949
  %v6350 = vlaneseq
  %v6351 = vshrl.u32 %v6350, 7
  %v6352 = vsub.s32 0, %v6351
  %v6353 = vrot.slane %v6349, %v6352
  %v6354 = vmul.f32 %v6085, %v6353
  %v6355 = vmul.f32 %v6086, %v6353
  %v6356 = vmul.f32 %v6087, %v6353
  %v6357 = vmul.f32 %v6088, %v6353
  %v6358 = vmul.f32 %v6089, %v6353
  %v6359 = vmul.f32 %v6090, %v6353
  %v6360 = vmul.f32 %v6091, %v6353
  %v6361 = vmul.f32 %v6092, %v6353
  %v6362 = vmul.f32 %v6093, %v6353
  %v6363 = vmul.f32 %v6094, %v6353
  %v6364 = vmul.f32 %v6095, %v6353
  %v6365 = vmul.f32 %v6096, %v6353
  %v6366 = vmul.f32 %v6097, %v6353
  %v6367 = vmul.f32 %v6098, %v6353
  %v6368 = vmul.f32 %v6099, %v6353
  %v6369 = vmul.f32 %v6100, %v6353
  %v6370 = vmul.f32 %v6101, %v6353
  %v6371 = vmul.f32 %v6102, %v6353
  %v6372 = vmul.f32 %v6103, %v6353
  %v6373 = vmul.f32 %v6104, %v6353
  %v6374 = vmul.f32 %v6105, %v6353
  %v6375 = vmul.f32 %v6106, %v6353
  %v6376 = vmul.f32 %v6107, %v6353
  %v6377 = vmul.f32 %v6108, %v6353
  %v6378 = vmul.f32 %v6109, %v6353
  %v6379 = vmul.f32 %v6110, %v6353
  %v6380 = vmul.f32 %v6111, %v6353
  %v6381 = vmul.f32 %v6112, %v6353
  %v6382 = vmul.f32 %v6113, %v6353
  %v6383 = vmul.f32 %v6114, %v6353
  %v6384 = vmul.f32 %v6115, %v6353
  %v6385 = vmul.f32 %v6116, %v6353
  %v6386 = vmul.f32 %v6117, %v6353
  %v6387 = vmul.f32 %v6118, %v6353
  %v6388 = vmul.f32 %v6119, %v6353
  %v6389 = vmul.f32 %v6120, %v6353
  %v6390 = vmul.f32 %v6121, %v6353
  %v6391 = vmul.f32 %v6122, %v6353
  %v6392 = vmul.f32 %v6123, %v6353
  %v6393 = vmul.f32 %v6124, %v6353
  %v6394 = vmul.f32 %v6125, %v6353
  %v6395 = vmul.f32 %v6126, %v6353
  %v6396 = vmul.f32 %v6127, %v6353
  %v6397 = vmul.f32 %v6128, %v6353
  %v6398 = vmul.f32 %v6129, %v6353
  %v6399 = vmul.f32 %v6130, %v6353
  %v6400 = vmul.f32 %v6131, %v6353
  %v6401 = vmul.f32 %v6132, %v6353
  %v6402 = vmul.f32 %v6133, %v6353
  %v6403 = vmul.f32 %v6134, %v6353
  %v6404 = vmul.f32 %v6135, %v6353
  %v6405 = vmul.f32 %v6136, %v6353
  %v6406 = vmul.f32 %v6137, %v6353
  %v6407 = vmul.f32 %v6138, %v6353
  %v6408 = vmul.f32 %v6139, %v6353
  %v6409 = vmul.f32 %v6140, %v6353
  %v6410 = vmul.f32 %v6141, %v6353
  %v6411 = vmul.f32 %v6142, %v6353
  %v6412 = vmul.f32 %v6143, %v6353
  %v6413 = vmul.f32 %v6144, %v6353
  %v6414 = vmul.f32 %v6145, %v6353
  %v6415 = vmul.f32 %v6146, %v6353
  %v6416 = vmul.f32 %v6147, %v6353
  %v6417 = vmul.f32 %v6148, %v6353
  %v6418 = vlaneseq
  %v6419 = vshrl.u32 %v6418, 7
  %v6420 = vsub.s32 0, %v6419
  %v6421 = vrot.slane %v5950, %v6420
  %v6422 = vadd.f32 %v6354, %v6421
  %v6423 = vadd.f32 %v6355, %v6421
  %v6424 = vadd.f32 %v6356, %v6421
  %v6425 = vadd.f32 %v6357, %v6421
  %v6426 = vadd.f32 %v6358, %v6421
  %v6427 = vadd.f32 %v6359, %v6421
  %v6428 = vadd.f32 %v6360, %v6421
  %v6429 = vadd.f32 %v6361, %v6421
  %v6430 = vadd.f32 %v6362, %v6421
  %v6431 = vadd.f32 %v6363, %v6421
  %v6432 = vadd.f32 %v6364, %v6421
  %v6433 = vadd.f32 %v6365, %v6421
  %v6434 = vadd.f32 %v6366, %v6421
  %v6435 = vadd.f32 %v6367, %v6421
  %v6436 = vadd.f32 %v6368, %v6421
  %v6437 = vadd.f32 %v6369, %v6421
  %v6438 = vadd.f32 %v6370, %v6421
  %v6439 = vadd.f32 %v6371, %v6421
  %v6440 = vadd.f32 %v6372, %v6421
  %v6441 = vadd.f32 %v6373, %v6421
  %v6442 = vadd.f32 %v6374, %v6421
  %v6443 = vadd.f32 %v6375, %v6421
  %v6444 = vadd.f32 %v6376, %v6421
  %v6445 = vadd.f32 %v6377, %v6421
  %v6446 = vadd.f32 %v6378, %v6421
  %v6447 = vadd.f32 %v6379, %v6421
  %v6448 = vadd.f32 %v6380, %v6421
  %v6449 = vadd.f32 %v6381, %v6421
  %v6450 = vadd.f32 %v6382, %v6421
  %v6451 = vadd.f32 %v6383, %v6421
  %v6452 = vadd.f32 %v6384, %v6421
  %v6453 = vadd.f32 %v6385, %v6421
  %v6454 = vadd.f32 %v6386, %v6421
  %v6455 = vadd.f32 %v6387, %v6421
  %v6456 = vadd.f32 %v6388, %v6421
  %v6457 = vadd.f32 %v6389, %v6421
  %v6458 = vadd.f32 %v6390, %v6421
  %v6459 = vadd.f32 %v6391, %v6421
  %v6460 = vadd.f32 %v6392, %v6421
  %v6461 = vadd.f32 %v6393, %v6421
  %v6462 = vadd.f32 %v6394, %v6421
  %v6463 = vadd.f32 %v6395, %v6421
  %v6464 = vadd.f32 %v6396, %v6421
  %v6465 = vadd.f32 %v6397, %v6421
  %v6466 = vadd.f32 %v6398, %v6421
  %v6467 = vadd.f32 %v6399, %v6421
  %v6468 = vadd.f32 %v6400, %v6421
  %v6469 = vadd.f32 %v6401, %v6421
  %v6470 = vadd.f32 %v6402, %v6421
  %v6471 = vadd.f32 %v6403, %v6421
  %v6472 = vadd.f32 %v6404, %v6421
  %v6473 = vadd.f32 %v6405, %v6421
  %v6474 = vadd.f32 %v6406, %v6421
  %v6475 = vadd.f32 %v6407, %v6421
  %v6476 = vadd.f32 %v6408, %v6421
  %v6477 = vadd.f32 %v6409, %v6421
  %v6478 = vadd.f32 %v6410, %v6421
  %v6479 = vadd.f32 %v6411, %v6421
  %v6480 = vadd.f32 %v6412, %v6421
  %v6481 = vadd.f32 %v6413, %v6421
  %v6482 = vadd.f32 %v6414, %v6421
  %v6483 = vadd.f32 %v6415, %v6421
  %v6484 = vadd.f32 %v6416, %v6421
  %v6485 = vadd.f32 %v6417, %v6421
  %v6486 = vadd.f32 %v24, %v6422
  %v6487 = vadd.f32 %v25, %v6423
  %v6488 = vadd.f32 %v26, %v6424
  %v6489 = vadd.f32 %v27, %v6425
  %v6490 = vadd.f32 %v28, %v6426
  %v6491 = vadd.f32 %v29, %v6427
  %v6492 = vadd.f32 %v30, %v6428
  %v6493 = vadd.f32 %v31, %v6429
  %v6494 = vadd.f32 %v32, %v6430
  %v6495 = vadd.f32 %v33, %v6431
  %v6496 = vadd.f32 %v34, %v6432
  %v6497 = vadd.f32 %v35, %v6433
  %v6498 = vadd.f32 %v36, %v6434
  %v6499 = vadd.f32 %v37, %v6435
  %v6500 = vadd.f32 %v38, %v6436
  %v6501 = vadd.f32 %v39, %v6437
  %v6502 = vadd.f32 %v40, %v6438
  %v6503 = vadd.f32 %v41, %v6439
  %v6504 = vadd.f32 %v42, %v6440
  %v6505 = vadd.f32 %v43, %v6441
  %v6506 = vadd.f32 %v44, %v6442
  %v6507 = vadd.f32 %v45, %v6443
  %v6508 = vadd.f32 %v46, %v6444
  %v6509 = vadd.f32 %v47, %v6445
  %v6510 = vadd.f32 %v48, %v6446
  %v6511 = vadd.f32 %v49, %v6447
  %v6512 = vadd.f32 %v50, %v6448
  %v6513 = vadd.f32 %v51, %v6449
  %v6514 = vadd.f32 %v52, %v6450
  %v6515 = vadd.f32 %v53, %v6451
  %v6516 = vadd.f32 %v54, %v6452
  %v6517 = vadd.f32 %v55, %v6453
  %v6518 = vadd.f32 %v56, %v6454
  %v6519 = vadd.f32 %v57, %v6455
  %v6520 = vadd.f32 %v58, %v6456
  %v6521 = vadd.f32 %v59, %v6457
  %v6522 = vadd.f32 %v60, %v6458
  %v6523 = vadd.f32 %v61, %v6459
  %v6524 = vadd.f32 %v62, %v6460
  %v6525 = vadd.f32 %v63, %v6461
  %v6526 = vadd.f32 %v64, %v6462
  %v6527 = vadd.f32 %v65, %v6463
  %v6528 = vadd.f32 %v66, %v6464
  %v6529 = vadd.f32 %v67, %v6465
  %v6530 = vadd.f32 %v68, %v6466
  %v6531 = vadd.f32 %v69, %v6467
  %v6532 = vadd.f32 %v70, %v6468
  %v6533 = vadd.f32 %v71, %v6469
  %v6534 = vadd.f32 %v72, %v6470
  %v6535 = vadd.f32 %v73, %v6471
  %v6536 = vadd.f32 %v74, %v6472
  %v6537 = vadd.f32 %v75, %v6473
  %v6538 = vadd.f32 %v76, %v6474
  %v6539 = vadd.f32 %v77, %v6475
  %v6540 = vadd.f32 %v78, %v6476
  %v6541 = vadd.f32 %v79, %v6477
  %v6542 = vadd.f32 %v80, %v6478
  %v6543 = vadd.f32 %v81, %v6479
  %v6544 = vadd.f32 %v82, %v6480
  %v6545 = vadd.f32 %v83, %v6481
  %v6546 = vadd.f32 %v84, %v6482
  %v6547 = vadd.f32 %v85, %v6483
  %v6548 = vadd.f32 %v86, %v6484
  %v6549 = vadd.f32 %v87, %v6485
  %v6550 = vmax.f32 %v6486, 0.0
  %v6551 = vmax.f32 %v6487, 0.0
  %v6552 = vmax.f32 %v6488, 0.0
  %v6553 = vmax.f32 %v6489, 0.0
  %v6554 = vmax.f32 %v6490, 0.0
  %v6555 = vmax.f32 %v6491, 0.0
  %v6556 = vmax.f32 %v6492, 0.0
  %v6557 = vmax.f32 %v6493, 0.0
  %v6558 = vmax.f32 %v6494, 0.0
  %v6559 = vmax.f32 %v6495, 0.0
  %v6560 = vmax.f32 %v6496, 0.0
  %v6561 = vmax.f32 %v6497, 0.0
  %v6562 = vmax.f32 %v6498, 0.0
  %v6563 = vmax.f32 %v6499, 0.0
  %v6564 = vmax.f32 %v6500, 0.0
  %v6565 = vmax.f32 %v6501, 0.0
  %v6566 = vmax.f32 %v6502, 0.0
  %v6567 = vmax.f32 %v6503, 0.0
  %v6568 = vmax.f32 %v6504, 0.0
  %v6569 = vmax.f32 %v6505, 0.0
  %v6570 = vmax.f32 %v6506, 0.0
  %v6571 = vmax.f32 %v6507, 0.0
  %v6572 = vmax.f32 %v6508, 0.0
  %v6573 = vmax.f32 %v6509, 0.0
  %v6574 = vmax.f32 %v6510, 0.0
  %v6575 = vmax.f32 %v6511, 0.0
  %v6576 = vmax.f32 %v6512, 0.0
  %v6577 = vmax.f32 %v6513, 0.0
  %v6578 = vmax.f32 %v6514, 0.0
  %v6579 = vmax.f32 %v6515, 0.0
  %v6580 = vmax.f32 %v6516, 0.0
  %v6581 = vmax.f32 %v6517, 0.0
  %v6582 = vmax.f32 %v6518, 0.0
  %v6583 = vmax.f32 %v6519, 0.0
  %v6584 = vmax.f32 %v6520, 0.0
  %v6585 = vmax.f32 %v6521, 0.0
  %v6586 = vmax.f32 %v6522, 0.0
  %v6587 = vmax.f32 %v6523, 0.0
  %v6588 = vmax.f32 %v6524, 0.0
  %v6589 = vmax.f32 %v6525, 0.0
  %v6590 = vmax.f32 %v6526, 0.0
  %v6591 = vmax.f32 %v6527, 0.0
  %v6592 = vmax.f32 %v6528, 0.0
  %v6593 = vmax.f32 %v6529, 0.0
  %v6594 = vmax.f32 %v6530, 0.0
  %v6595 = vmax.f32 %v6531, 0.0
  %v6596 = vmax.f32 %v6532, 0.0
  %v6597 = vmax.f32 %v6533, 0.0
  %v6598 = vmax.f32 %v6534, 0.0
  %v6599 = vmax.f32 %v6535, 0.0
  %v6600 = vmax.f32 %v6536, 0.0
  %v6601 = vmax.f32 %v6537, 0.0
  %v6602 = vmax.f32 %v6538, 0.0
  %v6603 = vmax.f32 %v6539, 0.0
  %v6604 = vmax.f32 %v6540, 0.0
  %v6605 = vmax.f32 %v6541, 0.0
  %v6606 = vmax.f32 %v6542, 0.0
  %v6607 = vmax.f32 %v6543, 0.0
  %v6608 = vmax.f32 %v6544, 0.0
  %v6609 = vmax.f32 %v6545, 0.0
  %v6610 = vmax.f32 %v6546, 0.0
  %v6611 = vmax.f32 %v6547, 0.0
  %v6612 = vmax.f32 %v6548, 0.0
  %v6613 = vmax.f32 %v6549, 0.0
  %6614 = vst.msk [vmem:[%s6] sm:$0xff] %vm137, %v6550
  %6615 = vst.msk [vmem:[%s6 + $0x8] sm:$0xff] %vm137, %v6551
  %6616 = vst.msk [vmem:[%s6 + $0x10] sm:$0xff] %vm137, %v6552
  %6617 = vst.msk [vmem:[%s6 + $0x18] sm:$0xff] %vm137, %v6553
  %6618 = vst.msk [vmem:[%s6 + $0x20] sm:$0xff] %vm137, %v6554
  %6619 = vst.msk [vmem:[%s6 + $0x28] sm:$0xff] %vm137, %v6555
  %6620 = vst.msk [vmem:[%s6 + $0x30] sm:$0xff] %vm137, %v6556
  %6621 = vst.msk [vmem:[%s6 + $0x38] sm:$0xff] %vm137, %v6557
  %6622 = vst.msk [vmem:[%s6 + $0x40] sm:$0xff] %vm137, %v6558
  %6623 = vst.msk [vmem:[%s6 + $0x48] sm:$0xff] %vm137, %v6559
  %6624 = vst.msk [vmem:[%s6 + $0x50] sm:$0xff] %vm137, %v6560
  %6625 = vst.msk [vmem:[%s6 + $0x58] sm:$0xff] %vm137, %v6561
  %6626 = vst.msk [vmem:[%s6 + $0x60] sm:$0xff] %vm137, %v6562
  %6627 = vst.msk [vmem:[%s6 + $0x68] sm:$0xff] %vm137, %v6563
  %6628 = vst.msk [vmem:[%s6 + $0x70] sm:$0xff] %vm137, %v6564
  %6629 = vst.msk [vmem:[%s6 + $0x78] sm:$0xff] %vm137, %v6565
  %6630 = vst.msk [vmem:[%s6 + $0x80] sm:$0xff] %vm137, %v6566
  %6631 = vst.msk [vmem:[%s6 + $0x88] sm:$0xff] %vm137, %v6567
  %6632 = vst.msk [vmem:[%s6 + $0x90] sm:$0xff] %vm137, %v6568
  %6633 = vst.msk [vmem:[%s6 + $0x98] sm:$0xff] %vm137, %v6569
  %6634 = vst.msk [vmem:[%s6 + $0xa0] sm:$0xff] %vm137, %v6570
  %6635 = vst.msk [vmem:[%s6 + $0xa8] sm:$0xff] %vm137, %v6571
  %6636 = vst.msk [vmem:[%s6 + $0xb0] sm:$0xff] %vm137, %v6572
  %6637 = vst.msk [vmem:[%s6 + $0xb8] sm:$0xff] %vm137, %v6573
  %6638 = vst.msk [vmem:[%s6 + $0xc0] sm:$0xff] %vm137, %v6574
  %6639 = vst.msk [vmem:[%s6 + $0xc8] sm:$0xff] %vm137, %v6575
  %6640 = vst.msk [vmem:[%s6 + $0xd0] sm:$0xff] %vm137, %v6576
  %6641 = vst.msk [vmem:[%s6 + $0xd8] sm:$0xff] %vm137, %v6577
  %6642 = vst.msk [vmem:[%s6 + $0xe0] sm:$0xff] %vm137, %v6578
  %6643 = vst.msk [vmem:[%s6 + $0xe8] sm:$0xff] %vm137, %v6579
  %6644 = vst.msk [vmem:[%s6 + $0xf0] sm:$0xff] %vm137, %v6580
  %6645 = vst.msk [vmem:[%s6 + $0xf8] sm:$0xff] %vm137, %v6581
  %6646 = vst.msk [vmem:[%s6 + $0x100] sm:$0xff] %vm137, %v6582
  %6647 = vst.msk [vmem:[%s6 + $0x108] sm:$0xff] %vm137, %v6583
  %6648 = vst.msk [vmem:[%s6 + $0x110] sm:$0xff] %vm137, %v6584
  %6649 = vst.msk [vmem:[%s6 + $0x118] sm:$0xff] %vm137, %v6585
  %6650 = vst.msk [vmem:[%s6 + $0x120] sm:$0xff] %vm137, %v6586
  %6651 = vst.msk [vmem:[%s6 + $0x128] sm:$0xff] %vm137, %v6587
  %6652 = vst.msk [vmem:[%s6 + $0x130] sm:$0xff] %vm137, %v6588
  %6653 = vst.msk [vmem:[%s6 + $0x138] sm:$0xff] %vm137, %v6589
  %6654 = vst.msk [vmem:[%s6 + $0x140] sm:$0xff] %vm137, %v6590
  %6655 = vst.msk [vmem:[%s6 + $0x148] sm:$0xff] %vm137, %v6591
  %6656 = vst.msk [vmem:[%s6 + $0x150] sm:$0xff] %vm137, %v6592
  %6657 = vst.msk [vmem:[%s6 + $0x158] sm:$0xff] %vm137, %v6593
  %6658 = vst.msk [vmem:[%s6 + $0x160] sm:$0xff] %vm137, %v6594
  %6659 = vst.msk [vmem:[%s6 + $0x168] sm:$0xff] %vm137, %v6595
  %6660 = vst.msk [vmem:[%s6 + $0x170] sm:$0xff] %vm137, %v6596
  %6661 = vst.msk [vmem:[%s6 + $0x178] sm:$0xff] %vm137, %v6597
  %6662 = vst.msk [vmem:[%s6 + $0x180] sm:$0xff] %vm137, %v6598
  %6663 = vst.msk [vmem:[%s6 + $0x188] sm:$0xff] %vm137, %v6599
  %6664 = vst.msk [vmem:[%s6 + $0x190] sm:$0xff] %vm137, %v6600
  %6665 = vst.msk [vmem:[%s6 + $0x198] sm:$0xff] %vm137, %v6601
  %6666 = vst.msk [vmem:[%s6 + $0x1a0] sm:$0xff] %vm137, %v6602
  %6667 = vst.msk [vmem:[%s6 + $0x1a8] sm:$0xff] %vm137, %v6603
  %6668 = vst.msk [vmem:[%s6 + $0x1b0] sm:$0xff] %vm137, %v6604
  %6669 = vst.msk [vmem:[%s6 + $0x1b8] sm:$0xff] %vm137, %v6605
  %6670 = vst.msk [vmem:[%s6 + $0x1c0] sm:$0xff] %vm137, %v6606
  %6671 = vst.msk [vmem:[%s6 + $0x1c8] sm:$0xff] %vm137, %v6607
  %6672 = vst.msk [vmem:[%s6 + $0x1d0] sm:$0xff] %vm137, %v6608
  %6673 = vst.msk [vmem:[%s6 + $0x1d8] sm:$0xff] %vm137, %v6609
  %6674 = vst.msk [vmem:[%s6 + $0x1e0] sm:$0xff] %vm137, %v6610
  %6675 = vst.msk [vmem:[%s6 + $0x1e8] sm:$0xff] %vm137, %v6611
  %6676 = vst.msk [vmem:[%s6 + $0x1f0] sm:$0xff] %vm137, %v6612
  %6677 = vst.msk [vmem:[%s6 + $0x1f8] sm:$0xff] %vm137, %v6613
  // Predicated region
  $region26: #{tpu_custom_call.1} parent=0 // pred_check
    _
  $region27: #{tpu_custom_call.1} parent=0 // pred_check_branch
    %6679 = sbr.rel (0) target = $region29
  $region28: #{tpu_custom_call.1} parent=0 // pred_region
    _
  $region29: #{tpu_custom_call.1} parent=0 // pred_fallthru
    _
  // Predicated region
  $region30: #{tpu_custom_call.1} parent=0 // pred_check
    _
  $region31: #{tpu_custom_call.1} parent=0 // pred_check_branch
    %6681 = sbr.rel (0) target = $region33
  $region32: #{tpu_custom_call.1} parent=0 // pred_region
    _
  $region33: #{tpu_custom_call.1} parent=0 // pred_fallthru
    _

</llo_original>
